<compile_context>
chip_gen: v6e
topology: v6e:2x2x1
jax: 0.10.0
libtpu: 0.0.40
codegen_flags: <defaults>
</compile_context>

<pallas_src>
import functools

import jax
import jax.numpy as jnp
from jax.experimental import pallas as pl
from jax.experimental.pallas import tpu as pltpu

EPS = 1e-5
LEAKY_SLOPE = 0.2
HIGHEST = jax.lax.Precision.HIGHEST
VMEM_LIMIT = 64 * 1024 * 1024


# ---------------------------------------------------------------------------
# In-kernel helpers
# ---------------------------------------------------------------------------
def _instancenorm_lrelu_store(acc, qmask, o_ref, H, W):
    """acc: (Cout, Q) f32 wide conv output; store padded-layout bf16 result.

    Q = H*(W+2) - 2; column q maps to padded flat position q + (W+2) + 1.
    qmask is 1.0 on valid columns, 0.0 on the 2-per-row garbage columns.
    """
    Wp = W + 2
    Q = H * Wp - 2
    P = (H + 2) * Wp
    inv_n = 1.0 / float(H * W)
    # InstanceNorm2d (affine=False): biased variance over valid spatial only.
    mean = jnp.sum(acc * qmask, axis=-1, keepdims=True) * inv_n
    cent = (acc - mean) * qmask
    var = jnp.sum(cent * cent, axis=-1, keepdims=True) * inv_n
    y = cent * jax.lax.rsqrt(var + EPS)
    # LeakyReLU(0.2); zeros stay zeros so pad positions remain exact zeros.
    y = jnp.where(y >= 0.0, y, LEAKY_SLOPE * y)

    c = o_ref.shape[1]
    zeros_edge = jnp.zeros((c, Wp + 1), o_ref.dtype)
    o_ref[0, :, 0:Wp + 1] = zeros_edge                       # top pad row (+1)
    o_ref[0, :, Wp + 1:Wp + 1 + Q] = y.astype(o_ref.dtype)   # interior (padded)
    o_ref[0, :, Wp + 1 + Q:P] = zeros_edge                   # bottom pad row


def _tap_slices(get_row_block, Wp, Q):
    """Nine 3x3-tap views as contiguous lane slices of a padded-flat slab."""
    out = []
    for dy in range(3):
        for dx in range(3):
            off = dy * Wp + dx
            out.append(get_row_block(off, off + Q))
    return out


# ---------------------------------------------------------------------------
# Pallas kernels
# ---------------------------------------------------------------------------
def _enc_conv_kernel(xp_ref, wt_ref, b_ref, qmask_ref, o_ref, *, H, W):
    """3x3 conv (K folded to 9*Cin) + bias + InstanceNorm + LeakyReLU.

    xp_ref : (1, Cin, (H+2)*(W+2)) bf16 padded-flat image
    wt_ref : (Cout, 9*Cin)         bf16
    b_ref  : (Cout, 1)             f32
    qmask  : (1, Q)                f32
    o_ref  : (1, Cout, (H+2)*(W+2)) bf16 padded-flat output
    """
    Wp = W + 2
    Q = H * Wp - 2
    slabs = _tap_slices(lambda a, b: xp_ref[0, :, a:b], Wp, Q)
    slab = jnp.concatenate(slabs, axis=0)                     # (9*Cin, Q)
    acc = jnp.dot(wt_ref[...], slab, preferred_element_type=jnp.float32)
    acc = acc + b_ref[...]
    _instancenorm_lrelu_store(acc, qmask_ref[...], o_ref, H, W)


def _dec_conv_kernel(up_ref, skip_ref, w1t_ref, b1_ref, pmask_ref,
                     w3a_ref, w3b_ref, b3_ref, qmask_ref, o_ref, *, H, W):
    """UpBlock tail, fully fused: 1x1 conv (in VMEM) + concat + 3x3 ConvBlock.

    up_ref   : (1, Cu, P) bf16  upsampled previous feature map (padded-flat)
    skip_ref : (1, Cs, P) bf16  encoder skip (padded-flat)
    w1t_ref  : (c, Cu)    bf16  1x1 weight (out, in)
    b1_ref   : (c, 1)     f32
    pmask_ref: (1, P)     f32   1.0 on valid padded positions
    w3a_ref  : (c, 9*c)   bf16  3x3 weights, x-branch half
    w3b_ref  : (c, 9*Cs)  bf16  3x3 weights, skip half
    b3_ref   : (c, 1)     f32
    qmask_ref: (1, Q)     f32
    o_ref    : (1, c, P)  bf16
    """
    Wp = W + 2
    Q = H * Wp - 2
    # 1x1 conv on the upsampled branch, entirely in VMEM.  `up` pads are zero
    # and the bias is masked, so pad positions of y1 are exactly zero, which
    # reproduces the reference "conv1x1 then zero-pad for the 3x3" semantics.
    y1 = jnp.dot(w1t_ref[...], up_ref[0], preferred_element_type=jnp.float32)
    y1 = (y1 + b1_ref[...] * pmask_ref[...]).astype(jnp.bfloat16)   # (c, P)

    # 3x3 over concat([conv1x1(up), skip]) without materializing the concat:
    # two K-folded matmuls, one per branch.
    slab_a = jnp.concatenate(
        _tap_slices(lambda a, b: y1[:, a:b], Wp, Q), axis=0)        # (9c, Q)
    slab_b = jnp.concatenate(
        _tap_slices(lambda a, b: skip_ref[0, :, a:b], Wp, Q), axis=0)
    acc = jnp.dot(w3a_ref[...], slab_a, preferred_element_type=jnp.float32)
    acc = acc + jnp.dot(w3b_ref[...], slab_b,
                        preferred_element_type=jnp.float32)
    acc = acc + b3_ref[...]
    _instancenorm_lrelu_store(acc, qmask_ref[...], o_ref, H, W)


def _conv1x1_kernel(x_ref, wt_ref, b_ref, o_ref):
    """Final 1x1 conv: (Cout, Cin) @ (Cin, P) + bias, lane-dense output."""
    o_ref[0] = (jnp.dot(wt_ref[...], x_ref[0],
                        preferred_element_type=jnp.float32)
                + b_ref[...]).astype(o_ref.dtype)


# ---------------------------------------------------------------------------
# Host-side mask / resize-matrix helpers (tiny constants)
# ---------------------------------------------------------------------------
def _qmask(H, W):
    Wp = W + 2
    Q = H * Wp - 2
    q = jnp.arange(Q)
    return ((q % Wp) < W).astype(jnp.float32).reshape(1, Q)


def _pmask(H, W):
    Hp, Wp = H + 2, W + 2
    idx = jnp.arange(Hp * Wp)
    r, c = idx // Wp, idx % Wp
    ok = (r >= 1) & (r <= H) & (c >= 1) & (c <= W)
    return ok.astype(jnp.float32).reshape(1, Hp * Wp)


def _resize_matrix(out_size, in_size):
    """1-D bilinear interpolation matrix, align_corners=True."""
    if out_size > 1:
        src = jnp.arange(out_size, dtype=jnp.float32) * (
            float(in_size - 1) / float(out_size - 1))
    else:
        src = jnp.zeros((1,), jnp.float32)
    lo = jnp.clip(jnp.floor(src).astype(jnp.int32), 0, in_size - 1)
    hi = jnp.clip(lo + 1, 0, in_size - 1)
    frac = src - lo.astype(jnp.float32)
    rows = jnp.arange(out_size)
    m = jnp.zeros((out_size, in_size), jnp.float32)
    m = m.at[rows, lo].add(1.0 - frac)
    m = m.at[rows, hi].add(frac)
    return m


def _resize_matrix_padded(out_size, in_size):
    """Same matrix, mapping a zero-padded axis to a zero-padded axis."""
    m = _resize_matrix(out_size, in_size)
    mp = jnp.zeros((out_size + 2, in_size + 2), jnp.float32)
    return mp.at[1:out_size + 1, 1:in_size + 1].set(m)


def _compiler_params():
    return pltpu.CompilerParams(dimension_semantics=("parallel",),
                                vmem_limit_bytes=VMEM_LIMIT)


# ---------------------------------------------------------------------------
# Pallas wrappers
# ---------------------------------------------------------------------------
def enc_block(xp, w, b, H, W):
    """ConvBlock on a padded-flat input.  xp:(N,Cin,P) bf16, w:(3,3,Cin,Cout)."""
    N, Cin, P = xp.shape
    Cout = w.shape[-1]
    Wp = W + 2
    Q = H * Wp - 2
    wt = jnp.transpose(w.reshape(9 * Cin, Cout)).astype(jnp.bfloat16)
    b2 = b.reshape(Cout, 1).astype(jnp.float32)
    qmask = _qmask(H, W)
    kernel = functools.partial(_enc_conv_kernel, H=H, W=W)
    cost = pl.CostEstimate(
        flops=int(2 * N * Cout * 9 * Cin * Q),
        transcendentals=int(N * Cout),
        bytes_accessed=int(2 * N * P * (Cin + Cout) + 2 * 9 * Cin * Cout))
    return pl.pallas_call(
        kernel,
        out_shape=jax.ShapeDtypeStruct((N, Cout, P), jnp.bfloat16),
        grid=(N,),
        in_specs=[
            pl.BlockSpec((1, Cin, P), lambda n: (n, 0, 0)),
            pl.BlockSpec((Cout, 9 * Cin), lambda n: (0, 0)),
            pl.BlockSpec((Cout, 1), lambda n: (0, 0)),
            pl.BlockSpec((1, Q), lambda n: (0, 0)),
        ],
        out_specs=pl.BlockSpec((1, Cout, P), lambda n: (n, 0, 0)),
        compiler_params=_compiler_params(),
        cost_estimate=cost,
    )(xp.astype(jnp.bfloat16), wt, b2, qmask)


def dec_block(u, skip, w1, b1, w3, b3, H, W):
    """Fused UpBlock tail: 1x1 + concat + ConvBlock.  u:(N,Cu,P), skip:(N,Cs,P)."""
    N, Cu, P = u.shape
    Cs = skip.shape[1]
    Cout = w3.shape[-1]
    assert w3.shape[2] == Cout + Cs, (w3.shape, Cout, Cs)
    Wp = W + 2
    Q = H * Wp - 2
    w1t = jnp.transpose(w1).astype(jnp.bfloat16)                       # (c, Cu)
    w3a = jnp.transpose(w3[:, :, :Cout, :].reshape(9 * Cout, Cout))    # (c, 9c)
    w3b = jnp.transpose(w3[:, :, Cout:, :].reshape(9 * Cs, Cout))      # (c, 9Cs)
    w3a = w3a.astype(jnp.bfloat16)
    w3b = w3b.astype(jnp.bfloat16)
    b1c = b1.reshape(Cout, 1).astype(jnp.float32)
    b3c = b3.reshape(Cout, 1).astype(jnp.float32)
    qmask = _qmask(H, W)
    pmask = _pmask(H, W)
    kernel = functools.partial(_dec_conv_kernel, H=H, W=W)
    cost = pl.CostEstimate(
        flops=int(2 * N * (Cout * Cu * P + Cout * 9 * Cout * Q
                           + Cout * 9 * Cs * Q)),
        transcendentals=int(N * Cout),
        bytes_accessed=int(2 * N * P * (Cu + Cs + Cout)))
    return pl.pallas_call(
        kernel,
        out_shape=jax.ShapeDtypeStruct((N, Cout, P), jnp.bfloat16),
        grid=(N,),
        in_specs=[
            pl.BlockSpec((1, Cu, P), lambda n: (n, 0, 0)),
            pl.BlockSpec((1, Cs, P), lambda n: (n, 0, 0)),
            pl.BlockSpec((Cout, Cu), lambda n: (0, 0)),
            pl.BlockSpec((Cout, 1), lambda n: (0, 0)),
            pl.BlockSpec((1, P), lambda n: (0, 0)),
            pl.BlockSpec((Cout, 9 * Cout), lambda n: (0, 0)),
            pl.BlockSpec((Cout, 9 * Cs), lambda n: (0, 0)),
            pl.BlockSpec((Cout, 1), lambda n: (0, 0)),
            pl.BlockSpec((1, Q), lambda n: (0, 0)),
        ],
        out_specs=pl.BlockSpec((1, Cout, P), lambda n: (n, 0, 0)),
        compiler_params=_compiler_params(),
        cost_estimate=cost,
    )(u.astype(jnp.bfloat16), skip.astype(jnp.bfloat16),
      w1t, b1c, pmask, w3a, w3b, b3c, qmask)


def final_conv1x1(xp, w, b, H, W):
    """Last 1x1 conv on the padded-flat input; returns (N, Cout, H, W) f32."""
    N, Cin, P = xp.shape
    Cout = w.shape[-1]
    wt = jnp.transpose(w).astype(jnp.bfloat16)
    b2 = b.reshape(Cout, 1).astype(jnp.float32)
    cost = pl.CostEstimate(
        flops=int(2 * N * Cout * Cin * P),
        transcendentals=0,
        bytes_accessed=int(N * P * (2 * Cin + 4 * Cout)))
    out = pl.pallas_call(
        _conv1x1_kernel,
        out_shape=jax.ShapeDtypeStruct((N, Cout, P), jnp.float32),
        grid=(N,),
        in_specs=[
            pl.BlockSpec((1, Cin, P), lambda n: (n, 0, 0)),
            pl.BlockSpec((Cout, Cin), lambda n: (0, 0)),
            pl.BlockSpec((Cout, 1), lambda n: (0, 0)),
        ],
        out_specs=pl.BlockSpec((1, Cout, P), lambda n: (n, 0, 0)),
        compiler_params=_compiler_params(),
        cost_estimate=cost,
    )(xp.astype(jnp.bfloat16), wt, b2)
    return out.reshape(N, Cout, H + 2, W + 2)[:, :, 1:H + 1, 1:W + 1]


def resize_padded(xp, in_hw, out_hw):
    """Bilinear resize (align_corners=True), padded-flat -> padded-flat.

    Two tiny XLA matmuls per image; the padded resize matrices emit the
    output directly in zero-padded layout, so no pad op is needed.
    """
    N, C, _ = xp.shape
    H, W = in_hw
    H2, W2 = out_hw
    x4 = xp.reshape(N, C, H + 2, W + 2).astype(jnp.float32)
    mh = _resize_matrix_padded(H2, H)     # (H2+2, H+2)
    mw = _resize_matrix_padded(W2, W)     # (W2+2, W+2)
    y = jnp.einsum('oh,nchw->ncow', mh, x4, precision=HIGHEST)
    y = jnp.einsum('pw,ncow->ncop', mw, y, precision=HIGHEST)
    return y.reshape(N, C, (H2 + 2) * (W2 + 2)).astype(jnp.bfloat16)


# ---------------------------------------------------------------------------
# UNet parameters + forward
# ---------------------------------------------------------------------------
def init_params(key, in_channels, out_channels, depth, initial_channels):
    keys = iter(jax.random.split(key, 128))

    def conv_param(cin, cout, k):
        std = 1.0 / float(cin * k * k) ** 0.5
        w = jax.random.normal(next(keys), (k, k, cin, cout), jnp.float32) * std
        b = jax.random.normal(next(keys), (cout,), jnp.float32) * std
        return w, b

    params = {'down': [], 'up': []}
    prev = in_channels
    for i in range(depth):
        cur = (2 ** i) * initial_channels
        params['down'].append(conv_param(prev, cur, 3))
        prev = cur
    for i in reversed(range(depth - 1)):
        cur = (2 ** i) * initial_channels
        w1, b1 = conv_param(prev, cur, 1)
        w1 = w1.reshape(prev, cur)                       # 1x1 conv weight
        w3, b3 = conv_param(2 * cur, cur, 3)
        params['up'].append(((w1, b1), (w3, b3)))
        prev = cur
    wl, bl = conv_param(prev, out_channels, 1)
    params['last'] = (wl.reshape(prev, out_channels), bl)
    return params


def unet_forward(params, x_nchw, depth):
    N, Cin, H, W = x_nchw.shape
    x = jnp.pad(x_nchw.astype(jnp.float32), ((0, 0), (0, 0), (1, 1), (1, 1)))
    x = x.reshape(N, Cin, (H + 2) * (W + 2)).astype(jnp.bfloat16)
    skips = []
    h, w = H, W
    for i in range(depth):
        w3, b3 = params['down'][i]
        x = enc_block(x, w3, b3, h, w)
        if i < depth - 1:
            skips.append((x, (h, w)))
            h2, w2 = h // 2, w // 2
            x = resize_padded(x, (h, w), (h2, w2))
            h, w = h2, w2
    for i in range(depth - 1):
        (w1, b1), (w3, b3) = params['up'][i]
        skip, (sh, sw) = skips[-i - 1]
        u = resize_padded(x, (h, w), (sh, sw))
        x = dec_block(u, skip, w1, b1, w3, b3, sh, sw)
        h, w = sh, sw
    wl, bl = params['last']
    return final_conv1x1(x, wl, bl, h, w)                # (N, out_c, H, W) f32


# ---------------------------------------------------------------------------
# Pure-JAX reference (mirrors the kernel's bf16 rounding points) for checking
# ---------------------------------------------------------------------------
def _bf16(x):
    return x.astype(jnp.bfloat16).astype(jnp.float32)


def _ref_conv3x3(x, w, b):
    N, C, H, W = x.shape
    xp = jnp.pad(x, ((0, 0), (0, 0), (1, 1), (1, 1)))
    out = None
    for dy in range(3):
        for dx in range(3):
            t = jnp.einsum('nchw,cd->ndhw', xp[:, :, dy:dy + H, dx:dx + W],
                           w[dy, dx], precision=HIGHEST)
            out = t if out is None else out + t
    return out + b.reshape(1, -1, 1, 1)


def _ref_in_lrelu(x):
    mean = jnp.mean(x, axis=(2, 3), keepdims=True)
    var = jnp.mean((x - mean) ** 2, axis=(2, 3), keepdims=True)
    y = (x - mean) * jax.lax.rsqrt(var + EPS)
    return jnp.where(y >= 0, y, LEAKY_SLOPE * y)


def _ref_resize(x, oh, ow):
    mh = _resize_matrix(oh, x.shape[2])
    mw = _resize_matrix(ow, x.shape[3])
    y = jnp.einsum('oh,nchw->ncow', mh, x, precision=HIGHEST)
    return jnp.einsum('pw,ncow->ncop', mw, y, precision=HIGHEST)


def reference_forward(params, x, depth):
    x = _bf16(x.astype(jnp.float32))
    skips = []
    for i in range(depth):
        w, b = params['down'][i]
        x = _bf16(_ref_in_lrelu(_ref_conv3x3(x, _bf16(w), b)))
        if i < depth - 1:
            skips.append(x)
            x = _bf16(_ref_resize(x, x.shape[2] // 2, x.shape[3] // 2))
    for i in range(depth - 1):
        (w1, b1), (w3, b3) = params['up'][i]
        skip = skips[-i - 1]
        u = _bf16(_ref_resize(x, skip.shape[2], skip.shape[3]))
        y1 = _bf16(jnp.einsum('nchw,cd->ndhw', u, _bf16(w1), precision=HIGHEST)
                   + b1.reshape(1, -1, 1, 1))
        x = _bf16(_ref_in_lrelu(_ref_conv3x3(
            jnp.concatenate([y1, skip], axis=1), _bf16(w3), b3)))
    wl, bl = params['last']
    return (jnp.einsum('nchw,cd->ndhw', x, _bf16(wl), precision=HIGHEST)
            + bl.reshape(1, -1, 1, 1))


# ---------------------------------------------------------------------------
if __name__ == "__main__":
    IN_C, OUT_C, DEPTH, INIT_C = 2, 2, 3, 8
    key = jax.random.PRNGKey(0)
    pkey, xkey = jax.random.split(key)
    params = init_params(pkey, IN_C, OUT_C, DEPTH, INIT_C)
    x = jax.random.normal(xkey, (2, IN_C, 16, 16), jnp.float32)

    fwd = jax.jit(functools.partial(unet_forward, depth=DEPTH))
    out = fwd(params, x)
    jax.block_until_ready(out)
    assert out.shape == (2, OUT_C, 16, 16), out.shape
    assert bool(jnp.all(jnp.isfinite(out)))

    ref = jax.jit(functools.partial(reference_forward, depth=DEPTH))(params, x)
    err = float(jnp.max(jnp.abs(out - ref)))
    assert err < 5e-2, f"max abs error vs reference: {err}"
    print("KERNEL_OK")
</pallas_src>

<mosaic_0001>
module attributes {stable_mosaic.version = 11 : i64} {
  func.func private @main(%arg0: i32) attributes {dimension_semantics = [#tpu.dimension_semantics<core_parallel>], iteration_bounds = array<i64: 2>, tpu.core_type = #tpu.core_type<sc_scalar_subcore>, window_params = []} {
    return
  }
}

module attributes {stable_mosaic.version = 11 : i64} {
  func.func private @main(%arg0: i32) attributes {dimension_semantics = [#tpu.dimension_semantics<core_parallel>], iteration_bounds = array<i64: 2>, tpu.core_type = #tpu.core_type<sc_scalar_subcore>, window_params = []} {
    return
  }
}

module attributes {stable_mosaic.version = 11 : i64} {
  func.func @_enc_conv_kernel(%arg0: i32, %arg1: memref<1x2x324xbf16, #tpu.memory_space<vmem>>, %arg2: memref<8x18xbf16, #tpu.memory_space<vmem>>, %arg3: memref<8x1xf32, #tpu.memory_space<vmem>>, %arg4: memref<1x286xf32, #tpu.memory_space<vmem>>, %arg5: memref<1x8x324xbf16, #tpu.memory_space<vmem>>) attributes {dimension_semantics = [#tpu.dimension_semantics<parallel>], iteration_bounds = array<i64: 2>, scalar_prefetch = 0 : i64, scratch_operands = 0 : i64, tpu.core_type = #tpu.core_type<tc>, window_params = [{transform_indices = @transform_0, window_bounds = array<i64: 1, 2, 324>}, {pipeline_mode = #tpu.pipeline_mode<synchronous>, transform_indices = @transform_1, window_bounds = array<i64: 8, 18>}, {pipeline_mode = #tpu.pipeline_mode<synchronous>, transform_indices = @transform_2, window_bounds = array<i64: 8, 1>}, {pipeline_mode = #tpu.pipeline_mode<synchronous>, transform_indices = @transform_3, window_bounds = array<i64: 1, 286>}, {transform_indices = @transform_4, window_bounds = array<i64: 1, 8, 324>}]} {
    %c0 = arith.constant 0 : index
    %c0_0 = arith.constant 0 : index
    %c0_1 = arith.constant 0 : index
    %0 = vector.load %arg1[%c0, %c0_0, %c0_1] : memref<1x2x324xbf16, #tpu.memory_space<vmem>>, vector<1x2x286xbf16>
    %1 = vector.shape_cast %0 : vector<1x2x286xbf16> to vector<2x286xbf16>
    %c0_2 = arith.constant 0 : index
    %c0_3 = arith.constant 0 : index
    %c1 = arith.constant 1 : index
    %2 = vector.load %arg1[%c0_2, %c0_3, %c1] : memref<1x2x324xbf16, #tpu.memory_space<vmem>>, vector<1x2x286xbf16>
    %3 = vector.shape_cast %2 : vector<1x2x286xbf16> to vector<2x286xbf16>
    %c0_4 = arith.constant 0 : index
    %c0_5 = arith.constant 0 : index
    %c2 = arith.constant 2 : index
    %4 = vector.load %arg1[%c0_4, %c0_5, %c2] : memref<1x2x324xbf16, #tpu.memory_space<vmem>>, vector<1x2x286xbf16>
    %5 = vector.shape_cast %4 : vector<1x2x286xbf16> to vector<2x286xbf16>
    %c0_6 = arith.constant 0 : index
    %c0_7 = arith.constant 0 : index
    %c18 = arith.constant 18 : index
    %6 = vector.load %arg1[%c0_6, %c0_7, %c18] : memref<1x2x324xbf16, #tpu.memory_space<vmem>>, vector<1x2x286xbf16>
    %7 = vector.shape_cast %6 : vector<1x2x286xbf16> to vector<2x286xbf16>
    %c0_8 = arith.constant 0 : index
    %c0_9 = arith.constant 0 : index
    %c19 = arith.constant 19 : index
    %8 = vector.load %arg1[%c0_8, %c0_9, %c19] : memref<1x2x324xbf16, #tpu.memory_space<vmem>>, vector<1x2x286xbf16>
    %9 = vector.shape_cast %8 : vector<1x2x286xbf16> to vector<2x286xbf16>
    %c0_10 = arith.constant 0 : index
    %c0_11 = arith.constant 0 : index
    %c20 = arith.constant 20 : index
    %10 = vector.load %arg1[%c0_10, %c0_11, %c20] : memref<1x2x324xbf16, #tpu.memory_space<vmem>>, vector<1x2x286xbf16>
    %11 = vector.shape_cast %10 : vector<1x2x286xbf16> to vector<2x286xbf16>
    %c0_12 = arith.constant 0 : index
    %c0_13 = arith.constant 0 : index
    %c36 = arith.constant 36 : index
    %12 = vector.load %arg1[%c0_12, %c0_13, %c36] : memref<1x2x324xbf16, #tpu.memory_space<vmem>>, vector<1x2x286xbf16>
    %13 = vector.shape_cast %12 : vector<1x2x286xbf16> to vector<2x286xbf16>
    %c0_14 = arith.constant 0 : index
    %c0_15 = arith.constant 0 : index
    %c37 = arith.constant 37 : index
    %14 = vector.load %arg1[%c0_14, %c0_15, %c37] : memref<1x2x324xbf16, #tpu.memory_space<vmem>>, vector<1x2x286xbf16>
    %15 = vector.shape_cast %14 : vector<1x2x286xbf16> to vector<2x286xbf16>
    %c0_16 = arith.constant 0 : index
    %c0_17 = arith.constant 0 : index
    %c38 = arith.constant 38 : index
    %16 = vector.load %arg1[%c0_16, %c0_17, %c38] : memref<1x2x324xbf16, #tpu.memory_space<vmem>>, vector<1x2x286xbf16>
    %17 = vector.shape_cast %16 : vector<1x2x286xbf16> to vector<2x286xbf16>
    %18 = tpu.concatenate %1, %3, %5, %7, %9, %11, %13, %15, %17 in 0 : vector<2x286xbf16>, vector<2x286xbf16>, vector<2x286xbf16>, vector<2x286xbf16>, vector<2x286xbf16>, vector<2x286xbf16>, vector<2x286xbf16>, vector<2x286xbf16>, vector<2x286xbf16> -> vector<18x286xbf16>
    %c0_18 = arith.constant 0 : index
    %c0_19 = arith.constant 0 : index
    %19 = vector.load %arg2[%c0_18, %c0_19] : memref<8x18xbf16, #tpu.memory_space<vmem>>, vector<8x18xbf16>
    %cst = arith.constant dense<0.000000e+00> : vector<8x286xf32>
    %20 = tpu.matmul %19, %18, %cst {dimension_numbers = #tpu.dot_dimension_numbers<[1], [0], [0], [1], [0, 0, 1, 1], [], []>} : vector<8x18xbf16>, vector<18x286xbf16>, vector<8x286xf32> -> vector<8x286xf32>
    %c0_20 = arith.constant 0 : index
    %c0_21 = arith.constant 0 : index
    %21 = vector.load %arg3[%c0_20, %c0_21] : memref<8x1xf32, #tpu.memory_space<vmem>>, vector<8x1xf32>
    %22 = vector.broadcast %21 : vector<8x1xf32> to vector<8x286xf32>
    %23 = arith.addf %20, %22 : vector<8x286xf32>
    %c0_22 = arith.constant 0 : index
    %c0_23 = arith.constant 0 : index
    %24 = vector.load %arg4[%c0_22, %c0_23] : memref<1x286xf32, #tpu.memory_space<vmem>>, vector<1x286xf32>
    %25 = vector.broadcast %24 : vector<1x286xf32> to vector<8x286xf32>
    %26 = arith.mulf %23, %25 : vector<8x286xf32>
    %cst_24 = arith.constant dense<0.000000e+00> : vector<8xf32>
    %27 = vector.multi_reduction <add>, %26, %cst_24 [1] : vector<8x286xf32> to vector<8xf32>
    %28 = vector.shape_cast %27 : vector<8xf32> to vector<8x1xf32>
    %cst_25 = arith.constant 3.906250e-03 : f32
    %29 = vector.broadcast %cst_25 : f32 to vector<8x1xf32>
    %30 = arith.mulf %28, %29 : vector<8x1xf32>
    %31 = vector.broadcast %30 : vector<8x1xf32> to vector<8x286xf32>
    %32 = arith.subf %23, %31 : vector<8x286xf32>
    %33 = vector.broadcast %24 : vector<1x286xf32> to vector<8x286xf32>
    %34 = arith.mulf %32, %33 : vector<8x286xf32>
    %35 = arith.mulf %34, %34 : vector<8x286xf32>
    %cst_26 = arith.constant dense<0.000000e+00> : vector<8xf32>
    %36 = vector.multi_reduction <add>, %35, %cst_26 [1] : vector<8x286xf32> to vector<8xf32>
    %37 = vector.shape_cast %36 : vector<8xf32> to vector<8x1xf32>
    %cst_27 = arith.constant 3.906250e-03 : f32
    %38 = vector.broadcast %cst_27 : f32 to vector<8x1xf32>
    %39 = arith.mulf %37, %38 : vector<8x1xf32>
    %cst_28 = arith.constant 9.99999974E-6 : f32
    %40 = vector.broadcast %cst_28 : f32 to vector<8x1xf32>
    %41 = arith.addf %39, %40 : vector<8x1xf32>
    %42 = math.rsqrt %41 : vector<8x1xf32>
    %43 = vector.broadcast %42 : vector<8x1xf32> to vector<8x286xf32>
    %44 = arith.mulf %34, %43 : vector<8x286xf32>
    %cst_29 = arith.constant 0.000000e+00 : f32
    %45 = vector.broadcast %cst_29 : f32 to vector<8x286xf32>
    %46 = arith.cmpf oge, %44, %45 : vector<8x286xf32>
    %cst_30 = arith.constant 2.000000e-01 : f32
    %47 = vector.broadcast %cst_30 : f32 to vector<8x286xf32>
    %48 = arith.mulf %47, %44 : vector<8x286xf32>
    %49 = arith.select %46, %44, %48 : vector<8x286xi1>, vector<8x286xf32>
    %cst_31 = arith.constant 0.000000e+00 : bf16
    %50 = vector.broadcast %cst_31 : bf16 to vector<8x19xbf16>
    %c0_32 = arith.constant 0 : index
    %c0_33 = arith.constant 0 : index
    %c0_34 = arith.constant 0 : index
    %51 = vector.load %arg5[%c0_32, %c0_33, %c0_34] : memref<1x8x324xbf16, #tpu.memory_space<vmem>>, vector<1x8x19xbf16>
    %52 = vector.shape_cast %51 : vector<1x8x19xbf16> to vector<8x19xbf16>
    %53 = vector.shape_cast %50 : vector<8x19xbf16> to vector<1x8x19xbf16>
    tpu.vector_store %arg5[%c0_32, %c0_33, %c0_34], %53 {strides = array<i32>} : memref<1x8x324xbf16, #tpu.memory_space<vmem>>, vector<1x8x19xbf16>,
    %54 = arith.truncf %49 : vector<8x286xf32> to vector<8x286xbf16>
    %c0_35 = arith.constant 0 : index
    %c0_36 = arith.constant 0 : index
    %c19_37 = arith.constant 19 : index
    %55 = vector.load %arg5[%c0_35, %c0_36, %c19_37] : memref<1x8x324xbf16, #tpu.memory_space<vmem>>, vector<1x8x286xbf16>
    %56 = vector.shape_cast %55 : vector<1x8x286xbf16> to vector<8x286xbf16>
    %57 = vector.shape_cast %54 : vector<8x286xbf16> to vector<1x8x286xbf16>
    tpu.vector_store %arg5[%c0_35, %c0_36, %c19_37], %57 {strides = array<i32>} : memref<1x8x324xbf16, #tpu.memory_space<vmem>>, vector<1x8x286xbf16>,
    %c0_38 = arith.constant 0 : index
    %c0_39 = arith.constant 0 : index
    %c305 = arith.constant 305 : index
    %58 = vector.load %arg5[%c0_38, %c0_39, %c305] : memref<1x8x324xbf16, #tpu.memory_space<vmem>>, vector<1x8x19xbf16>
    %59 = vector.shape_cast %58 : vector<1x8x19xbf16> to vector<8x19xbf16>
    %60 = vector.shape_cast %50 : vector<8x19xbf16> to vector<1x8x19xbf16>
    tpu.vector_store %arg5[%c0_38, %c0_39, %c305], %60 {strides = array<i32>} : memref<1x8x324xbf16, #tpu.memory_space<vmem>>, vector<1x8x19xbf16>,
    return
  }
  func.func @transform_0(%arg0: i32) -> (i32, i32, i32) {
    %c0_i32 = arith.constant 0 : i32
    %c0_i32_0 = arith.constant 0 : i32
    %c0_i32_1 = arith.constant 0 : i32
    return %arg0, %c0_i32, %c0_i32_0 : i32, i32, i32
  }
  func.func @transform_1(%arg0: i32) -> (i32, i32) {
    %c0_i32 = arith.constant 0 : i32
    %c0_i32_0 = arith.constant 0 : i32
    %c0_i32_1 = arith.constant 0 : i32
    return %c0_i32, %c0_i32_0 : i32, i32
  }
  func.func @transform_2(%arg0: i32) -> (i32, i32) {
    %c0_i32 = arith.constant 0 : i32
    %c0_i32_0 = arith.constant 0 : i32
    %c0_i32_1 = arith.constant 0 : i32
    return %c0_i32, %c0_i32_0 : i32, i32
  }
  func.func @transform_3(%arg0: i32) -> (i32, i32) {
    %c0_i32 = arith.constant 0 : i32
    %c0_i32_0 = arith.constant 0 : i32
    %c0_i32_1 = arith.constant 0 : i32
    return %c0_i32, %c0_i32_0 : i32, i32
  }
  func.func @transform_4(%arg0: i32) -> (i32, i32, i32) {
    %c0_i32 = arith.constant 0 : i32
    %c0_i32_0 = arith.constant 0 : i32
    %c0_i32_1 = arith.constant 0 : i32
    return %arg0, %c0_i32, %c0_i32_0 : i32, i32, i32
  }
}

module attributes {stable_mosaic.version = 11 : i64} {
  func.func @_enc_conv_kernel(%arg0: i32, %arg1: memref<1x8x100xbf16, #tpu.memory_space<vmem>>, %arg2: memref<16x72xbf16, #tpu.memory_space<vmem>>, %arg3: memref<16x1xf32, #tpu.memory_space<vmem>>, %arg4: memref<1x78xf32, #tpu.memory_space<vmem>>, %arg5: memref<1x16x100xbf16, #tpu.memory_space<vmem>>) attributes {dimension_semantics = [#tpu.dimension_semantics<parallel>], iteration_bounds = array<i64: 2>, scalar_prefetch = 0 : i64, scratch_operands = 0 : i64, tpu.core_type = #tpu.core_type<tc>, window_params = [{transform_indices = @transform_0, window_bounds = array<i64: 1, 8, 100>}, {pipeline_mode = #tpu.pipeline_mode<synchronous>, transform_indices = @transform_1, window_bounds = array<i64: 16, 72>}, {pipeline_mode = #tpu.pipeline_mode<synchronous>, transform_indices = @transform_2, window_bounds = array<i64: 16, 1>}, {pipeline_mode = #tpu.pipeline_mode<synchronous>, transform_indices = @transform_3, window_bounds = array<i64: 1, 78>}, {transform_indices = @transform_4, window_bounds = array<i64: 1, 16, 100>}]} {
    %c0 = arith.constant 0 : index
    %c0_0 = arith.constant 0 : index
    %c0_1 = arith.constant 0 : index
    %0 = vector.load %arg1[%c0, %c0_0, %c0_1] : memref<1x8x100xbf16, #tpu.memory_space<vmem>>, vector<1x8x78xbf16>
    %1 = vector.shape_cast %0 : vector<1x8x78xbf16> to vector<8x78xbf16>
    %c0_2 = arith.constant 0 : index
    %c0_3 = arith.constant 0 : index
    %c1 = arith.constant 1 : index
    %2 = vector.load %arg1[%c0_2, %c0_3, %c1] : memref<1x8x100xbf16, #tpu.memory_space<vmem>>, vector<1x8x78xbf16>
    %3 = vector.shape_cast %2 : vector<1x8x78xbf16> to vector<8x78xbf16>
    %c0_4 = arith.constant 0 : index
    %c0_5 = arith.constant 0 : index
    %c2 = arith.constant 2 : index
    %4 = vector.load %arg1[%c0_4, %c0_5, %c2] : memref<1x8x100xbf16, #tpu.memory_space<vmem>>, vector<1x8x78xbf16>
    %5 = vector.shape_cast %4 : vector<1x8x78xbf16> to vector<8x78xbf16>
    %c0_6 = arith.constant 0 : index
    %c0_7 = arith.constant 0 : index
    %c10 = arith.constant 10 : index
    %6 = vector.load %arg1[%c0_6, %c0_7, %c10] : memref<1x8x100xbf16, #tpu.memory_space<vmem>>, vector<1x8x78xbf16>
    %7 = vector.shape_cast %6 : vector<1x8x78xbf16> to vector<8x78xbf16>
    %c0_8 = arith.constant 0 : index
    %c0_9 = arith.constant 0 : index
    %c11 = arith.constant 11 : index
    %8 = vector.load %arg1[%c0_8, %c0_9, %c11] : memref<1x8x100xbf16, #tpu.memory_space<vmem>>, vector<1x8x78xbf16>
    %9 = vector.shape_cast %8 : vector<1x8x78xbf16> to vector<8x78xbf16>
    %c0_10 = arith.constant 0 : index
    %c0_11 = arith.constant 0 : index
    %c12 = arith.constant 12 : index
    %10 = vector.load %arg1[%c0_10, %c0_11, %c12] : memref<1x8x100xbf16, #tpu.memory_space<vmem>>, vector<1x8x78xbf16>
    %11 = vector.shape_cast %10 : vector<1x8x78xbf16> to vector<8x78xbf16>
    %c0_12 = arith.constant 0 : index
    %c0_13 = arith.constant 0 : index
    %c20 = arith.constant 20 : index
    %12 = vector.load %arg1[%c0_12, %c0_13, %c20] : memref<1x8x100xbf16, #tpu.memory_space<vmem>>, vector<1x8x78xbf16>
    %13 = vector.shape_cast %12 : vector<1x8x78xbf16> to vector<8x78xbf16>
    %c0_14 = arith.constant 0 : index
    %c0_15 = arith.constant 0 : index
    %c21 = arith.constant 21 : index
    %14 = vector.load %arg1[%c0_14, %c0_15, %c21] : memref<1x8x100xbf16, #tpu.memory_space<vmem>>, vector<1x8x78xbf16>
    %15 = vector.shape_cast %14 : vector<1x8x78xbf16> to vector<8x78xbf16>
    %c0_16 = arith.constant 0 : index
    %c0_17 = arith.constant 0 : index
    %c22 = arith.constant 22 : index
    %16 = vector.load %arg1[%c0_16, %c0_17, %c22] : memref<1x8x100xbf16, #tpu.memory_space<vmem>>, vector<1x8x78xbf16>
    %17 = vector.shape_cast %16 : vector<1x8x78xbf16> to vector<8x78xbf16>
    %18 = tpu.concatenate %1, %3, %5, %7, %9, %11, %13, %15, %17 in 0 : vector<8x78xbf16>, vector<8x78xbf16>, vector<8x78xbf16>, vector<8x78xbf16>, vector<8x78xbf16>, vector<8x78xbf16>, vector<8x78xbf16>, vector<8x78xbf16>, vector<8x78xbf16> -> vector<72x78xbf16>
    %c0_18 = arith.constant 0 : index
    %c0_19 = arith.constant 0 : index
    %19 = vector.load %arg2[%c0_18, %c0_19] : memref<16x72xbf16, #tpu.memory_space<vmem>>, vector<16x72xbf16>
    %cst = arith.constant dense<0.000000e+00> : vector<16x78xf32>
    %20 = tpu.matmul %19, %18, %cst {dimension_numbers = #tpu.dot_dimension_numbers<[1], [0], [0], [1], [0, 0, 1, 1], [], []>} : vector<16x72xbf16>, vector<72x78xbf16>, vector<16x78xf32> -> vector<16x78xf32>
    %c0_20 = arith.constant 0 : index
    %c0_21 = arith.constant 0 : index
    %21 = vector.load %arg3[%c0_20, %c0_21] : memref<16x1xf32, #tpu.memory_space<vmem>>, vector<16x1xf32>
    %22 = vector.broadcast %21 : vector<16x1xf32> to vector<16x78xf32>
    %23 = arith.addf %20, %22 : vector<16x78xf32>
    %c0_22 = arith.constant 0 : index
    %c0_23 = arith.constant 0 : index
    %24 = vector.load %arg4[%c0_22, %c0_23] : memref<1x78xf32, #tpu.memory_space<vmem>>, vector<1x78xf32>
    %25 = vector.broadcast %24 : vector<1x78xf32> to vector<16x78xf32>
    %26 = arith.mulf %23, %25 : vector<16x78xf32>
    %cst_24 = arith.constant dense<0.000000e+00> : vector<16xf32>
    %27 = vector.multi_reduction <add>, %26, %cst_24 [1] : vector<16x78xf32> to vector<16xf32>
    %28 = vector.shape_cast %27 : vector<16xf32> to vector<16x1xf32>
    %cst_25 = arith.constant 1.562500e-02 : f32
    %29 = vector.broadcast %cst_25 : f32 to vector<16x1xf32>
    %30 = arith.mulf %28, %29 : vector<16x1xf32>
    %31 = vector.broadcast %30 : vector<16x1xf32> to vector<16x78xf32>
    %32 = arith.subf %23, %31 : vector<16x78xf32>
    %33 = vector.broadcast %24 : vector<1x78xf32> to vector<16x78xf32>
    %34 = arith.mulf %32, %33 : vector<16x78xf32>
    %35 = arith.mulf %34, %34 : vector<16x78xf32>
    %cst_26 = arith.constant dense<0.000000e+00> : vector<16xf32>
    %36 = vector.multi_reduction <add>, %35, %cst_26 [1] : vector<16x78xf32> to vector<16xf32>
    %37 = vector.shape_cast %36 : vector<16xf32> to vector<16x1xf32>
    %cst_27 = arith.constant 1.562500e-02 : f32
    %38 = vector.broadcast %cst_27 : f32 to vector<16x1xf32>
    %39 = arith.mulf %37, %38 : vector<16x1xf32>
    %cst_28 = arith.constant 9.99999974E-6 : f32
    %40 = vector.broadcast %cst_28 : f32 to vector<16x1xf32>
    %41 = arith.addf %39, %40 : vector<16x1xf32>
    %42 = math.rsqrt %41 : vector<16x1xf32>
    %43 = vector.broadcast %42 : vector<16x1xf32> to vector<16x78xf32>
    %44 = arith.mulf %34, %43 : vector<16x78xf32>
    %cst_29 = arith.constant 0.000000e+00 : f32
    %45 = vector.broadcast %cst_29 : f32 to vector<16x78xf32>
    %46 = arith.cmpf oge, %44, %45 : vector<16x78xf32>
    %cst_30 = arith.constant 2.000000e-01 : f32
    %47 = vector.broadcast %cst_30 : f32 to vector<16x78xf32>
    %48 = arith.mulf %47, %44 : vector<16x78xf32>
    %49 = arith.select %46, %44, %48 : vector<16x78xi1>, vector<16x78xf32>
    %cst_31 = arith.constant 0.000000e+00 : bf16
    %50 = vector.broadcast %cst_31 : bf16 to vector<16x11xbf16>
    %c0_32 = arith.constant 0 : index
    %c0_33 = arith.constant 0 : index
    %c0_34 = arith.constant 0 : index
    %51 = vector.load %arg5[%c0_32, %c0_33, %c0_34] : memref<1x16x100xbf16, #tpu.memory_space<vmem>>, vector<1x16x11xbf16>
    %52 = vector.shape_cast %51 : vector<1x16x11xbf16> to vector<16x11xbf16>
    %53 = vector.shape_cast %50 : vector<16x11xbf16> to vector<1x16x11xbf16>
    tpu.vector_store %arg5[%c0_32, %c0_33, %c0_34], %53 {strides = array<i32>} : memref<1x16x100xbf16, #tpu.memory_space<vmem>>, vector<1x16x11xbf16>,
    %54 = arith.truncf %49 : vector<16x78xf32> to vector<16x78xbf16>
    %c0_35 = arith.constant 0 : index
    %c0_36 = arith.constant 0 : index
    %c11_37 = arith.constant 11 : index
    %55 = vector.load %arg5[%c0_35, %c0_36, %c11_37] : memref<1x16x100xbf16, #tpu.memory_space<vmem>>, vector<1x16x78xbf16>
    %56 = vector.shape_cast %55 : vector<1x16x78xbf16> to vector<16x78xbf16>
    %57 = vector.shape_cast %54 : vector<16x78xbf16> to vector<1x16x78xbf16>
    tpu.vector_store %arg5[%c0_35, %c0_36, %c11_37], %57 {strides = array<i32>} : memref<1x16x100xbf16, #tpu.memory_space<vmem>>, vector<1x16x78xbf16>,
    %c0_38 = arith.constant 0 : index
    %c0_39 = arith.constant 0 : index
    %c89 = arith.constant 89 : index
    %58 = vector.load %arg5[%c0_38, %c0_39, %c89] : memref<1x16x100xbf16, #tpu.memory_space<vmem>>, vector<1x16x11xbf16>
    %59 = vector.shape_cast %58 : vector<1x16x11xbf16> to vector<16x11xbf16>
    %60 = vector.shape_cast %50 : vector<16x11xbf16> to vector<1x16x11xbf16>
    tpu.vector_store %arg5[%c0_38, %c0_39, %c89], %60 {strides = array<i32>} : memref<1x16x100xbf16, #tpu.memory_space<vmem>>, vector<1x16x11xbf16>,
    return
  }
  func.func @transform_0(%arg0: i32) -> (i32, i32, i32) {
    %c0_i32 = arith.constant 0 : i32
    %c0_i32_0 = arith.constant 0 : i32
    %c0_i32_1 = arith.constant 0 : i32
    return %arg0, %c0_i32, %c0_i32_0 : i32, i32, i32
  }
  func.func @transform_1(%arg0: i32) -> (i32, i32) {
    %c0_i32 = arith.constant 0 : i32
    %c0_i32_0 = arith.constant 0 : i32
    %c0_i32_1 = arith.constant 0 : i32
    return %c0_i32, %c0_i32_0 : i32, i32
  }
  func.func @transform_2(%arg0: i32) -> (i32, i32) {
    %c0_i32 = arith.constant 0 : i32
    %c0_i32_0 = arith.constant 0 : i32
    %c0_i32_1 = arith.constant 0 : i32
    return %c0_i32, %c0_i32_0 : i32, i32
  }
  func.func @transform_3(%arg0: i32) -> (i32, i32) {
    %c0_i32 = arith.constant 0 : i32
    %c0_i32_0 = arith.constant 0 : i32
    %c0_i32_1 = arith.constant 0 : i32
    return %c0_i32, %c0_i32_0 : i32, i32
  }
  func.func @transform_4(%arg0: i32) -> (i32, i32, i32) {
    %c0_i32 = arith.constant 0 : i32
    %c0_i32_0 = arith.constant 0 : i32
    %c0_i32_1 = arith.constant 0 : i32
    return %arg0, %c0_i32, %c0_i32_0 : i32, i32, i32
  }
}

module attributes {stable_mosaic.version = 11 : i64} {
  func.func @_enc_conv_kernel(%arg0: i32, %arg1: memref<1x16x36xbf16, #tpu.memory_space<vmem>>, %arg2: memref<32x144xbf16, #tpu.memory_space<vmem>>, %arg3: memref<32x1xf32, #tpu.memory_space<vmem>>, %arg4: memref<1x22xf32, #tpu.memory_space<vmem>>, %arg5: memref<1x32x36xbf16, #tpu.memory_space<vmem>>) attributes {dimension_semantics = [#tpu.dimension_semantics<parallel>], iteration_bounds = array<i64: 2>, scalar_prefetch = 0 : i64, scratch_operands = 0 : i64, tpu.core_type = #tpu.core_type<tc>, window_params = [{transform_indices = @transform_0, window_bounds = array<i64: 1, 16, 36>}, {pipeline_mode = #tpu.pipeline_mode<synchronous>, transform_indices = @transform_1, window_bounds = array<i64: 32, 144>}, {pipeline_mode = #tpu.pipeline_mode<synchronous>, transform_indices = @transform_2, window_bounds = array<i64: 32, 1>}, {pipeline_mode = #tpu.pipeline_mode<synchronous>, transform_indices = @transform_3, window_bounds = array<i64: 1, 22>}, {transform_indices = @transform_4, window_bounds = array<i64: 1, 32, 36>}]} {
    %c0 = arith.constant 0 : index
    %c0_0 = arith.constant 0 : index
    %c0_1 = arith.constant 0 : index
    %0 = vector.load %arg1[%c0, %c0_0, %c0_1] : memref<1x16x36xbf16, #tpu.memory_space<vmem>>, vector<1x16x22xbf16>
    %1 = vector.shape_cast %0 : vector<1x16x22xbf16> to vector<16x22xbf16>
    %c0_2 = arith.constant 0 : index
    %c0_3 = arith.constant 0 : index
    %c1 = arith.constant 1 : index
    %2 = vector.load %arg1[%c0_2, %c0_3, %c1] : memref<1x16x36xbf16, #tpu.memory_space<vmem>>, vector<1x16x22xbf16>
    %3 = vector.shape_cast %2 : vector<1x16x22xbf16> to vector<16x22xbf16>
    %c0_4 = arith.constant 0 : index
    %c0_5 = arith.constant 0 : index
    %c2 = arith.constant 2 : index
    %4 = vector.load %arg1[%c0_4, %c0_5, %c2] : memref<1x16x36xbf16, #tpu.memory_space<vmem>>, vector<1x16x22xbf16>
    %5 = vector.shape_cast %4 : vector<1x16x22xbf16> to vector<16x22xbf16>
    %c0_6 = arith.constant 0 : index
    %c0_7 = arith.constant 0 : index
    %c6 = arith.constant 6 : index
    %6 = vector.load %arg1[%c0_6, %c0_7, %c6] : memref<1x16x36xbf16, #tpu.memory_space<vmem>>, vector<1x16x22xbf16>
    %7 = vector.shape_cast %6 : vector<1x16x22xbf16> to vector<16x22xbf16>
    %c0_8 = arith.constant 0 : index
    %c0_9 = arith.constant 0 : index
    %c7 = arith.constant 7 : index
    %8 = vector.load %arg1[%c0_8, %c0_9, %c7] : memref<1x16x36xbf16, #tpu.memory_space<vmem>>, vector<1x16x22xbf16>
    %9 = vector.shape_cast %8 : vector<1x16x22xbf16> to vector<16x22xbf16>
    %c0_10 = arith.constant 0 : index
    %c0_11 = arith.constant 0 : index
    %c8 = arith.constant 8 : index
    %10 = vector.load %arg1[%c0_10, %c0_11, %c8] : memref<1x16x36xbf16, #tpu.memory_space<vmem>>, vector<1x16x22xbf16>
    %11 = vector.shape_cast %10 : vector<1x16x22xbf16> to vector<16x22xbf16>
    %c0_12 = arith.constant 0 : index
    %c0_13 = arith.constant 0 : index
    %c12 = arith.constant 12 : index
    %12 = vector.load %arg1[%c0_12, %c0_13, %c12] : memref<1x16x36xbf16, #tpu.memory_space<vmem>>, vector<1x16x22xbf16>
    %13 = vector.shape_cast %12 : vector<1x16x22xbf16> to vector<16x22xbf16>
    %c0_14 = arith.constant 0 : index
    %c0_15 = arith.constant 0 : index
    %c13 = arith.constant 13 : index
    %14 = vector.load %arg1[%c0_14, %c0_15, %c13] : memref<1x16x36xbf16, #tpu.memory_space<vmem>>, vector<1x16x22xbf16>
    %15 = vector.shape_cast %14 : vector<1x16x22xbf16> to vector<16x22xbf16>
    %c0_16 = arith.constant 0 : index
    %c0_17 = arith.constant 0 : index
    %c14 = arith.constant 14 : index
    %16 = vector.load %arg1[%c0_16, %c0_17, %c14] : memref<1x16x36xbf16, #tpu.memory_space<vmem>>, vector<1x16x22xbf16>
    %17 = vector.shape_cast %16 : vector<1x16x22xbf16> to vector<16x22xbf16>
    %18 = tpu.concatenate %1, %3, %5, %7, %9, %11, %13, %15, %17 in 0 : vector<16x22xbf16>, vector<16x22xbf16>, vector<16x22xbf16>, vector<16x22xbf16>, vector<16x22xbf16>, vector<16x22xbf16>, vector<16x22xbf16>, vector<16x22xbf16>, vector<16x22xbf16> -> vector<144x22xbf16>
    %c0_18 = arith.constant 0 : index
    %c0_19 = arith.constant 0 : index
    %19 = vector.load %arg2[%c0_18, %c0_19] : memref<32x144xbf16, #tpu.memory_space<vmem>>, vector<32x144xbf16>
    %cst = arith.constant dense<0.000000e+00> : vector<32x22xf32>
    %20 = tpu.matmul %19, %18, %cst {dimension_numbers = #tpu.dot_dimension_numbers<[1], [0], [0], [1], [0, 0, 1, 1], [], []>} : vector<32x144xbf16>, vector<144x22xbf16>, vector<32x22xf32> -> vector<32x22xf32>
    %c0_20 = arith.constant 0 : index
    %c0_21 = arith.constant 0 : index
    %21 = vector.load %arg3[%c0_20, %c0_21] : memref<32x1xf32, #tpu.memory_space<vmem>>, vector<32x1xf32>
    %22 = vector.broadcast %21 : vector<32x1xf32> to vector<32x22xf32>
    %23 = arith.addf %20, %22 : vector<32x22xf32>
    %c0_22 = arith.constant 0 : index
    %c0_23 = arith.constant 0 : index
    %24 = vector.load %arg4[%c0_22, %c0_23] : memref<1x22xf32, #tpu.memory_space<vmem>>, vector<1x22xf32>
    %25 = vector.broadcast %24 : vector<1x22xf32> to vector<32x22xf32>
    %26 = arith.mulf %23, %25 : vector<32x22xf32>
    %cst_24 = arith.constant dense<0.000000e+00> : vector<32xf32>
    %27 = vector.multi_reduction <add>, %26, %cst_24 [1] : vector<32x22xf32> to vector<32xf32>
    %28 = vector.shape_cast %27 : vector<32xf32> to vector<32x1xf32>
    %cst_25 = arith.constant 6.250000e-02 : f32
    %29 = vector.broadcast %cst_25 : f32 to vector<32x1xf32>
    %30 = arith.mulf %28, %29 : vector<32x1xf32>
    %31 = vector.broadcast %30 : vector<32x1xf32> to vector<32x22xf32>
    %32 = arith.subf %23, %31 : vector<32x22xf32>
    %33 = vector.broadcast %24 : vector<1x22xf32> to vector<32x22xf32>
    %34 = arith.mulf %32, %33 : vector<32x22xf32>
    %35 = arith.mulf %34, %34 : vector<32x22xf32>
    %cst_26 = arith.constant dense<0.000000e+00> : vector<32xf32>
    %36 = vector.multi_reduction <add>, %35, %cst_26 [1] : vector<32x22xf32> to vector<32xf32>
    %37 = vector.shape_cast %36 : vector<32xf32> to vector<32x1xf32>
    %cst_27 = arith.constant 6.250000e-02 : f32
    %38 = vector.broadcast %cst_27 : f32 to vector<32x1xf32>
    %39 = arith.mulf %37, %38 : vector<32x1xf32>
    %cst_28 = arith.constant 9.99999974E-6 : f32
    %40 = vector.broadcast %cst_28 : f32 to vector<32x1xf32>
    %41 = arith.addf %39, %40 : vector<32x1xf32>
    %42 = math.rsqrt %41 : vector<32x1xf32>
    %43 = vector.broadcast %42 : vector<32x1xf32> to vector<32x22xf32>
    %44 = arith.mulf %34, %43 : vector<32x22xf32>
    %cst_29 = arith.constant 0.000000e+00 : f32
    %45 = vector.broadcast %cst_29 : f32 to vector<32x22xf32>
    %46 = arith.cmpf oge, %44, %45 : vector<32x22xf32>
    %cst_30 = arith.constant 2.000000e-01 : f32
    %47 = vector.broadcast %cst_30 : f32 to vector<32x22xf32>
    %48 = arith.mulf %47, %44 : vector<32x22xf32>
    %49 = arith.select %46, %44, %48 : vector<32x22xi1>, vector<32x22xf32>
    %cst_31 = arith.constant 0.000000e+00 : bf16
    %50 = vector.broadcast %cst_31 : bf16 to vector<32x7xbf16>
    %c0_32 = arith.constant 0 : index
    %c0_33 = arith.constant 0 : index
    %c0_34 = arith.constant 0 : index
    %51 = vector.load %arg5[%c0_32, %c0_33, %c0_34] : memref<1x32x36xbf16, #tpu.memory_space<vmem>>, vector<1x32x7xbf16>
    %52 = vector.shape_cast %51 : vector<1x32x7xbf16> to vector<32x7xbf16>
    %53 = vector.shape_cast %50 : vector<32x7xbf16> to vector<1x32x7xbf16>
    tpu.vector_store %arg5[%c0_32, %c0_33, %c0_34], %53 {strides = array<i32>} : memref<1x32x36xbf16, #tpu.memory_space<vmem>>, vector<1x32x7xbf16>,
    %54 = arith.truncf %49 : vector<32x22xf32> to vector<32x22xbf16>
    %c0_35 = arith.constant 0 : index
    %c0_36 = arith.constant 0 : index
    %c7_37 = arith.constant 7 : index
    %55 = vector.load %arg5[%c0_35, %c0_36, %c7_37] : memref<1x32x36xbf16, #tpu.memory_space<vmem>>, vector<1x32x22xbf16>
    %56 = vector.shape_cast %55 : vector<1x32x22xbf16> to vector<32x22xbf16>
    %57 = vector.shape_cast %54 : vector<32x22xbf16> to vector<1x32x22xbf16>
    tpu.vector_store %arg5[%c0_35, %c0_36, %c7_37], %57 {strides = array<i32>} : memref<1x32x36xbf16, #tpu.memory_space<vmem>>, vector<1x32x22xbf16>,
    %c0_38 = arith.constant 0 : index
    %c0_39 = arith.constant 0 : index
    %c29 = arith.constant 29 : index
    %58 = vector.load %arg5[%c0_38, %c0_39, %c29] : memref<1x32x36xbf16, #tpu.memory_space<vmem>>, vector<1x32x7xbf16>
    %59 = vector.shape_cast %58 : vector<1x32x7xbf16> to vector<32x7xbf16>
    %60 = vector.shape_cast %50 : vector<32x7xbf16> to vector<1x32x7xbf16>
    tpu.vector_store %arg5[%c0_38, %c0_39, %c29], %60 {strides = array<i32>} : memref<1x32x36xbf16, #tpu.memory_space<vmem>>, vector<1x32x7xbf16>,
    return
  }
  func.func @transform_0(%arg0: i32) -> (i32, i32, i32) {
    %c0_i32 = arith.constant 0 : i32
    %c0_i32_0 = arith.constant 0 : i32
    %c0_i32_1 = arith.constant 0 : i32
    return %arg0, %c0_i32, %c0_i32_0 : i32, i32, i32
  }
  func.func @transform_1(%arg0: i32) -> (i32, i32) {
    %c0_i32 = arith.constant 0 : i32
    %c0_i32_0 = arith.constant 0 : i32
    %c0_i32_1 = arith.constant 0 : i32
    return %c0_i32, %c0_i32_0 : i32, i32
  }
  func.func @transform_2(%arg0: i32) -> (i32, i32) {
    %c0_i32 = arith.constant 0 : i32
    %c0_i32_0 = arith.constant 0 : i32
    %c0_i32_1 = arith.constant 0 : i32
    return %c0_i32, %c0_i32_0 : i32, i32
  }
  func.func @transform_3(%arg0: i32) -> (i32, i32) {
    %c0_i32 = arith.constant 0 : i32
    %c0_i32_0 = arith.constant 0 : i32
    %c0_i32_1 = arith.constant 0 : i32
    return %c0_i32, %c0_i32_0 : i32, i32
  }
  func.func @transform_4(%arg0: i32) -> (i32, i32, i32) {
    %c0_i32 = arith.constant 0 : i32
    %c0_i32_0 = arith.constant 0 : i32
    %c0_i32_1 = arith.constant 0 : i32
    return %arg0, %c0_i32, %c0_i32_0 : i32, i32, i32
  }
}

module attributes {stable_mosaic.version = 11 : i64} {
  func.func @_dec_conv_kernel(%arg0: i32, %arg1: memref<1x32x100xbf16, #tpu.memory_space<vmem>>, %arg2: memref<1x16x100xbf16, #tpu.memory_space<vmem>>, %arg3: memref<16x32xbf16, #tpu.memory_space<vmem>>, %arg4: memref<16x1xf32, #tpu.memory_space<vmem>>, %arg5: memref<1x100xf32, #tpu.memory_space<vmem>>, %arg6: memref<16x144xbf16, #tpu.memory_space<vmem>>, %arg7: memref<16x144xbf16, #tpu.memory_space<vmem>>, %arg8: memref<16x1xf32, #tpu.memory_space<vmem>>, %arg9: memref<1x78xf32, #tpu.memory_space<vmem>>, %arg10: memref<1x16x100xbf16, #tpu.memory_space<vmem>>) attributes {dimension_semantics = [#tpu.dimension_semantics<parallel>], iteration_bounds = array<i64: 2>, scalar_prefetch = 0 : i64, scratch_operands = 0 : i64, tpu.core_type = #tpu.core_type<tc>, window_params = [{transform_indices = @transform_0, window_bounds = array<i64: 1, 32, 100>}, {transform_indices = @transform_1, window_bounds = array<i64: 1, 16, 100>}, {pipeline_mode = #tpu.pipeline_mode<synchronous>, transform_indices = @transform_2, window_bounds = array<i64: 16, 32>}, {pipeline_mode = #tpu.pipeline_mode<synchronous>, transform_indices = @transform_3, window_bounds = array<i64: 16, 1>}, {pipeline_mode = #tpu.pipeline_mode<synchronous>, transform_indices = @transform_4, window_bounds = array<i64: 1, 100>}, {pipeline_mode = #tpu.pipeline_mode<synchronous>, transform_indices = @transform_5, window_bounds = array<i64: 16, 144>}, {pipeline_mode = #tpu.pipeline_mode<synchronous>, transform_indices = @transform_6, window_bounds = array<i64: 16, 144>}, {pipeline_mode = #tpu.pipeline_mode<synchronous>, transform_indices = @transform_7, window_bounds = array<i64: 16, 1>}, {pipeline_mode = #tpu.pipeline_mode<synchronous>, transform_indices = @transform_8, window_bounds = array<i64: 1, 78>}, {transform_indices = @transform_9, window_bounds = array<i64: 1, 16, 100>}]} {
    %c0 = arith.constant 0 : index
    %c0_0 = arith.constant 0 : index
    %0 = vector.load %arg3[%c0, %c0_0] : memref<16x32xbf16, #tpu.memory_space<vmem>>, vector<16x32xbf16>
    %c0_1 = arith.constant 0 : index
    %c0_2 = arith.constant 0 : index
    %c0_3 = arith.constant 0 : index
    %1 = vector.load %arg1[%c0_1, %c0_2, %c0_3] : memref<1x32x100xbf16, #tpu.memory_space<vmem>>, vector<1x32x100xbf16>
    %2 = vector.shape_cast %1 : vector<1x32x100xbf16> to vector<32x100xbf16>
    %cst = arith.constant dense<0.000000e+00> : vector<16x100xf32>
    %3 = tpu.matmul %0, %2, %cst {dimension_numbers = #tpu.dot_dimension_numbers<[1], [0], [0], [1], [0, 0, 1, 1], [], []>} : vector<16x32xbf16>, vector<32x100xbf16>, vector<16x100xf32> -> vector<16x100xf32>
    %c0_4 = arith.constant 0 : index
    %c0_5 = arith.constant 0 : index
    %4 = vector.load %arg4[%c0_4, %c0_5] : memref<16x1xf32, #tpu.memory_space<vmem>>, vector<16x1xf32>
    %c0_6 = arith.constant 0 : index
    %c0_7 = arith.constant 0 : index
    %5 = vector.load %arg5[%c0_6, %c0_7] : memref<1x100xf32, #tpu.memory_space<vmem>>, vector<1x100xf32>
    %6 = vector.broadcast %4 : vector<16x1xf32> to vector<16x100xf32>
    %7 = vector.broadcast %5 : vector<1x100xf32> to vector<16x100xf32>
    %8 = arith.mulf %6, %7 : vector<16x100xf32>
    %9 = arith.addf %3, %8 : vector<16x100xf32>
    %10 = arith.truncf %9 : vector<16x100xf32> to vector<16x100xbf16>
    %11 = vector.extract_strided_slice %10 {offsets = [0, 0], sizes = [16, 78], strides = [1, 1]} : vector<16x100xbf16> to vector<16x78xbf16>
    %12 = vector.extract_strided_slice %10 {offsets = [0, 1], sizes = [16, 78], strides = [1, 1]} : vector<16x100xbf16> to vector<16x78xbf16>
    %13 = vector.extract_strided_slice %10 {offsets = [0, 2], sizes = [16, 78], strides = [1, 1]} : vector<16x100xbf16> to vector<16x78xbf16>
    %14 = vector.extract_strided_slice %10 {offsets = [0, 10], sizes = [16, 78], strides = [1, 1]} : vector<16x100xbf16> to vector<16x78xbf16>
    %15 = vector.extract_strided_slice %10 {offsets = [0, 11], sizes = [16, 78], strides = [1, 1]} : vector<16x100xbf16> to vector<16x78xbf16>
    %16 = vector.extract_strided_slice %10 {offsets = [0, 12], sizes = [16, 78], strides = [1, 1]} : vector<16x100xbf16> to vector<16x78xbf16>
    %17 = vector.extract_strided_slice %10 {offsets = [0, 20], sizes = [16, 78], strides = [1, 1]} : vector<16x100xbf16> to vector<16x78xbf16>
    %18 = vector.extract_strided_slice %10 {offsets = [0, 21], sizes = [16, 78], strides = [1, 1]} : vector<16x100xbf16> to vector<16x78xbf16>
    %19 = vector.extract_strided_slice %10 {offsets = [0, 22], sizes = [16, 78], strides = [1, 1]} : vector<16x100xbf16> to vector<16x78xbf16>
    %20 = tpu.concatenate %11, %12, %13, %14, %15, %16, %17, %18, %19 in 0 : vector<16x78xbf16>, vector<16x78xbf16>, vector<16x78xbf16>, vector<16x78xbf16>, vector<16x78xbf16>, vector<16x78xbf16>, vector<16x78xbf16>, vector<16x78xbf16>, vector<16x78xbf16> -> vector<144x78xbf16>
    %c0_8 = arith.constant 0 : index
    %c0_9 = arith.constant 0 : index
    %c0_10 = arith.constant 0 : index
    %21 = vector.load %arg2[%c0_8, %c0_9, %c0_10] : memref<1x16x100xbf16, #tpu.memory_space<vmem>>, vector<1x16x78xbf16>
    %22 = vector.shape_cast %21 : vector<1x16x78xbf16> to vector<16x78xbf16>
    %c0_11 = arith.constant 0 : index
    %c0_12 = arith.constant 0 : index
    %c1 = arith.constant 1 : index
    %23 = vector.load %arg2[%c0_11, %c0_12, %c1] : memref<1x16x100xbf16, #tpu.memory_space<vmem>>, vector<1x16x78xbf16>
    %24 = vector.shape_cast %23 : vector<1x16x78xbf16> to vector<16x78xbf16>
    %c0_13 = arith.constant 0 : index
    %c0_14 = arith.constant 0 : index
    %c2 = arith.constant 2 : index
    %25 = vector.load %arg2[%c0_13, %c0_14, %c2] : memref<1x16x100xbf16, #tpu.memory_space<vmem>>, vector<1x16x78xbf16>
    %26 = vector.shape_cast %25 : vector<1x16x78xbf16> to vector<16x78xbf16>
    %c0_15 = arith.constant 0 : index
    %c0_16 = arith.constant 0 : index
    %c10 = arith.constant 10 : index
    %27 = vector.load %arg2[%c0_15, %c0_16, %c10] : memref<1x16x100xbf16, #tpu.memory_space<vmem>>, vector<1x16x78xbf16>
    %28 = vector.shape_cast %27 : vector<1x16x78xbf16> to vector<16x78xbf16>
    %c0_17 = arith.constant 0 : index
    %c0_18 = arith.constant 0 : index
    %c11 = arith.constant 11 : index
    %29 = vector.load %arg2[%c0_17, %c0_18, %c11] : memref<1x16x100xbf16, #tpu.memory_space<vmem>>, vector<1x16x78xbf16>
    %30 = vector.shape_cast %29 : vector<1x16x78xbf16> to vector<16x78xbf16>
    %c0_19 = arith.constant 0 : index
    %c0_20 = arith.constant 0 : index
    %c12 = arith.constant 12 : index
    %31 = vector.load %arg2[%c0_19, %c0_20, %c12] : memref<1x16x100xbf16, #tpu.memory_space<vmem>>, vector<1x16x78xbf16>
    %32 = vector.shape_cast %31 : vector<1x16x78xbf16> to vector<16x78xbf16>
    %c0_21 = arith.constant 0 : index
    %c0_22 = arith.constant 0 : index
    %c20 = arith.constant 20 : index
    %33 = vector.load %arg2[%c0_21, %c0_22, %c20] : memref<1x16x100xbf16, #tpu.memory_space<vmem>>, vector<1x16x78xbf16>
    %34 = vector.shape_cast %33 : vector<1x16x78xbf16> to vector<16x78xbf16>
    %c0_23 = arith.constant 0 : index
    %c0_24 = arith.constant 0 : index
    %c21 = arith.constant 21 : index
    %35 = vector.load %arg2[%c0_23, %c0_24, %c21] : memref<1x16x100xbf16, #tpu.memory_space<vmem>>, vector<1x16x78xbf16>
    %36 = vector.shape_cast %35 : vector<1x16x78xbf16> to vector<16x78xbf16>
    %c0_25 = arith.constant 0 : index
    %c0_26 = arith.constant 0 : index
    %c22 = arith.constant 22 : index
    %37 = vector.load %arg2[%c0_25, %c0_26, %c22] : memref<1x16x100xbf16, #tpu.memory_space<vmem>>, vector<1x16x78xbf16>
    %38 = vector.shape_cast %37 : vector<1x16x78xbf16> to vector<16x78xbf16>
    %39 = tpu.concatenate %22, %24, %26, %28, %30, %32, %34, %36, %38 in 0 : vector<16x78xbf16>, vector<16x78xbf16>, vector<16x78xbf16>, vector<16x78xbf16>, vector<16x78xbf16>, vector<16x78xbf16>, vector<16x78xbf16>, vector<16x78xbf16>, vector<16x78xbf16> -> vector<144x78xbf16>
    %c0_27 = arith.constant 0 : index
    %c0_28 = arith.constant 0 : index
    %40 = vector.load %arg6[%c0_27, %c0_28] : memref<16x144xbf16, #tpu.memory_space<vmem>>, vector<16x144xbf16>
    %cst_29 = arith.constant dense<0.000000e+00> : vector<16x78xf32>
    %41 = tpu.matmul %40, %20, %cst_29 {dimension_numbers = #tpu.dot_dimension_numbers<[1], [0], [0], [1], [0, 0, 1, 1], [], []>} : vector<16x144xbf16>, vector<144x78xbf16>, vector<16x78xf32> -> vector<16x78xf32>
    %c0_30 = arith.constant 0 : index
    %c0_31 = arith.constant 0 : index
    %42 = vector.load %arg7[%c0_30, %c0_31] : memref<16x144xbf16, #tpu.memory_space<vmem>>, vector<16x144xbf16>
    %cst_32 = arith.constant dense<0.000000e+00> : vector<16x78xf32>
    %43 = tpu.matmul %42, %39, %cst_32 {dimension_numbers = #tpu.dot_dimension_numbers<[1], [0], [0], [1], [0, 0, 1, 1], [], []>} : vector<16x144xbf16>, vector<144x78xbf16>, vector<16x78xf32> -> vector<16x78xf32>
    %44 = arith.addf %41, %43 : vector<16x78xf32>
    %c0_33 = arith.constant 0 : index
    %c0_34 = arith.constant 0 : index
    %45 = vector.load %arg8[%c0_33, %c0_34] : memref<16x1xf32, #tpu.memory_space<vmem>>, vector<16x1xf32>
    %46 = vector.broadcast %45 : vector<16x1xf32> to vector<16x78xf32>
    %47 = arith.addf %44, %46 : vector<16x78xf32>
    %c0_35 = arith.constant 0 : index
    %c0_36 = arith.constant 0 : index
    %48 = vector.load %arg9[%c0_35, %c0_36] : memref<1x78xf32, #tpu.memory_space<vmem>>, vector<1x78xf32>
    %49 = vector.broadcast %48 : vector<1x78xf32> to vector<16x78xf32>
    %50 = arith.mulf %47, %49 : vector<16x78xf32>
    %cst_37 = arith.constant dense<0.000000e+00> : vector<16xf32>
    %51 = vector.multi_reduction <add>, %50, %cst_37 [1] : vector<16x78xf32> to vector<16xf32>
    %52 = vector.shape_cast %51 : vector<16xf32> to vector<16x1xf32>
    %cst_38 = arith.constant 1.562500e-02 : f32
    %53 = vector.broadcast %cst_38 : f32 to vector<16x1xf32>
    %54 = arith.mulf %52, %53 : vector<16x1xf32>
    %55 = vector.broadcast %54 : vector<16x1xf32> to vector<16x78xf32>
    %56 = arith.subf %47, %55 : vector<16x78xf32>
    %57 = vector.broadcast %48 : vector<1x78xf32> to vector<16x78xf32>
    %58 = arith.mulf %56, %57 : vector<16x78xf32>
    %59 = arith.mulf %58, %58 : vector<16x78xf32>
    %cst_39 = arith.constant dense<0.000000e+00> : vector<16xf32>
    %60 = vector.multi_reduction <add>, %59, %cst_39 [1] : vector<16x78xf32> to vector<16xf32>
    %61 = vector.shape_cast %60 : vector<16xf32> to vector<16x1xf32>
    %cst_40 = arith.constant 1.562500e-02 : f32
    %62 = vector.broadcast %cst_40 : f32 to vector<16x1xf32>
    %63 = arith.mulf %61, %62 : vector<16x1xf32>
    %cst_41 = arith.constant 9.99999974E-6 : f32
    %64 = vector.broadcast %cst_41 : f32 to vector<16x1xf32>
    %65 = arith.addf %63, %64 : vector<16x1xf32>
    %66 = math.rsqrt %65 : vector<16x1xf32>
    %67 = vector.broadcast %66 : vector<16x1xf32> to vector<16x78xf32>
    %68 = arith.mulf %58, %67 : vector<16x78xf32>
    %cst_42 = arith.constant 0.000000e+00 : f32
    %69 = vector.broadcast %cst_42 : f32 to vector<16x78xf32>
    %70 = arith.cmpf oge, %68, %69 : vector<16x78xf32>
    %cst_43 = arith.constant 2.000000e-01 : f32
    %71 = vector.broadcast %cst_43 : f32 to vector<16x78xf32>
    %72 = arith.mulf %71, %68 : vector<16x78xf32>
    %73 = arith.select %70, %68, %72 : vector<16x78xi1>, vector<16x78xf32>
    %cst_44 = arith.constant 0.000000e+00 : bf16
    %74 = vector.broadcast %cst_44 : bf16 to vector<16x11xbf16>
    %c0_45 = arith.constant 0 : index
    %c0_46 = arith.constant 0 : index
    %c0_47 = arith.constant 0 : index
    %75 = vector.load %arg10[%c0_45, %c0_46, %c0_47] : memref<1x16x100xbf16, #tpu.memory_space<vmem>>, vector<1x16x11xbf16>
    %76 = vector.shape_cast %75 : vector<1x16x11xbf16> to vector<16x11xbf16>
    %77 = vector.shape_cast %74 : vector<16x11xbf16> to vector<1x16x11xbf16>
    tpu.vector_store %arg10[%c0_45, %c0_46, %c0_47], %77 {strides = array<i32>} : memref<1x16x100xbf16, #tpu.memory_space<vmem>>, vector<1x16x11xbf16>,
    %78 = arith.truncf %73 : vector<16x78xf32> to vector<16x78xbf16>
    %c0_48 = arith.constant 0 : index
    %c0_49 = arith.constant 0 : index
    %c11_50 = arith.constant 11 : index
    %79 = vector.load %arg10[%c0_48, %c0_49, %c11_50] : memref<1x16x100xbf16, #tpu.memory_space<vmem>>, vector<1x16x78xbf16>
    %80 = vector.shape_cast %79 : vector<1x16x78xbf16> to vector<16x78xbf16>
    %81 = vector.shape_cast %78 : vector<16x78xbf16> to vector<1x16x78xbf16>
    tpu.vector_store %arg10[%c0_48, %c0_49, %c11_50], %81 {strides = array<i32>} : memref<1x16x100xbf16, #tpu.memory_space<vmem>>, vector<1x16x78xbf16>,
    %c0_51 = arith.constant 0 : index
    %c0_52 = arith.constant 0 : index
    %c89 = arith.constant 89 : index
    %82 = vector.load %arg10[%c0_51, %c0_52, %c89] : memref<1x16x100xbf16, #tpu.memory_space<vmem>>, vector<1x16x11xbf16>
    %83 = vector.shape_cast %82 : vector<1x16x11xbf16> to vector<16x11xbf16>
    %84 = vector.shape_cast %74 : vector<16x11xbf16> to vector<1x16x11xbf16>
    tpu.vector_store %arg10[%c0_51, %c0_52, %c89], %84 {strides = array<i32>} : memref<1x16x100xbf16, #tpu.memory_space<vmem>>, vector<1x16x11xbf16>,
    return
  }
  func.func @transform_0(%arg0: i32) -> (i32, i32, i32) {
    %c0_i32 = arith.constant 0 : i32
    %c0_i32_0 = arith.constant 0 : i32
    %c0_i32_1 = arith.constant 0 : i32
    return %arg0, %c0_i32, %c0_i32_0 : i32, i32, i32
  }
  func.func @transform_1(%arg0: i32) -> (i32, i32, i32) {
    %c0_i32 = arith.constant 0 : i32
    %c0_i32_0 = arith.constant 0 : i32
    %c0_i32_1 = arith.constant 0 : i32
    return %arg0, %c0_i32, %c0_i32_0 : i32, i32, i32
  }
  func.func @transform_2(%arg0: i32) -> (i32, i32) {
    %c0_i32 = arith.constant 0 : i32
    %c0_i32_0 = arith.constant 0 : i32
    %c0_i32_1 = arith.constant 0 : i32
    return %c0_i32, %c0_i32_0 : i32, i32
  }
  func.func @transform_3(%arg0: i32) -> (i32, i32) {
    %c0_i32 = arith.constant 0 : i32
    %c0_i32_0 = arith.constant 0 : i32
    %c0_i32_1 = arith.constant 0 : i32
    return %c0_i32, %c0_i32_0 : i32, i32
  }
  func.func @transform_4(%arg0: i32) -> (i32, i32) {
    %c0_i32 = arith.constant 0 : i32
    %c0_i32_0 = arith.constant 0 : i32
    %c0_i32_1 = arith.constant 0 : i32
    return %c0_i32, %c0_i32_0 : i32, i32
  }
  func.func @transform_5(%arg0: i32) -> (i32, i32) {
    %c0_i32 = arith.constant 0 : i32
    %c0_i32_0 = arith.constant 0 : i32
    %c0_i32_1 = arith.constant 0 : i32
    return %c0_i32, %c0_i32_0 : i32, i32
  }
  func.func @transform_6(%arg0: i32) -> (i32, i32) {
    %c0_i32 = arith.constant 0 : i32
    %c0_i32_0 = arith.constant 0 : i32
    %c0_i32_1 = arith.constant 0 : i32
    return %c0_i32, %c0_i32_0 : i32, i32
  }
  func.func @transform_7(%arg0: i32) -> (i32, i32) {
    %c0_i32 = arith.constant 0 : i32
    %c0_i32_0 = arith.constant 0 : i32
    %c0_i32_1 = arith.constant 0 : i32
    return %c0_i32, %c0_i32_0 : i32, i32
  }
  func.func @transform_8(%arg0: i32) -> (i32, i32) {
    %c0_i32 = arith.constant 0 : i32
    %c0_i32_0 = arith.constant 0 : i32
    %c0_i32_1 = arith.constant 0 : i32
    return %c0_i32, %c0_i32_0 : i32, i32
  }
  func.func @transform_9(%arg0: i32) -> (i32, i32, i32) {
    %c0_i32 = arith.constant 0 : i32
    %c0_i32_0 = arith.constant 0 : i32
    %c0_i32_1 = arith.constant 0 : i32
    return %arg0, %c0_i32, %c0_i32_0 : i32, i32, i32
  }
}

module attributes {stable_mosaic.version = 11 : i64} {
  func.func @_conv1x1_kernel(%arg0: i32, %arg1: memref<1x8x324xbf16, #tpu.memory_space<vmem>>, %arg2: memref<2x8xbf16, #tpu.memory_space<vmem>>, %arg3: memref<2x1xf32, #tpu.memory_space<vmem>>, %arg4: memref<1x2x324xf32, #tpu.memory_space<vmem>>) attributes {dimension_semantics = [#tpu.dimension_semantics<parallel>], iteration_bounds = array<i64: 2>, scalar_prefetch = 0 : i64, scratch_operands = 0 : i64, tpu.core_type = #tpu.core_type<tc>, window_params = [{transform_indices = @transform_0, window_bounds = array<i64: 1, 8, 324>}, {pipeline_mode = #tpu.pipeline_mode<synchronous>, transform_indices = @transform_1, window_bounds = array<i64: 2, 8>}, {pipeline_mode = #tpu.pipeline_mode<synchronous>, transform_indices = @transform_2, window_bounds = array<i64: 2, 1>}, {transform_indices = @transform_3, window_bounds = array<i64: 1, 2, 324>}]} {
    %c0 = arith.constant 0 : index
    %c0_0 = arith.constant 0 : index
    %0 = vector.load %arg2[%c0, %c0_0] : memref<2x8xbf16, #tpu.memory_space<vmem>>, vector<2x8xbf16>
    %c0_1 = arith.constant 0 : index
    %c0_2 = arith.constant 0 : index
    %c0_3 = arith.constant 0 : index
    %1 = vector.load %arg1[%c0_1, %c0_2, %c0_3] : memref<1x8x324xbf16, #tpu.memory_space<vmem>>, vector<1x8x324xbf16>
    %2 = vector.shape_cast %1 : vector<1x8x324xbf16> to vector<8x324xbf16>
    %cst = arith.constant dense<0.000000e+00> : vector<2x324xf32>
    %3 = tpu.matmul %0, %2, %cst {dimension_numbers = #tpu.dot_dimension_numbers<[1], [0], [0], [1], [0, 0, 1, 1], [], []>} : vector<2x8xbf16>, vector<8x324xbf16>, vector<2x324xf32> -> vector<2x324xf32>
    %c0_4 = arith.constant 0 : index
    %c0_5 = arith.constant 0 : index
    %4 = vector.load %arg3[%c0_4, %c0_5] : memref<2x1xf32, #tpu.memory_space<vmem>>, vector<2x1xf32>
    %5 = vector.broadcast %4 : vector<2x1xf32> to vector<2x324xf32>
    %6 = arith.addf %3, %5 : vector<2x324xf32>
    %c0_6 = arith.constant 0 : index
    %c0_7 = arith.constant 0 : index
    %c0_8 = arith.constant 0 : index
    %7 = vector.load %arg4[%c0_6, %c0_7, %c0_8] : memref<1x2x324xf32, #tpu.memory_space<vmem>>, vector<1x2x324xf32>
    %8 = vector.shape_cast %7 : vector<1x2x324xf32> to vector<2x324xf32>
    %9 = vector.shape_cast %6 : vector<2x324xf32> to vector<1x2x324xf32>
    tpu.vector_store %arg4[%c0_6, %c0_7, %c0_8], %9 {strides = array<i32>} : memref<1x2x324xf32, #tpu.memory_space<vmem>>, vector<1x2x324xf32>,
    return
  }
  func.func @transform_0(%arg0: i32) -> (i32, i32, i32) {
    %c0_i32 = arith.constant 0 : i32
    %c0_i32_0 = arith.constant 0 : i32
    %c0_i32_1 = arith.constant 0 : i32
    return %arg0, %c0_i32, %c0_i32_0 : i32, i32, i32
  }
  func.func @transform_1(%arg0: i32) -> (i32, i32) {
    %c0_i32 = arith.constant 0 : i32
    %c0_i32_0 = arith.constant 0 : i32
    %c0_i32_1 = arith.constant 0 : i32
    return %c0_i32, %c0_i32_0 : i32, i32
  }
  func.func @transform_2(%arg0: i32) -> (i32, i32) {
    %c0_i32 = arith.constant 0 : i32
    %c0_i32_0 = arith.constant 0 : i32
    %c0_i32_1 = arith.constant 0 : i32
    return %c0_i32, %c0_i32_0 : i32, i32
  }
  func.func @transform_3(%arg0: i32) -> (i32, i32, i32) {
    %c0_i32 = arith.constant 0 : i32
    %c0_i32_0 = arith.constant 0 : i32
    %c0_i32_1 = arith.constant 0 : i32
    return %arg0, %c0_i32, %c0_i32_0 : i32, i32, i32
  }
}

module attributes {stable_mosaic.version = 11 : i64} {
  func.func @_dec_conv_kernel(%arg0: i32, %arg1: memref<1x16x324xbf16, #tpu.memory_space<vmem>>, %arg2: memref<1x8x324xbf16, #tpu.memory_space<vmem>>, %arg3: memref<8x16xbf16, #tpu.memory_space<vmem>>, %arg4: memref<8x1xf32, #tpu.memory_space<vmem>>, %arg5: memref<1x324xf32, #tpu.memory_space<vmem>>, %arg6: memref<8x72xbf16, #tpu.memory_space<vmem>>, %arg7: memref<8x72xbf16, #tpu.memory_space<vmem>>, %arg8: memref<8x1xf32, #tpu.memory_space<vmem>>, %arg9: memref<1x286xf32, #tpu.memory_space<vmem>>, %arg10: memref<1x8x324xbf16, #tpu.memory_space<vmem>>) attributes {dimension_semantics = [#tpu.dimension_semantics<parallel>], iteration_bounds = array<i64: 2>, scalar_prefetch = 0 : i64, scratch_operands = 0 : i64, tpu.core_type = #tpu.core_type<tc>, window_params = [{transform_indices = @transform_0, window_bounds = array<i64: 1, 16, 324>}, {transform_indices = @transform_1, window_bounds = array<i64: 1, 8, 324>}, {pipeline_mode = #tpu.pipeline_mode<synchronous>, transform_indices = @transform_2, window_bounds = array<i64: 8, 16>}, {pipeline_mode = #tpu.pipeline_mode<synchronous>, transform_indices = @transform_3, window_bounds = array<i64: 8, 1>}, {pipeline_mode = #tpu.pipeline_mode<synchronous>, transform_indices = @transform_4, window_bounds = array<i64: 1, 324>}, {pipeline_mode = #tpu.pipeline_mode<synchronous>, transform_indices = @transform_5, window_bounds = array<i64: 8, 72>}, {pipeline_mode = #tpu.pipeline_mode<synchronous>, transform_indices = @transform_6, window_bounds = array<i64: 8, 72>}, {pipeline_mode = #tpu.pipeline_mode<synchronous>, transform_indices = @transform_7, window_bounds = array<i64: 8, 1>}, {pipeline_mode = #tpu.pipeline_mode<synchronous>, transform_indices = @transform_8, window_bounds = array<i64: 1, 286>}, {transform_indices = @transform_9, window_bounds = array<i64: 1, 8, 324>}]} {
    %c0 = arith.constant 0 : index
    %c0_0 = arith.constant 0 : index
    %0 = vector.load %arg3[%c0, %c0_0] : memref<8x16xbf16, #tpu.memory_space<vmem>>, vector<8x16xbf16>
    %c0_1 = arith.constant 0 : index
    %c0_2 = arith.constant 0 : index
    %c0_3 = arith.constant 0 : index
    %1 = vector.load %arg1[%c0_1, %c0_2, %c0_3] : memref<1x16x324xbf16, #tpu.memory_space<vmem>>, vector<1x16x324xbf16>
    %2 = vector.shape_cast %1 : vector<1x16x324xbf16> to vector<16x324xbf16>
    %cst = arith.constant dense<0.000000e+00> : vector<8x324xf32>
    %3 = tpu.matmul %0, %2, %cst {dimension_numbers = #tpu.dot_dimension_numbers<[1], [0], [0], [1], [0, 0, 1, 1], [], []>} : vector<8x16xbf16>, vector<16x324xbf16>, vector<8x324xf32> -> vector<8x324xf32>
    %c0_4 = arith.constant 0 : index
    %c0_5 = arith.constant 0 : index
    %4 = vector.load %arg4[%c0_4, %c0_5] : memref<8x1xf32, #tpu.memory_space<vmem>>, vector<8x1xf32>
    %c0_6 = arith.constant 0 : index
    %c0_7 = arith.constant 0 : index
    %5 = vector.load %arg5[%c0_6, %c0_7] : memref<1x324xf32, #tpu.memory_space<vmem>>, vector<1x324xf32>
    %6 = vector.broadcast %4 : vector<8x1xf32> to vector<8x324xf32>
    %7 = vector.broadcast %5 : vector<1x324xf32> to vector<8x324xf32>
    %8 = arith.mulf %6, %7 : vector<8x324xf32>
    %9 = arith.addf %3, %8 : vector<8x324xf32>
    %10 = arith.truncf %9 : vector<8x324xf32> to vector<8x324xbf16>
    %11 = vector.extract_strided_slice %10 {offsets = [0, 0], sizes = [8, 286], strides = [1, 1]} : vector<8x324xbf16> to vector<8x286xbf16>
    %12 = vector.extract_strided_slice %10 {offsets = [0, 1], sizes = [8, 286], strides = [1, 1]} : vector<8x324xbf16> to vector<8x286xbf16>
    %13 = vector.extract_strided_slice %10 {offsets = [0, 2], sizes = [8, 286], strides = [1, 1]} : vector<8x324xbf16> to vector<8x286xbf16>
    %14 = vector.extract_strided_slice %10 {offsets = [0, 18], sizes = [8, 286], strides = [1, 1]} : vector<8x324xbf16> to vector<8x286xbf16>
    %15 = vector.extract_strided_slice %10 {offsets = [0, 19], sizes = [8, 286], strides = [1, 1]} : vector<8x324xbf16> to vector<8x286xbf16>
    %16 = vector.extract_strided_slice %10 {offsets = [0, 20], sizes = [8, 286], strides = [1, 1]} : vector<8x324xbf16> to vector<8x286xbf16>
    %17 = vector.extract_strided_slice %10 {offsets = [0, 36], sizes = [8, 286], strides = [1, 1]} : vector<8x324xbf16> to vector<8x286xbf16>
    %18 = vector.extract_strided_slice %10 {offsets = [0, 37], sizes = [8, 286], strides = [1, 1]} : vector<8x324xbf16> to vector<8x286xbf16>
    %19 = vector.extract_strided_slice %10 {offsets = [0, 38], sizes = [8, 286], strides = [1, 1]} : vector<8x324xbf16> to vector<8x286xbf16>
    %20 = tpu.concatenate %11, %12, %13, %14, %15, %16, %17, %18, %19 in 0 : vector<8x286xbf16>, vector<8x286xbf16>, vector<8x286xbf16>, vector<8x286xbf16>, vector<8x286xbf16>, vector<8x286xbf16>, vector<8x286xbf16>, vector<8x286xbf16>, vector<8x286xbf16> -> vector<72x286xbf16>
    %c0_8 = arith.constant 0 : index
    %c0_9 = arith.constant 0 : index
    %c0_10 = arith.constant 0 : index
    %21 = vector.load %arg2[%c0_8, %c0_9, %c0_10] : memref<1x8x324xbf16, #tpu.memory_space<vmem>>, vector<1x8x286xbf16>
    %22 = vector.shape_cast %21 : vector<1x8x286xbf16> to vector<8x286xbf16>
    %c0_11 = arith.constant 0 : index
    %c0_12 = arith.constant 0 : index
    %c1 = arith.constant 1 : index
    %23 = vector.load %arg2[%c0_11, %c0_12, %c1] : memref<1x8x324xbf16, #tpu.memory_space<vmem>>, vector<1x8x286xbf16>
    %24 = vector.shape_cast %23 : vector<1x8x286xbf16> to vector<8x286xbf16>
    %c0_13 = arith.constant 0 : index
    %c0_14 = arith.constant 0 : index
    %c2 = arith.constant 2 : index
    %25 = vector.load %arg2[%c0_13, %c0_14, %c2] : memref<1x8x324xbf16, #tpu.memory_space<vmem>>, vector<1x8x286xbf16>
    %26 = vector.shape_cast %25 : vector<1x8x286xbf16> to vector<8x286xbf16>
    %c0_15 = arith.constant 0 : index
    %c0_16 = arith.constant 0 : index
    %c18 = arith.constant 18 : index
    %27 = vector.load %arg2[%c0_15, %c0_16, %c18] : memref<1x8x324xbf16, #tpu.memory_space<vmem>>, vector<1x8x286xbf16>
    %28 = vector.shape_cast %27 : vector<1x8x286xbf16> to vector<8x286xbf16>
    %c0_17 = arith.constant 0 : index
    %c0_18 = arith.constant 0 : index
    %c19 = arith.constant 19 : index
    %29 = vector.load %arg2[%c0_17, %c0_18, %c19] : memref<1x8x324xbf16, #tpu.memory_space<vmem>>, vector<1x8x286xbf16>
    %30 = vector.shape_cast %29 : vector<1x8x286xbf16> to vector<8x286xbf16>
    %c0_19 = arith.constant 0 : index
    %c0_20 = arith.constant 0 : index
    %c20 = arith.constant 20 : index
    %31 = vector.load %arg2[%c0_19, %c0_20, %c20] : memref<1x8x324xbf16, #tpu.memory_space<vmem>>, vector<1x8x286xbf16>
    %32 = vector.shape_cast %31 : vector<1x8x286xbf16> to vector<8x286xbf16>
    %c0_21 = arith.constant 0 : index
    %c0_22 = arith.constant 0 : index
    %c36 = arith.constant 36 : index
    %33 = vector.load %arg2[%c0_21, %c0_22, %c36] : memref<1x8x324xbf16, #tpu.memory_space<vmem>>, vector<1x8x286xbf16>
    %34 = vector.shape_cast %33 : vector<1x8x286xbf16> to vector<8x286xbf16>
    %c0_23 = arith.constant 0 : index
    %c0_24 = arith.constant 0 : index
    %c37 = arith.constant 37 : index
    %35 = vector.load %arg2[%c0_23, %c0_24, %c37] : memref<1x8x324xbf16, #tpu.memory_space<vmem>>, vector<1x8x286xbf16>
    %36 = vector.shape_cast %35 : vector<1x8x286xbf16> to vector<8x286xbf16>
    %c0_25 = arith.constant 0 : index
    %c0_26 = arith.constant 0 : index
    %c38 = arith.constant 38 : index
    %37 = vector.load %arg2[%c0_25, %c0_26, %c38] : memref<1x8x324xbf16, #tpu.memory_space<vmem>>, vector<1x8x286xbf16>
    %38 = vector.shape_cast %37 : vector<1x8x286xbf16> to vector<8x286xbf16>
    %39 = tpu.concatenate %22, %24, %26, %28, %30, %32, %34, %36, %38 in 0 : vector<8x286xbf16>, vector<8x286xbf16>, vector<8x286xbf16>, vector<8x286xbf16>, vector<8x286xbf16>, vector<8x286xbf16>, vector<8x286xbf16>, vector<8x286xbf16>, vector<8x286xbf16> -> vector<72x286xbf16>
    %c0_27 = arith.constant 0 : index
    %c0_28 = arith.constant 0 : index
    %40 = vector.load %arg6[%c0_27, %c0_28] : memref<8x72xbf16, #tpu.memory_space<vmem>>, vector<8x72xbf16>
    %cst_29 = arith.constant dense<0.000000e+00> : vector<8x286xf32>
    %41 = tpu.matmul %40, %20, %cst_29 {dimension_numbers = #tpu.dot_dimension_numbers<[1], [0], [0], [1], [0, 0, 1, 1], [], []>} : vector<8x72xbf16>, vector<72x286xbf16>, vector<8x286xf32> -> vector<8x286xf32>
    %c0_30 = arith.constant 0 : index
    %c0_31 = arith.constant 0 : index
    %42 = vector.load %arg7[%c0_30, %c0_31] : memref<8x72xbf16, #tpu.memory_space<vmem>>, vector<8x72xbf16>
    %cst_32 = arith.constant dense<0.000000e+00> : vector<8x286xf32>
    %43 = tpu.matmul %42, %39, %cst_32 {dimension_numbers = #tpu.dot_dimension_numbers<[1], [0], [0], [1], [0, 0, 1, 1], [], []>} : vector<8x72xbf16>, vector<72x286xbf16>, vector<8x286xf32> -> vector<8x286xf32>
    %44 = arith.addf %41, %43 : vector<8x286xf32>
    %c0_33 = arith.constant 0 : index
    %c0_34 = arith.constant 0 : index
    %45 = vector.load %arg8[%c0_33, %c0_34] : memref<8x1xf32, #tpu.memory_space<vmem>>, vector<8x1xf32>
    %46 = vector.broadcast %45 : vector<8x1xf32> to vector<8x286xf32>
    %47 = arith.addf %44, %46 : vector<8x286xf32>
    %c0_35 = arith.constant 0 : index
    %c0_36 = arith.constant 0 : index
    %48 = vector.load %arg9[%c0_35, %c0_36] : memref<1x286xf32, #tpu.memory_space<vmem>>, vector<1x286xf32>
    %49 = vector.broadcast %48 : vector<1x286xf32> to vector<8x286xf32>
    %50 = arith.mulf %47, %49 : vector<8x286xf32>
    %cst_37 = arith.constant dense<0.000000e+00> : vector<8xf32>
    %51 = vector.multi_reduction <add>, %50, %cst_37 [1] : vector<8x286xf32> to vector<8xf32>
    %52 = vector.shape_cast %51 : vector<8xf32> to vector<8x1xf32>
    %cst_38 = arith.constant 3.906250e-03 : f32
    %53 = vector.broadcast %cst_38 : f32 to vector<8x1xf32>
    %54 = arith.mulf %52, %53 : vector<8x1xf32>
    %55 = vector.broadcast %54 : vector<8x1xf32> to vector<8x286xf32>
    %56 = arith.subf %47, %55 : vector<8x286xf32>
    %57 = vector.broadcast %48 : vector<1x286xf32> to vector<8x286xf32>
    %58 = arith.mulf %56, %57 : vector<8x286xf32>
    %59 = arith.mulf %58, %58 : vector<8x286xf32>
    %cst_39 = arith.constant dense<0.000000e+00> : vector<8xf32>
    %60 = vector.multi_reduction <add>, %59, %cst_39 [1] : vector<8x286xf32> to vector<8xf32>
    %61 = vector.shape_cast %60 : vector<8xf32> to vector<8x1xf32>
    %cst_40 = arith.constant 3.906250e-03 : f32
    %62 = vector.broadcast %cst_40 : f32 to vector<8x1xf32>
    %63 = arith.mulf %61, %62 : vector<8x1xf32>
    %cst_41 = arith.constant 9.99999974E-6 : f32
    %64 = vector.broadcast %cst_41 : f32 to vector<8x1xf32>
    %65 = arith.addf %63, %64 : vector<8x1xf32>
    %66 = math.rsqrt %65 : vector<8x1xf32>
    %67 = vector.broadcast %66 : vector<8x1xf32> to vector<8x286xf32>
    %68 = arith.mulf %58, %67 : vector<8x286xf32>
    %cst_42 = arith.constant 0.000000e+00 : f32
    %69 = vector.broadcast %cst_42 : f32 to vector<8x286xf32>
    %70 = arith.cmpf oge, %68, %69 : vector<8x286xf32>
    %cst_43 = arith.constant 2.000000e-01 : f32
    %71 = vector.broadcast %cst_43 : f32 to vector<8x286xf32>
    %72 = arith.mulf %71, %68 : vector<8x286xf32>
    %73 = arith.select %70, %68, %72 : vector<8x286xi1>, vector<8x286xf32>
    %cst_44 = arith.constant 0.000000e+00 : bf16
    %74 = vector.broadcast %cst_44 : bf16 to vector<8x19xbf16>
    %c0_45 = arith.constant 0 : index
    %c0_46 = arith.constant 0 : index
    %c0_47 = arith.constant 0 : index
    %75 = vector.load %arg10[%c0_45, %c0_46, %c0_47] : memref<1x8x324xbf16, #tpu.memory_space<vmem>>, vector<1x8x19xbf16>
    %76 = vector.shape_cast %75 : vector<1x8x19xbf16> to vector<8x19xbf16>
    %77 = vector.shape_cast %74 : vector<8x19xbf16> to vector<1x8x19xbf16>
    tpu.vector_store %arg10[%c0_45, %c0_46, %c0_47], %77 {strides = array<i32>} : memref<1x8x324xbf16, #tpu.memory_space<vmem>>, vector<1x8x19xbf16>,
    %78 = arith.truncf %73 : vector<8x286xf32> to vector<8x286xbf16>
    %c0_48 = arith.constant 0 : index
    %c0_49 = arith.constant 0 : index
    %c19_50 = arith.constant 19 : index
    %79 = vector.load %arg10[%c0_48, %c0_49, %c19_50] : memref<1x8x324xbf16, #tpu.memory_space<vmem>>, vector<1x8x286xbf16>
    %80 = vector.shape_cast %79 : vector<1x8x286xbf16> to vector<8x286xbf16>
    %81 = vector.shape_cast %78 : vector<8x286xbf16> to vector<1x8x286xbf16>
    tpu.vector_store %arg10[%c0_48, %c0_49, %c19_50], %81 {strides = array<i32>} : memref<1x8x324xbf16, #tpu.memory_space<vmem>>, vector<1x8x286xbf16>,
    %c0_51 = arith.constant 0 : index
    %c0_52 = arith.constant 0 : index
    %c305 = arith.constant 305 : index
    %82 = vector.load %arg10[%c0_51, %c0_52, %c305] : memref<1x8x324xbf16, #tpu.memory_space<vmem>>, vector<1x8x19xbf16>
    %83 = vector.shape_cast %82 : vector<1x8x19xbf16> to vector<8x19xbf16>
    %84 = vector.shape_cast %74 : vector<8x19xbf16> to vector<1x8x19xbf16>
    tpu.vector_store %arg10[%c0_51, %c0_52, %c305], %84 {strides = array<i32>} : memref<1x8x324xbf16, #tpu.memory_space<vmem>>, vector<1x8x19xbf16>,
    return
  }
  func.func @transform_0(%arg0: i32) -> (i32, i32, i32) {
    %c0_i32 = arith.constant 0 : i32
    %c0_i32_0 = arith.constant 0 : i32
    %c0_i32_1 = arith.constant 0 : i32
    return %arg0, %c0_i32, %c0_i32_0 : i32, i32, i32
  }
  func.func @transform_1(%arg0: i32) -> (i32, i32, i32) {
    %c0_i32 = arith.constant 0 : i32
    %c0_i32_0 = arith.constant 0 : i32
    %c0_i32_1 = arith.constant 0 : i32
    return %arg0, %c0_i32, %c0_i32_0 : i32, i32, i32
  }
  func.func @transform_2(%arg0: i32) -> (i32, i32) {
    %c0_i32 = arith.constant 0 : i32
    %c0_i32_0 = arith.constant 0 : i32
    %c0_i32_1 = arith.constant 0 : i32
    return %c0_i32, %c0_i32_0 : i32, i32
  }
  func.func @transform_3(%arg0: i32) -> (i32, i32) {
    %c0_i32 = arith.constant 0 : i32
    %c0_i32_0 = arith.constant 0 : i32
    %c0_i32_1 = arith.constant 0 : i32
    return %c0_i32, %c0_i32_0 : i32, i32
  }
  func.func @transform_4(%arg0: i32) -> (i32, i32) {
    %c0_i32 = arith.constant 0 : i32
    %c0_i32_0 = arith.constant 0 : i32
    %c0_i32_1 = arith.constant 0 : i32
    return %c0_i32, %c0_i32_0 : i32, i32
  }
  func.func @transform_5(%arg0: i32) -> (i32, i32) {
    %c0_i32 = arith.constant 0 : i32
    %c0_i32_0 = arith.constant 0 : i32
    %c0_i32_1 = arith.constant 0 : i32
    return %c0_i32, %c0_i32_0 : i32, i32
  }
  func.func @transform_6(%arg0: i32) -> (i32, i32) {
    %c0_i32 = arith.constant 0 : i32
    %c0_i32_0 = arith.constant 0 : i32
    %c0_i32_1 = arith.constant 0 : i32
    return %c0_i32, %c0_i32_0 : i32, i32
  }
  func.func @transform_7(%arg0: i32) -> (i32, i32) {
    %c0_i32 = arith.constant 0 : i32
    %c0_i32_0 = arith.constant 0 : i32
    %c0_i32_1 = arith.constant 0 : i32
    return %c0_i32, %c0_i32_0 : i32, i32
  }
  func.func @transform_8(%arg0: i32) -> (i32, i32) {
    %c0_i32 = arith.constant 0 : i32
    %c0_i32_0 = arith.constant 0 : i32
    %c0_i32_1 = arith.constant 0 : i32
    return %c0_i32, %c0_i32_0 : i32, i32
  }
  func.func @transform_9(%arg0: i32) -> (i32, i32, i32) {
    %c0_i32 = arith.constant 0 : i32
    %c0_i32_0 = arith.constant 0 : i32
    %c0_i32_1 = arith.constant 0 : i32
    return %arg0, %c0_i32, %c0_i32_0 : i32, i32, i32
  }
}

</mosaic_0001>

<llo_original>
// kernel: unet_forward.6
$region0: #{unet_forward.6}
  #allocation0 [shape = 'u32[]', space=smem, size = 0x4, offset = 0x4, fixed_abs, tag = 'smem constant byte address 0x4 - core index']
  #allocation1 [shape = 'u32[144,128]{1,0:T(1,128)}', space=vmem, size = 0x12000, scoped, tag = 'internal scratch']
  %s0 = inlined_call_operand.vmem [shape: bf16[2,2,324], index: 0, kind: input, shape index: {}]
  %s1 = inlined_call_operand.vmem [shape: bf16[8,18], index: 1, kind: input, shape index: {}]
  %s2 = inlined_call_operand.vmem [shape: f32[8,1], index: 2, kind: input, shape index: {}]
  %s3 = inlined_call_operand.vmem [shape: f32[1,286], index: 3, kind: input, shape index: {}]
  %s4 = inlined_call_operand.vmem [shape: bf16[2,8,324], index: 4, kind: output, shape index: {}]
  %s5 = sld [smem:[#allocation0]]
  $region49: #{unet_forward.6} parent=0
    _
  %s7 = ssub.s32 1, %s5
  %s8 = scalar_select 0, %s7, %s5
  loop: start=0, step=1, limit=4
  $region2: #{unet_forward.6} parent=0 // loop_pre_header
    _
  $region3: #{unet_forward.6} parent=0 // loop_header
    %s10 = sphi 0, %s14
    %p11 = scmp.ge.s32.totalorder %s10, 4
    %s20 = sphi 0, %s22
    %s23 = sphi 0, %s20
    %s24 = sphi 0, %s23
    %s40 = sphi 0, %s24
    %s44 = sphi 0, %s44
    %s46 = sphi 0, %s44
    %s47 = sphi 0, %s46
    %s61 = sphi 0, %s47
    %s65 = sphi 0, %s65
    %s67 = sphi 0, %s65
    %s68 = sphi 0, %s67
    %s82 = sphi 0, %s68
    %s86 = sphi 0, %s86
    %s88 = sphi 0, %s86
    %s89 = sphi 0, %s88
    %s103 = sphi 0, %s89
    %s109 = sphi 0, %s111
    %s112 = sphi 0, %s109
    %s113 = sphi 0, %s112
    %s129 = sphi 0, %s113
  $region4: #{unet_forward.6} parent=0 // loop_header_branch
    %13 = sbr.rel (%p11) target = $region8
  $region5: #{unet_forward.6} parent=0 // loop_body
    %s15 = ssub.s32 %s10, 1
    %s16 = ssub.s32 %s10, 2
    %s17 = sadd.s32 %s10, 1
    %s18 = ssub.s32 %s10, %s17
    %p19 = scmp.eq.s32.totalorder %s18, 0
    %s21 = sadd.s32 %s20, 1
    %s22 = scalar_select %p19, %s20, %s21
    %p25 = pneg %p19
    %p26 = scmp.eq.s32.totalorder %s10, 1
    %p27 = por %p25, %p26
    %p28 = scmp.ne.s32.totalorder %s20, %s23
    %p29 = scmp.eq.s32.totalorder %s10, 0
    %p30 = por %p28, %p29
    %p31 = scmp.ne.s32.totalorder %s20, %s23
    %p32 = scmp.eq.s32.totalorder %s15, 1
    %p33 = por %p31, %p32
    %p34 = scmp.ne.s32.totalorder %s23, %s24
    %p35 = scmp.eq.s32.totalorder %s15, 0
    %p36 = por %p34, %p35
    %p37 = scmp.ne.s32.totalorder %s23, %s24
    %p38 = scmp.eq.s32.totalorder %s16, 1
    %p39 = por %p37, %p38
    %p41 = scmp.ne.s32.totalorder %s24, %s40
    %p42 = scmp.eq.s32.totalorder %s16, 0
    %p43 = por %p41, %p42
    %s45 = sadd.s32 %s44, 1
    %p48 = scmp.eq.s32.totalorder %s10, 1
    %p49 = scmp.ne.s32.totalorder %s44, %s46
    %p50 = scmp.eq.s32.totalorder %s10, 0
    %p51 = por %p49, %p50
    %p52 = scmp.ne.s32.totalorder %s44, %s46
    %p53 = scmp.eq.s32.totalorder %s15, 1
    %p54 = por %p52, %p53
    %p55 = scmp.ne.s32.totalorder %s46, %s47
    %p56 = scmp.eq.s32.totalorder %s15, 0
    %p57 = por %p55, %p56
    %p58 = scmp.ne.s32.totalorder %s46, %s47
    %p59 = scmp.eq.s32.totalorder %s16, 1
    %p60 = por %p58, %p59
    %p62 = scmp.ne.s32.totalorder %s47, %s61
    %p63 = scmp.eq.s32.totalorder %s16, 0
    %p64 = por %p62, %p63
    %s66 = sadd.s32 %s65, 1
    %p69 = scmp.eq.s32.totalorder %s10, 1
    %p70 = scmp.ne.s32.totalorder %s65, %s67
    %p71 = scmp.eq.s32.totalorder %s10, 0
    %p72 = por %p70, %p71
    %p73 = scmp.ne.s32.totalorder %s65, %s67
    %p74 = scmp.eq.s32.totalorder %s15, 1
    %p75 = por %p73, %p74
    %p76 = scmp.ne.s32.totalorder %s67, %s68
    %p77 = scmp.eq.s32.totalorder %s15, 0
    %p78 = por %p76, %p77
    %p79 = scmp.ne.s32.totalorder %s67, %s68
    %p80 = scmp.eq.s32.totalorder %s16, 1
    %p81 = por %p79, %p80
    %p83 = scmp.ne.s32.totalorder %s68, %s82
    %p84 = scmp.eq.s32.totalorder %s16, 0
    %p85 = por %p83, %p84
    %s87 = sadd.s32 %s86, 1
    %p90 = scmp.eq.s32.totalorder %s10, 1
    %p91 = scmp.ne.s32.totalorder %s86, %s88
    %p92 = scmp.eq.s32.totalorder %s10, 0
    %p93 = por %p91, %p92
    %p94 = scmp.ne.s32.totalorder %s86, %s88
    %p95 = scmp.eq.s32.totalorder %s15, 1
    %p96 = por %p94, %p95
    %p97 = scmp.ne.s32.totalorder %s88, %s89
    %p98 = scmp.eq.s32.totalorder %s15, 0
    %p99 = por %p97, %p98
    %p100 = scmp.ne.s32.totalorder %s88, %s89
    %p101 = scmp.eq.s32.totalorder %s16, 1
    %p102 = por %p100, %p101
    %p104 = scmp.ne.s32.totalorder %s89, %s103
    %p105 = scmp.eq.s32.totalorder %s16, 0
    %p106 = por %p104, %p105
    %s107 = ssub.s32 %s10, %s17
    %p108 = scmp.eq.s32.totalorder %s107, 0
    %s110 = sadd.s32 %s109, 1
    %s111 = scalar_select %p108, %s109, %s110
    %p114 = pneg %p108
    %p115 = scmp.eq.s32.totalorder %s10, 1
    %p116 = por %p114, %p115
    %p117 = scmp.ne.s32.totalorder %s109, %s112
    %p118 = scmp.eq.s32.totalorder %s10, 0
    %p119 = por %p117, %p118
    %p120 = scmp.ne.s32.totalorder %s109, %s112
    %p121 = scmp.eq.s32.totalorder %s15, 1
    %p122 = por %p120, %p121
    %p123 = scmp.ne.s32.totalorder %s112, %s113
    %p124 = scmp.eq.s32.totalorder %s15, 0
    %p125 = por %p123, %p124
    %p126 = scmp.ne.s32.totalorder %s112, %s113
    %p127 = scmp.eq.s32.totalorder %s16, 1
    %p128 = por %p126, %p127
    %p130 = scmp.ne.s32.totalorder %s113, %s129
    %p131 = scmp.eq.s32.totalorder %s16, 0
    %p132 = por %p130, %p131
    %p133 = scmp.le.s32.totalorder 1, %s10
    %p134 = scmp.lt.s32.totalorder %s10, 3
    %p135 = pnand %p133, %p134
    %p136 = pneg %p135
    // Predicated region
    $region9: #{unet_forward.6} parent=5 // pred_check
      _
    $region10: #{unet_forward.6} parent=5 // pred_check_branch
      %138 = sbr.rel (%p135) target = $region12
    $region11: #{unet_forward.6} parent=5 // pred_region
      %s139 = ssub.s32 %s10, 1
      // Predicated region
      $region13: #{unet_forward.6} parent=11 // pred_check
        %p140 = pneg %p57
      $region14: #{unet_forward.6} parent=11 // pred_check_branch
        %142 = sbr.rel (%p140) target = $region16
      $region15: #{unet_forward.6} parent=11 // pred_region
        _
      $region16: #{unet_forward.6} parent=11 // pred_fallthru
        _
      // Predicated region
      $region17: #{unet_forward.6} parent=11 // pred_check
        %p143 = pneg %p78
      $region18: #{unet_forward.6} parent=11 // pred_check_branch
        %145 = sbr.rel (%p143) target = $region20
      $region19: #{unet_forward.6} parent=11 // pred_region
        _
      $region20: #{unet_forward.6} parent=11 // pred_fallthru
        _
      // Predicated region
      $region21: #{unet_forward.6} parent=11 // pred_check
        %p146 = pneg %p99
      $region22: #{unet_forward.6} parent=11 // pred_check_branch
        %148 = sbr.rel (%p146) target = $region24
      $region23: #{unet_forward.6} parent=11 // pred_region
        _
      $region24: #{unet_forward.6} parent=11 // pred_fallthru
        _
    $region12: #{unet_forward.6} parent=5 // pred_fallthru
      _
    %p149 = scmp.lt.s32.totalorder %s10, 2
    // Predicated region
    $region25: #{unet_forward.6} parent=5 // pred_check
      %p150 = pneg %p149
    $region26: #{unet_forward.6} parent=5 // pred_check_branch
      %152 = sbr.rel (%p150) target = $region28
    $region27: #{unet_forward.6} parent=5 // pred_region
      // Predicated region
      $region29: #{unet_forward.6} parent=27 // pred_check
        %p153 = pneg %p30
      $region30: #{unet_forward.6} parent=27 // pred_check_branch
        %155 = sbr.rel (%p153) target = $region32
      $region31: #{unet_forward.6} parent=27 // pred_region
        %p156 = scmp.lt.s32.totalorder %s10, 1
        %s157 = scalar_select %p156, %s10, 1
        %s158 = smul.addr %s157, 3
        %s159 = scalar_lea.vmem %s0, %s158
      $region32: #{unet_forward.6} parent=27 // pred_fallthru
        _
    $region28: #{unet_forward.6} parent=5 // pred_fallthru
      _
    %p160 = scmp.le.s32.totalorder 1, %s10
    %p161 = scmp.lt.s32.totalorder %s10, 3
    %p162 = pnand %p160, %p161
    %p163 = pneg %p162
    // Predicated region
    $region33: #{unet_forward.6} parent=5 // pred_check
      _
    $region34: #{unet_forward.6} parent=5 // pred_check_branch
      %165 = sbr.rel (%p162) target = $region36
    $region35: #{unet_forward.6} parent=5 // pred_region
      %s166 = ssub.s32 %s10, 1
      %p167 = scmp.lt.s32.totalorder %s15, 1
      %s168 = scalar_select %p167, %s15, 1
      %s169 = smul.addr %s168, 3
      %s170 = scalar_lea.vmem %s0, %s169
      %p171 = pneg %p36
      %p172 = pneg %p33
      %p173 = pneg %p57
      %p174 = pneg %p54
      %p175 = pneg %p78
      %p176 = pneg %p75
      %p177 = pneg %p99
      %p178 = pneg %p96
      %p179 = pneg %p125
      %p180 = pneg %p122
      %p181 = scmp.lt.s32.totalorder %s15, 1
      %s182 = scalar_select %p181, %s15, 1
      %s183 = smul.addr %s182, 3
      %s184 = smul.addr %s183, 4
      %s185 = scalar_lea.vmem %s4, %s184
      %p186 = scmp.lt.s32.totalorder %s15, 1
      %s187 = scalar_select %p186, %s15, 1
      %s188 = smul.addr %s187, 3
      %s189 = scalar_lea.vmem %s0, %s188
      %p190 = scmp.lt.s32.totalorder %s15, 1
      %s191 = scalar_select %p190, %s15, 1
      %s192 = smul.addr %s191, 3
      %s193 = smul.addr %s192, 4
      %s194 = scalar_lea.vmem %s4, %s193
      %v196 = vld [vmem:[%s189] sm:$0x7]
      %v199 = vunpack.c.l.s4 1966171168
      %v200 = vunpack.c.0.s8 %v199
      %v201 = vlaneseq
      %v202 = vshrl.u32 %v201, 7
      %v203 = vsub.s32 %v200, %v202
      %v204 = vrot.slane %v196, %v203
      %v205 = vcombine.high %v204, %v204
      %v207 = vunpack.c.l.s4 1966171168
      %v208 = vunpack.c.0.s8 %v207
      %v209 = vlaneseq
      %v210 = vshrl.u32 %v209, 7
      %v211 = vsub.s32 %v208, %v210
      %v212 = vrot.slane %v204, %v211
      %v214 = vunpack.c.l.s4 1966171168
      %v215 = vunpack.c.0.s8 %v214
      %v216 = vlaneseq
      %v217 = vshrl.u32 %v216, 7
      %v218 = vsub.s32 %v215, %v217
      %v219 = vrot.slane %v205, %v218
      %v220 = vcombine.high %v212, %v212
      %v221 = vcombine.low %v196, %v196
      %v223 = vunpack.c.l.s4 1966171168
      %v224 = vunpack.c.0.s8 %v223
      %v225 = vlaneseq
      %v226 = vshrl.u32 %v225, 7
      %v227 = vsub.s32 %v224, %v226
      %v228 = vrot.slane %v221, %v227
      %v229 = vcombine.high %v228, %v228
      %v231 = vunpack.c.l.s4 1966171168
      %v232 = vunpack.c.0.s8 %v231
      %v233 = vlaneseq
      %v234 = vshrl.u32 %v233, 7
      %v235 = vsub.s32 %v232, %v234
      %v236 = vrot.slane %v228, %v235
      %v238 = vunpack.c.l.s4 1966171168
      %v239 = vunpack.c.0.s8 %v238
      %v240 = vlaneseq
      %v241 = vshrl.u32 %v240, 7
      %v242 = vsub.s32 %v239, %v241
      %v243 = vrot.slane %v229, %v242
      %v244 = vcombine.high %v236, %v236
      %245 = vrot.lane.b32.xlu0 %v236, 127
      %v246 = vpop.permute.xlu0 %245
      %247 = vrot.lane.b32.xlu0 %v243, 127
      %v248 = vpop.permute.xlu0 %247
      %249 = vrot.lane.b32.xlu0 %v244, 127
      %v250 = vpop.permute.xlu0 %249
      %vm251 = vcmask 1039360
      %v252 = vsel %vm251, %v246, %v248
      %v253 = vsel %vm251, %v248, %v250
      %v254 = vcombine.low %v204, %v204
      %v256 = vunpack.c.l.s4 1966171168
      %v257 = vunpack.c.0.s8 %v256
      %v258 = vlaneseq
      %v259 = vshrl.u32 %v258, 7
      %v260 = vsub.s32 %v257, %v259
      %v261 = vrot.slane %v254, %v260
      %v262 = vcombine.high %v261, %v261
      %263 = vrot.lane.b32.xlu0 %v261, 126
      %v264 = vpop.permute.xlu0 %263
      %265 = vrot.lane.b32.xlu0 %v212, 126
      %v266 = vpop.permute.xlu0 %265
      %267 = vrot.lane.b32.xlu0 %v262, 126
      %v268 = vpop.permute.xlu0 %267
      %vm269 = vcmask 1031168
      %v270 = vsel %vm269, %v264, %v266
      %v271 = vsel %vm269, %v266, %v268
      %v272 = vcombine.low %v228, %v228
      %v274 = vunpack.c.l.s4 1966171168
      %v275 = vunpack.c.0.s8 %v274
      %v276 = vlaneseq
      %v277 = vshrl.u32 %v276, 7
      %v278 = vsub.s32 %v275, %v277
      %v279 = vrot.slane %v272, %v278
      %v280 = vcombine.high %v279, %v279
      %281 = vrot.lane.b32.xlu0 %v279, 110
      %v282 = vpop.permute.xlu0 %281
      %283 = vrot.lane.b32.xlu0 %v236, 110
      %v284 = vpop.permute.xlu0 %283
      %285 = vrot.lane.b32.xlu0 %v280, 110
      %v286 = vpop.permute.xlu0 %285
      %vm287 = vcmask 900096
      %v288 = vsel %vm287, %v282, %v284
      %v289 = vsel %vm287, %v284, %v286
      %v290 = vcombine.low %v212, %v212
      %v291 = vcombine.low %v219, %v219
      %292 = vrot.lane.b32.xlu0 %v290, 109
      %v293 = vpop.permute.xlu0 %292
      %294 = vrot.lane.b32.xlu0 %v291, 109
      %v295 = vpop.permute.xlu0 %294
      %296 = vrot.lane.b32.xlu0 %v212, 109
      %v297 = vpop.permute.xlu0 %296
      %vm298 = vcmask 891904
      %v299 = vsel %vm298, %v293, %v295
      %v300 = vsel %vm298, %v295, %v297
      %v301 = vcombine.low %v236, %v236
      %v302 = vcombine.low %v243, %v243
      %303 = vrot.lane.b32.xlu0 %v301, 108
      %v304 = vpop.permute.xlu0 %303
      %305 = vrot.lane.b32.xlu0 %v302, 108
      %v306 = vpop.permute.xlu0 %305
      %307 = vrot.lane.b32.xlu0 %v236, 108
      %v308 = vpop.permute.xlu0 %307
      %vm309 = vcmask 883712
      %v310 = vsel %vm309, %v304, %v306
      %v311 = vsel %vm309, %v306, %v308
      %v312 = vcombine.low %v261, %v261
      %313 = vrot.lane.b32.xlu0 %v312, 92
      %v314 = vpop.permute.xlu0 %313
      %315 = vrot.lane.b32.xlu0 %v290, 92
      %v316 = vpop.permute.xlu0 %315
      %317 = vrot.lane.b32.xlu0 %v261, 92
      %v318 = vpop.permute.xlu0 %317
      %vm319 = vcmask 752640
      %v320 = vsel %vm319, %v314, %v316
      %v321 = vsel %vm319, %v316, %v318
      %v322 = vcombine.low %v279, %v279
      %323 = vrot.lane.b32.xlu0 %v322, 91
      %v324 = vpop.permute.xlu0 %323
      %325 = vrot.lane.b32.xlu0 %v301, 91
      %v326 = vpop.permute.xlu0 %325
      %327 = vrot.lane.b32.xlu0 %v279, 91
      %v328 = vpop.permute.xlu0 %327
      %vm329 = vcmask 744448
      %v330 = vsel %vm329, %v324, %v326
      %v331 = vsel %vm329, %v326, %v328
      %332 = vrot.lane.b32.xlu0 %v212, 90
      %v333 = vpop.permute.xlu0 %332
      %334 = vrot.lane.b32.xlu0 %v219, 90
      %v335 = vpop.permute.xlu0 %334
      %336 = vrot.lane.b32.xlu0 %v220, 90
      %v337 = vpop.permute.xlu0 %336
      %vm338 = vcmask 736256
      %v339 = vsel %vm338, %v333, %v335
      %v340 = vsel %vm338, %v335, %v337
      %vm341 = vcmask 1040384
      %v344 = vsel %vm341, %v212, %v252
      %v347 = vsel %vm341, %v219, %v253
      %v350 = vsel %vm341, %v220, %v250
      %vm351 = vcmask 1041408
      %v353 = vsel %vm351, %v344, %v270
      %v355 = vsel %vm351, %v347, %v271
      %v357 = vsel %vm351, %v350, %v268
      %vm358 = vcmask 1042432
      %v360 = vsel %vm358, %v353, %v288
      %v362 = vsel %vm358, %v355, %v289
      %v364 = vsel %vm358, %v357, %v286
      %vm365 = vcmask 1043456
      %v367 = vsel %vm365, %v360, %v299
      %v369 = vsel %vm365, %v362, %v300
      %v371 = vsel %vm365, %v364, %v297
      %vm372 = vcmask 1044480
      %v374 = vsel %vm372, %v367, %v310
      %v376 = vsel %vm372, %v369, %v311
      %v378 = vsel %vm372, %v371, %v308
      %vm379 = vcmask 1045504
      %v381 = vsel %vm379, %v374, %v320
      %v383 = vsel %vm379, %v376, %v321
      %v385 = vsel %vm379, %v378, %v318
      %vm386 = vcmask 1046528
      %v388 = vsel %vm386, %v381, %v330
      %v391 = vsel %vm386, %v383, %v331
      %v394 = vsel %vm386, %v385, %v328
      %v396 = vld [vmem:[%s1] sm:$0xf]
      %v397 = vld [vmem:[%s2] sm:$0xff]
      %399 = vset.pattern.permute.xlu0 0
      %400 = vperm.xlu0 %399, %v397
      %v401 = vpop.permute.xlu0 %400
      %vm403 = vcmask 146432
      %v405 = vsel %vm403, %v396, 0
      %v408 = vsel %vm341, %v339, 0
      %v411 = vsel %vm341, %v340, 0
      %v414 = vsel %vm341, %v337, 0
      %416 = vmatprep.subr.bf16.mxu0 0
      %417 = vmatpush1.bf16.msra.mxu0 0
      %418 = vmatprep.subr.bf16.mxu0 0
      %419 = vmatpush1.bf16.msra.mxu0 0
      %420 = vmatprep.subr.bf16.mxu0 0
      %421 = vmatpush1.bf16.msra.mxu0 0
      %422 = vmatprep.subr.bf16.mxu0 0
      %423 = vmatpush1.bf16.msra.mxu0 0
      %424 = vmatprep.subr.bf16.mxu0 0
      %425 = vmatpush1.bf16.msra.mxu0 0
      %426 = vmatprep.subr.bf16.mxu0 0
      %427 = vmatpush1.bf16.msra.mxu0 0
      %428 = vmatprep.subr.bf16.mxu0 %v411
      %429 = vmatpush1.bf16.msra.mxu0 %v408
      %430 = vmatprep.subr.bf16.mxu0 %v391
      %431 = vmatpush1.bf16.msra.mxu0 %v388
      %432 = vmatprep.subr.bf16.mxu0 0
      %433 = vmatpush2.bf16.msra.mxu0 0
      %434 = vmatprep.subr.bf16.mxu0 0
      %435 = vmatpush2.bf16.msra.mxu0 0
      %436 = vmatprep.subr.bf16.mxu0 0
      %437 = vmatpush2.bf16.msra.mxu0 0
      %438 = vmatprep.subr.bf16.mxu0 0
      %439 = vmatpush2.bf16.msra.mxu0 0
      %440 = vmatprep.subr.bf16.mxu0 0
      %441 = vmatpush2.bf16.msra.mxu0 0
      %442 = vmatprep.subr.bf16.mxu0 0
      %443 = vmatpush2.bf16.msra.mxu0 0
      %444 = vmatprep.subr.bf16.mxu0 0
      %445 = vmatpush2.bf16.msra.mxu0 0
      %446 = vmatprep.subr.bf16.mxu0 0
      %447 = vmatpush2.bf16.msra.mxu0 0
      %448 = vmatprep.mubr.bf16.mxu0 0
      %449 = vmatmul.mubr.bf16.gmra.mxu0 %v405
      %v450 = vpop.f32.mrf.mxu0
      %v451 = vadd.f32 %v401, %v450
      %v452 = vpop.f32.mrf.mxu0
      %v453 = vadd.f32 %v401, %v452
      %v454 = vpop.f32.mrf.mxu0
      %v455 = vpop.f32.mrf.mxu0
      %456 = vdwg.mxu0
      %457 = vmatprep.subr.bf16.mxu0 0
      %458 = vmatpush1.bf16.msra.mxu0 0
      %459 = vmatprep.subr.bf16.mxu0 0
      %460 = vmatpush1.bf16.msra.mxu0 0
      %461 = vmatprep.subr.bf16.mxu0 0
      %462 = vmatpush1.bf16.msra.mxu0 0
      %463 = vmatprep.subr.bf16.mxu0 0
      %464 = vmatpush1.bf16.msra.mxu0 0
      %465 = vmatprep.subr.bf16.mxu0 0
      %466 = vmatpush1.bf16.msra.mxu0 0
      %467 = vmatprep.subr.bf16.mxu0 0
      %468 = vmatpush1.bf16.msra.mxu0 0
      %469 = vmatprep.subr.bf16.mxu0 0
      %470 = vmatpush1.bf16.msra.mxu0 %v414
      %471 = vmatprep.subr.bf16.mxu0 0
      %472 = vmatpush1.bf16.msra.mxu0 %v394
      %473 = vmatprep.subr.bf16.mxu0 0
      %474 = vmatpush2.bf16.msra.mxu0 0
      %475 = vmatprep.subr.bf16.mxu0 0
      %476 = vmatpush2.bf16.msra.mxu0 0
      %477 = vmatprep.subr.bf16.mxu0 0
      %478 = vmatpush2.bf16.msra.mxu0 0
      %479 = vmatprep.subr.bf16.mxu0 0
      %480 = vmatpush2.bf16.msra.mxu0 0
      %481 = vmatprep.subr.bf16.mxu0 0
      %482 = vmatpush2.bf16.msra.mxu0 0
      %483 = vmatprep.subr.bf16.mxu0 0
      %484 = vmatpush2.bf16.msra.mxu0 0
      %485 = vmatprep.subr.bf16.mxu0 0
      %486 = vmatpush2.bf16.msra.mxu0 0
      %487 = vmatprep.subr.bf16.mxu0 0
      %488 = vmatpush2.bf16.msra.mxu0 0
      %489 = vmatprep.mubr.bf16.mxu0 0
      %490 = vmatmul.mubr.bf16.gmra.mxu0 %v405
      %v491 = vpop.f32.mrf.mxu0
      %v492 = vadd.f32 %v401, %v491
      %v493 = vpop.f32.mrf.mxu0
      %v494 = vpop.f32.mrf.mxu0
      %v495 = vpop.f32.mrf.mxu0
      %496 = vdwg.mxu0
      %v497 = vld [vmem:[%s3] sm:$0x7]
      %v499 = vlaneseq
      %v500 = vshrl.u32 %v499, 7
      %v501 = vsub.s32 0, %v500
      %v502 = vrot.slane %v497, %v501
      %v503 = vlaneseq
      %v504 = vshrl.u32 %v503, 7
      %v505 = vsub.s32 1, %v504
      %v506 = vrot.slane %v497, %v505
      %v507 = vlaneseq
      %v508 = vshrl.u32 %v507, 7
      %v509 = vsub.s32 2, %v508
      %v510 = vrot.slane %v497, %v509
      %v514 = vmul.f32 %v451, %v502
      %v515 = vmul.f32 %v453, %v506
      %v516 = vmul.f32 %v492, %v510
      %v517 = vadd.f32 %v514, %v515
      %vm518 = vcmask 244736
      %v519 = vsel %vm518, %v516, 0.0
      %v520 = vadd.f32 %v517, %v519
      %521 = vadd.xlane.f32.xlu0 %v520
      %v522 = vpop.xlane.xlu0 %521
      %v523 = vmul.f32 %v522, 0.00390625
      %v524 = vsub.f32 %v451, %v523
      %v525 = vsub.f32 %v453, %v523
      %v526 = vsub.f32 %v492, %v523
      %v527 = vmul.f32 %v524, %v502
      %v528 = vmul.f32 %v525, %v506
      %v529 = vmul.f32 %v526, %v510
      %v530 = vmul.f32 %v527, %v527
      %v531 = vmul.f32 %v528, %v528
      %v532 = vmul.f32 %v529, %v529
      %v533 = vadd.f32 %v530, %v531
      %v534 = vsel %vm518, %v532, 0.0
      %v535 = vadd.f32 %v533, %v534
      %536 = vadd.xlane.f32.xlu0 %v535
      %v537 = vpop.xlane.xlu0 %536
      %v538 = vmul.f32 %v537, 0.00390625
      %v539 = vadd.f32 %v538, 1e-05
      %v540 = vrsqrt.pop %v539
      %v541 = vmul.f32 %v527, %v540
      %v542 = vmul.f32 %v528, %v540
      %v543 = vmul.f32 %v529, %v540
      %vm544 = vcmp.ge.f32.partialorder %v541, 0.0
      %vm545 = vcmp.ge.f32.partialorder %v542, 0.0
      %vm546 = vcmp.ge.f32.partialorder %v543, 0.0
      %v547 = vmul.f32 %v541, 0.2
      %v548 = vmul.f32 %v542, 0.2
      %v549 = vmul.f32 %v543, 0.2
      %v550 = vsel %vm544, %v541, %v547
      %v551 = vsel %vm545, %v542, %v548
      %v552 = vsel %vm546, %v543, %v549
      %vm553 = vcmask 150528
      %554 = vst.msk [vmem:[%s194] sm:$0xf] %vm553, 0
      %v555 = vpack.c.bf16 %v550, %v550
      %v556 = vpack.c.bf16 %v551, %v551
      %v557 = vpack.c.bf16 %v552, %v552
      %v561 = vunpack.c.l.b16 %v555
      %v562 = vunpack.c.l.b16 %v556
      %v563 = vunpack.c.l.b16 %v557
      %v564 = vpack.c.b16 %v562, %v561
      %v565 = vpack.c.b16 %v563, %v563
      %566 = vrot.lane.b32.xlu0 %v564, 19
      %v567 = vpop.permute.xlu0 %566
      %568 = vrot.lane.b32.xlu0 %v565, 19
      %v569 = vpop.permute.xlu0 %568
      %v570 = vrot.slane %v567, 4
      %vm571 = vcmask 154624
      %v572 = vsel %vm571, %v570, %v567
      %v573 = vsel %vm571, %v570, %v569
      %vm576 = vcmask 1043608
      %vm577 = vcmask 1047556
      %vm578 = vmor %vm577, %vm576
      %579 = vst.msk [vmem:[%s194] sm:$0xff] %vm578, %v572
      %vm580 = vcmask 396288
      %581 = vst.msk [vmem:[%s194 + $0x8] sm:$0xf] %vm580, %v573
      %vm582 = vcmask 552328
      %583 = vst.msk [vmem:[%s194 + $0x8] sm:$0xf] %vm582, 0
      %p584 = scmp.lt.s32.totalorder %s15, 1
      %s585 = scalar_select %p584, %s15, 1
      %s586 = smul.addr %s585, 3
      %s587 = smul.addr %s586, 4
      %s588 = scalar_lea.vmem %s4, %s587
      // Predicated region
      $region37: #{unet_forward.6} parent=35 // pred_check
        %p589 = pneg %p122
      $region38: #{unet_forward.6} parent=35 // pred_check_branch
        %591 = sbr.rel (%p589) target = $region40
      $region39: #{unet_forward.6} parent=35 // pred_region
        _
      $region40: #{unet_forward.6} parent=35 // pred_fallthru
        _
    $region36: #{unet_forward.6} parent=5 // pred_fallthru
      _
    %p592 = scmp.le.s32.totalorder 2, %s10
    // Predicated region
    $region41: #{unet_forward.6} parent=5 // pred_check
      %p593 = pneg %p592
    $region42: #{unet_forward.6} parent=5 // pred_check_branch
      %595 = sbr.rel (%p593) target = $region44
    $region43: #{unet_forward.6} parent=5 // pred_region
      %s596 = ssub.s32 %s10, 2
      // Predicated region
      $region45: #{unet_forward.6} parent=43 // pred_check
        %p597 = pneg %p128
      $region46: #{unet_forward.6} parent=43 // pred_check_branch
        %599 = sbr.rel (%p597) target = $region48
      $region47: #{unet_forward.6} parent=43 // pred_region
        %p600 = scmp.lt.s32.totalorder %s16, 1
        %s601 = scalar_select %p600, %s16, 1
        %s602 = smul.addr %s601, 3
        %s603 = smul.addr %s602, 4
        %s604 = scalar_lea.vmem %s4, %s603
      $region48: #{unet_forward.6} parent=43 // pred_fallthru
        _
    $region44: #{unet_forward.6} parent=5 // pred_fallthru
      _
  $region6: #{unet_forward.6} parent=0 // loop_footer
    %s14 = sadd.s32 1, %s10
  $region7: #{unet_forward.6} parent=0 // loop_footer_branch
    %9 = sbr.rel target = $region3
  $region8: #{unet_forward.6} parent=0 // loop_exit
    _

// kernel: unet_forward.7
$region0: #{unet_forward.7}
  #allocation0 [shape = 'u32[]', space=smem, size = 0x4, offset = 0x4, fixed_abs, tag = 'smem constant byte address 0x4 - core index']
  #allocation1 [shape = 'u32[144,128]{1,0:T(1,128)}', space=vmem, size = 0x12000, scoped, tag = 'internal scratch']
  %s0 = inlined_call_operand.vmem [shape: bf16[2,8,100], index: 0, kind: input, shape index: {}]
  %s1 = inlined_call_operand.vmem [shape: bf16[16,72], index: 1, kind: input, shape index: {}]
  %s2 = inlined_call_operand.vmem [shape: f32[16,1], index: 2, kind: input, shape index: {}]
  %s3 = inlined_call_operand.vmem [shape: f32[1,78], index: 3, kind: input, shape index: {}]
  %s4 = inlined_call_operand.vmem [shape: bf16[2,16,100], index: 4, kind: output, shape index: {}]
  %s5 = sld [smem:[#allocation0]]
  $region49: #{unet_forward.7} parent=0
    _
  %s7 = ssub.s32 1, %s5
  %s8 = scalar_select 0, %s7, %s5
  loop: start=0, step=1, limit=4
  $region2: #{unet_forward.7} parent=0 // loop_pre_header
    _
  $region3: #{unet_forward.7} parent=0 // loop_header
    %s10 = sphi 0, %s14
    %p11 = scmp.ge.s32.totalorder %s10, 4
    %s20 = sphi 0, %s22
    %s23 = sphi 0, %s20
    %s24 = sphi 0, %s23
    %s40 = sphi 0, %s24
    %s44 = sphi 0, %s44
    %s46 = sphi 0, %s44
    %s47 = sphi 0, %s46
    %s61 = sphi 0, %s47
    %s65 = sphi 0, %s65
    %s67 = sphi 0, %s65
    %s68 = sphi 0, %s67
    %s82 = sphi 0, %s68
    %s86 = sphi 0, %s86
    %s88 = sphi 0, %s86
    %s89 = sphi 0, %s88
    %s103 = sphi 0, %s89
    %s109 = sphi 0, %s111
    %s112 = sphi 0, %s109
    %s113 = sphi 0, %s112
    %s129 = sphi 0, %s113
  $region4: #{unet_forward.7} parent=0 // loop_header_branch
    %13 = sbr.rel (%p11) target = $region8
  $region5: #{unet_forward.7} parent=0 // loop_body
    %s15 = ssub.s32 %s10, 1
    %s16 = ssub.s32 %s10, 2
    %s17 = sadd.s32 %s10, 1
    %s18 = ssub.s32 %s10, %s17
    %p19 = scmp.eq.s32.totalorder %s18, 0
    %s21 = sadd.s32 %s20, 1
    %s22 = scalar_select %p19, %s20, %s21
    %p25 = pneg %p19
    %p26 = scmp.eq.s32.totalorder %s10, 1
    %p27 = por %p25, %p26
    %p28 = scmp.ne.s32.totalorder %s20, %s23
    %p29 = scmp.eq.s32.totalorder %s10, 0
    %p30 = por %p28, %p29
    %p31 = scmp.ne.s32.totalorder %s20, %s23
    %p32 = scmp.eq.s32.totalorder %s15, 1
    %p33 = por %p31, %p32
    %p34 = scmp.ne.s32.totalorder %s23, %s24
    %p35 = scmp.eq.s32.totalorder %s15, 0
    %p36 = por %p34, %p35
    %p37 = scmp.ne.s32.totalorder %s23, %s24
    %p38 = scmp.eq.s32.totalorder %s16, 1
    %p39 = por %p37, %p38
    %p41 = scmp.ne.s32.totalorder %s24, %s40
    %p42 = scmp.eq.s32.totalorder %s16, 0
    %p43 = por %p41, %p42
    %s45 = sadd.s32 %s44, 1
    %p48 = scmp.eq.s32.totalorder %s10, 1
    %p49 = scmp.ne.s32.totalorder %s44, %s46
    %p50 = scmp.eq.s32.totalorder %s10, 0
    %p51 = por %p49, %p50
    %p52 = scmp.ne.s32.totalorder %s44, %s46
    %p53 = scmp.eq.s32.totalorder %s15, 1
    %p54 = por %p52, %p53
    %p55 = scmp.ne.s32.totalorder %s46, %s47
    %p56 = scmp.eq.s32.totalorder %s15, 0
    %p57 = por %p55, %p56
    %p58 = scmp.ne.s32.totalorder %s46, %s47
    %p59 = scmp.eq.s32.totalorder %s16, 1
    %p60 = por %p58, %p59
    %p62 = scmp.ne.s32.totalorder %s47, %s61
    %p63 = scmp.eq.s32.totalorder %s16, 0
    %p64 = por %p62, %p63
    %s66 = sadd.s32 %s65, 1
    %p69 = scmp.eq.s32.totalorder %s10, 1
    %p70 = scmp.ne.s32.totalorder %s65, %s67
    %p71 = scmp.eq.s32.totalorder %s10, 0
    %p72 = por %p70, %p71
    %p73 = scmp.ne.s32.totalorder %s65, %s67
    %p74 = scmp.eq.s32.totalorder %s15, 1
    %p75 = por %p73, %p74
    %p76 = scmp.ne.s32.totalorder %s67, %s68
    %p77 = scmp.eq.s32.totalorder %s15, 0
    %p78 = por %p76, %p77
    %p79 = scmp.ne.s32.totalorder %s67, %s68
    %p80 = scmp.eq.s32.totalorder %s16, 1
    %p81 = por %p79, %p80
    %p83 = scmp.ne.s32.totalorder %s68, %s82
    %p84 = scmp.eq.s32.totalorder %s16, 0
    %p85 = por %p83, %p84
    %s87 = sadd.s32 %s86, 1
    %p90 = scmp.eq.s32.totalorder %s10, 1
    %p91 = scmp.ne.s32.totalorder %s86, %s88
    %p92 = scmp.eq.s32.totalorder %s10, 0
    %p93 = por %p91, %p92
    %p94 = scmp.ne.s32.totalorder %s86, %s88
    %p95 = scmp.eq.s32.totalorder %s15, 1
    %p96 = por %p94, %p95
    %p97 = scmp.ne.s32.totalorder %s88, %s89
    %p98 = scmp.eq.s32.totalorder %s15, 0
    %p99 = por %p97, %p98
    %p100 = scmp.ne.s32.totalorder %s88, %s89
    %p101 = scmp.eq.s32.totalorder %s16, 1
    %p102 = por %p100, %p101
    %p104 = scmp.ne.s32.totalorder %s89, %s103
    %p105 = scmp.eq.s32.totalorder %s16, 0
    %p106 = por %p104, %p105
    %s107 = ssub.s32 %s10, %s17
    %p108 = scmp.eq.s32.totalorder %s107, 0
    %s110 = sadd.s32 %s109, 1
    %s111 = scalar_select %p108, %s109, %s110
    %p114 = pneg %p108
    %p115 = scmp.eq.s32.totalorder %s10, 1
    %p116 = por %p114, %p115
    %p117 = scmp.ne.s32.totalorder %s109, %s112
    %p118 = scmp.eq.s32.totalorder %s10, 0
    %p119 = por %p117, %p118
    %p120 = scmp.ne.s32.totalorder %s109, %s112
    %p121 = scmp.eq.s32.totalorder %s15, 1
    %p122 = por %p120, %p121
    %p123 = scmp.ne.s32.totalorder %s112, %s113
    %p124 = scmp.eq.s32.totalorder %s15, 0
    %p125 = por %p123, %p124
    %p126 = scmp.ne.s32.totalorder %s112, %s113
    %p127 = scmp.eq.s32.totalorder %s16, 1
    %p128 = por %p126, %p127
    %p130 = scmp.ne.s32.totalorder %s113, %s129
    %p131 = scmp.eq.s32.totalorder %s16, 0
    %p132 = por %p130, %p131
    %p133 = scmp.le.s32.totalorder 1, %s10
    %p134 = scmp.lt.s32.totalorder %s10, 3
    %p135 = pnand %p133, %p134
    %p136 = pneg %p135
    // Predicated region
    $region9: #{unet_forward.7} parent=5 // pred_check
      _
    $region10: #{unet_forward.7} parent=5 // pred_check_branch
      %138 = sbr.rel (%p135) target = $region12
    $region11: #{unet_forward.7} parent=5 // pred_region
      %s139 = ssub.s32 %s10, 1
      // Predicated region
      $region13: #{unet_forward.7} parent=11 // pred_check
        %p140 = pneg %p57
      $region14: #{unet_forward.7} parent=11 // pred_check_branch
        %142 = sbr.rel (%p140) target = $region16
      $region15: #{unet_forward.7} parent=11 // pred_region
        _
      $region16: #{unet_forward.7} parent=11 // pred_fallthru
        _
      // Predicated region
      $region17: #{unet_forward.7} parent=11 // pred_check
        %p143 = pneg %p78
      $region18: #{unet_forward.7} parent=11 // pred_check_branch
        %145 = sbr.rel (%p143) target = $region20
      $region19: #{unet_forward.7} parent=11 // pred_region
        _
      $region20: #{unet_forward.7} parent=11 // pred_fallthru
        _
      // Predicated region
      $region21: #{unet_forward.7} parent=11 // pred_check
        %p146 = pneg %p99
      $region22: #{unet_forward.7} parent=11 // pred_check_branch
        %148 = sbr.rel (%p146) target = $region24
      $region23: #{unet_forward.7} parent=11 // pred_region
        _
      $region24: #{unet_forward.7} parent=11 // pred_fallthru
        _
    $region12: #{unet_forward.7} parent=5 // pred_fallthru
      _
    %p149 = scmp.lt.s32.totalorder %s10, 2
    // Predicated region
    $region25: #{unet_forward.7} parent=5 // pred_check
      %p150 = pneg %p149
    $region26: #{unet_forward.7} parent=5 // pred_check_branch
      %152 = sbr.rel (%p150) target = $region28
    $region27: #{unet_forward.7} parent=5 // pred_region
      // Predicated region
      $region29: #{unet_forward.7} parent=27 // pred_check
        %p153 = pneg %p30
      $region30: #{unet_forward.7} parent=27 // pred_check_branch
        %155 = sbr.rel (%p153) target = $region32
      $region31: #{unet_forward.7} parent=27 // pred_region
        %p156 = scmp.lt.s32.totalorder %s10, 1
        %s157 = scalar_select %p156, %s10, 1
        %s158 = smul.addr %s157, 4
        %s159 = scalar_lea.vmem %s0, %s158
      $region32: #{unet_forward.7} parent=27 // pred_fallthru
        _
    $region28: #{unet_forward.7} parent=5 // pred_fallthru
      _
    %p160 = scmp.le.s32.totalorder 1, %s10
    %p161 = scmp.lt.s32.totalorder %s10, 3
    %p162 = pnand %p160, %p161
    %p163 = pneg %p162
    // Predicated region
    $region33: #{unet_forward.7} parent=5 // pred_check
      _
    $region34: #{unet_forward.7} parent=5 // pred_check_branch
      %165 = sbr.rel (%p162) target = $region36
    $region35: #{unet_forward.7} parent=5 // pred_region
      %s166 = ssub.s32 %s10, 1
      %p167 = scmp.lt.s32.totalorder %s15, 1
      %s168 = scalar_select %p167, %s15, 1
      %s169 = smul.addr %s168, 4
      %s170 = scalar_lea.vmem %s0, %s169
      %p171 = pneg %p36
      %p172 = pneg %p33
      %p173 = pneg %p57
      %p174 = pneg %p54
      %p175 = pneg %p78
      %p176 = pneg %p75
      %p177 = pneg %p99
      %p178 = pneg %p96
      %p179 = pneg %p125
      %p180 = pneg %p122
      %p181 = scmp.lt.s32.totalorder %s15, 1
      %s182 = scalar_select %p181, %s15, 1
      %s183 = smul.addr %s182, 2
      %s184 = smul.addr %s183, 4
      %s185 = scalar_lea.vmem %s4, %s184
      %p186 = scmp.lt.s32.totalorder %s15, 1
      %s187 = scalar_select %p186, %s15, 1
      %s188 = smul.addr %s187, 4
      %s189 = scalar_lea.vmem %s0, %s188
      %p190 = scmp.lt.s32.totalorder %s15, 1
      %s191 = scalar_select %p190, %s15, 1
      %s192 = smul.addr %s191, 2
      %s193 = smul.addr %s192, 4
      %s194 = scalar_lea.vmem %s4, %s193
      %v196 = vld [vmem:[%s189] sm:$0xf]
      %v198 = vunpack.c.l.b16 %v196
      %v199 = vpack.c.b16 %v198, %v198
      %200 = vrot.lane.b32.xlu0 %v199, 127
      %v201 = vpop.permute.xlu0 %200
      %202 = vrot.lane.b32.xlu0 %v199, 126
      %v203 = vpop.permute.xlu0 %202
      %204 = vrot.lane.b32.xlu0 %v199, 118
      %v205 = vpop.permute.xlu0 %204
      %206 = vrot.lane.b32.xlu0 %v199, 117
      %v207 = vpop.permute.xlu0 %206
      %208 = vrot.lane.b32.xlu0 %v199, 116
      %v209 = vpop.permute.xlu0 %208
      %210 = vrot.lane.b32.xlu0 %v199, 108
      %v211 = vpop.permute.xlu0 %210
      %212 = vrot.lane.b32.xlu0 %v199, 107
      %v213 = vpop.permute.xlu0 %212
      %214 = vrot.lane.b32.xlu0 %v199, 106
      %v215 = vpop.permute.xlu0 %214
      %vm216 = vcmask 1043456
      %v219 = vsel %vm216, %v196, %v201
      %v223 = vsel %vm216, %v203, %v205
      %v227 = vsel %vm216, %v207, %v209
      %v231 = vsel %vm216, %v211, %v213
      %v233 = vld [vmem:[%s1] sm:$0xf]
      %v234 = vld [vmem:[%s1 + $0x4] sm:$0xf]
      %v235 = vld [vmem:[%s2] sm:$0xff]
      %v236 = vld [vmem:[%s2 + $0x8] sm:$0xff]
      %238 = vset.pattern.permute.xlu0 0
      %239 = vperm.xlu0 %238, %v235
      %v240 = vpop.permute.xlu0 %239
      %243 = vset.pattern.permute.xlu0 0
      %244 = vperm.xlu0 %243, %v236
      %v245 = vpop.permute.xlu0 %244
      %v249 = vunpack.c.l.b16 %v233
      %v250 = vunpack.c.l.b16 %v234
      %v251 = vpack.c.b16 %v250, %v249
      %vm252 = vcmask 588800
      %v254 = vsel %vm252, %v251, 0
      %v257 = vsel %vm216, %v215, 0
      %259 = vmatprep.subr.bf16.mxu0 0
      %260 = vmatpush1.bf16.msra.mxu0 0
      %261 = vmatprep.subr.bf16.mxu0 0
      %262 = vmatpush1.bf16.msra.mxu0 0
      %263 = vmatprep.subr.bf16.mxu0 0
      %264 = vmatpush1.bf16.msra.mxu0 0
      %265 = vmatprep.subr.bf16.mxu0 0
      %266 = vmatpush1.bf16.msra.mxu0 %v257
      %267 = vmatprep.subr.bf16.mxu0 0
      %268 = vmatpush1.bf16.msra.mxu0 %v231
      %269 = vmatprep.subr.bf16.mxu0 0
      %270 = vmatpush1.bf16.msra.mxu0 %v227
      %271 = vmatprep.subr.bf16.mxu0 0
      %272 = vmatpush1.bf16.msra.mxu0 %v223
      %273 = vmatprep.subr.bf16.mxu0 0
      %274 = vmatpush1.bf16.msra.mxu0 %v219
      %275 = vmatprep.subr.bf16.mxu0 0
      %276 = vmatpush2.bf16.msra.mxu0 0
      %277 = vmatprep.subr.bf16.mxu0 0
      %278 = vmatpush2.bf16.msra.mxu0 0
      %279 = vmatprep.subr.bf16.mxu0 0
      %280 = vmatpush2.bf16.msra.mxu0 0
      %281 = vmatprep.subr.bf16.mxu0 0
      %282 = vmatpush2.bf16.msra.mxu0 0
      %283 = vmatprep.subr.bf16.mxu0 0
      %284 = vmatpush2.bf16.msra.mxu0 0
      %285 = vmatprep.subr.bf16.mxu0 0
      %286 = vmatpush2.bf16.msra.mxu0 0
      %287 = vmatprep.subr.bf16.mxu0 0
      %288 = vmatpush2.bf16.msra.mxu0 0
      %289 = vmatprep.subr.bf16.mxu0 0
      %290 = vmatpush2.bf16.msra.mxu0 0
      %291 = vmatprep.mubr.bf16.mxu0 0
      %292 = vmatmul.mubr.bf16.gmra.mxu0 %v254
      %v293 = vpop.f32.mrf.mxu0
      %v294 = vadd.f32 %v240, %v293
      %v295 = vpop.f32.mrf.mxu0
      %v296 = vpop.f32.mrf.mxu0
      %v297 = vadd.f32 %v245, %v296
      %v298 = vpop.f32.mrf.mxu0
      %299 = vdwg.mxu0
      %v300 = vld [vmem:[%s3] sm:$0x1]
      %v302 = vlaneseq
      %v303 = vshrl.u32 %v302, 7
      %v304 = vsub.s32 0, %v303
      %v305 = vrot.slane %v300, %v304
      %v307 = vmul.f32 %v294, %v305
      %v308 = vmul.f32 %v297, %v305
      %vm309 = vcmask 637952
      %v310 = vsel %vm309, %v307, 0.0
      %311 = vadd.xlane.f32.xlu0 %v310
      %v312 = vpop.xlane.xlu0 %311
      %v313 = vsel %vm309, %v308, 0.0
      %314 = vadd.xlane.f32.xlu0 %v313
      %v315 = vpop.xlane.xlu0 %314
      %v316 = vmul.f32 %v312, 0.015625
      %v317 = vmul.f32 %v315, 0.015625
      %v318 = vsub.f32 %v294, %v316
      %v319 = vsub.f32 %v297, %v317
      %v320 = vmul.f32 %v318, %v305
      %v321 = vmul.f32 %v319, %v305
      %v322 = vmul.f32 %v320, %v320
      %v323 = vmul.f32 %v321, %v321
      %v324 = vsel %vm309, %v322, 0.0
      %325 = vadd.xlane.f32.xlu0 %v324
      %v326 = vpop.xlane.xlu0 %325
      %v327 = vsel %vm309, %v323, 0.0
      %328 = vadd.xlane.f32.xlu0 %v327
      %v329 = vpop.xlane.xlu0 %328
      %v330 = vmul.f32 %v326, 0.015625
      %v331 = vmul.f32 %v329, 0.015625
      %v332 = vadd.f32 %v330, 1e-05
      %v333 = vadd.f32 %v331, 1e-05
      %v334 = vrsqrt.pop %v332
      %v335 = vrsqrt.pop %v333
      %v336 = vmul.f32 %v320, %v334
      %v337 = vmul.f32 %v321, %v335
      %vm338 = vcmp.ge.f32.partialorder %v336, 0.0
      %vm339 = vcmp.ge.f32.partialorder %v337, 0.0
      %v340 = vmul.f32 %v336, 0.2
      %v341 = vmul.f32 %v337, 0.2
      %v342 = vsel %vm338, %v336, %v340
      %v343 = vsel %vm339, %v337, %v341
      %vm344 = vcmask 84992
      %345 = vst.msk [vmem:[%s194] sm:$0xf] %vm344, 0
      %346 = vst.msk [vmem:[%s194 + $0x4] sm:$0xf] %vm344, 0
      %v347 = vpack.c.bf16 %v343, %v342
      %v349 = vunpack.c.l.b16 %v347
      %v350 = vunpack.c.h.b16 %v347
      %v351 = vpack.c.b16 %v349, %v349
      %v352 = vpack.c.b16 %v350, %v350
      %353 = vrot.lane.b32.xlu0 %v351, 11
      %v354 = vpop.permute.xlu0 %353
      %355 = vrot.lane.b32.xlu0 %v352, 11
      %v356 = vpop.permute.xlu0 %355
      %vm359 = vcmask 724056
      %360 = vst.msk [vmem:[%s194] sm:$0xf] %vm359, %v354
      %361 = vst.msk [vmem:[%s194 + $0x4] sm:$0xf] %vm359, %v356
      %vm362 = vcmask 814792
      %363 = vst.msk [vmem:[%s194] sm:$0xf] %vm362, 0
      %364 = vst.msk [vmem:[%s194 + $0x4] sm:$0xf] %vm362, 0
      %p365 = scmp.lt.s32.totalorder %s15, 1
      %s366 = scalar_select %p365, %s15, 1
      %s367 = smul.addr %s366, 2
      %s368 = smul.addr %s367, 4
      %s369 = scalar_lea.vmem %s4, %s368
      // Predicated region
      $region37: #{unet_forward.7} parent=35 // pred_check
        %p370 = pneg %p122
      $region38: #{unet_forward.7} parent=35 // pred_check_branch
        %372 = sbr.rel (%p370) target = $region40
      $region39: #{unet_forward.7} parent=35 // pred_region
        _
      $region40: #{unet_forward.7} parent=35 // pred_fallthru
        _
    $region36: #{unet_forward.7} parent=5 // pred_fallthru
      _
    %p373 = scmp.le.s32.totalorder 2, %s10
    // Predicated region
    $region41: #{unet_forward.7} parent=5 // pred_check
      %p374 = pneg %p373
    $region42: #{unet_forward.7} parent=5 // pred_check_branch
      %376 = sbr.rel (%p374) target = $region44
    $region43: #{unet_forward.7} parent=5 // pred_region
      %s377 = ssub.s32 %s10, 2
      // Predicated region
      $region45: #{unet_forward.7} parent=43 // pred_check
        %p378 = pneg %p128
      $region46: #{unet_forward.7} parent=43 // pred_check_branch
        %380 = sbr.rel (%p378) target = $region48
      $region47: #{unet_forward.7} parent=43 // pred_region
        %p381 = scmp.lt.s32.totalorder %s16, 1
        %s382 = scalar_select %p381, %s16, 1
        %s383 = smul.addr %s382, 2
        %s384 = smul.addr %s383, 4
        %s385 = scalar_lea.vmem %s4, %s384
      $region48: #{unet_forward.7} parent=43 // pred_fallthru
        _
    $region44: #{unet_forward.7} parent=5 // pred_fallthru
      _
  $region6: #{unet_forward.7} parent=0 // loop_footer
    %s14 = sadd.s32 1, %s10
  $region7: #{unet_forward.7} parent=0 // loop_footer_branch
    %9 = sbr.rel target = $region3
  $region8: #{unet_forward.7} parent=0 // loop_exit
    _

// kernel: unet_forward.8
$region0: #{unet_forward.8}
  #allocation0 [shape = 'u32[]', space=smem, size = 0x4, offset = 0x4, fixed_abs, tag = 'smem constant byte address 0x4 - core index']
  #allocation1 [shape = 'u32[144,128]{1,0:T(1,128)}', space=vmem, size = 0x12000, scoped, tag = 'internal scratch']
  %s0 = inlined_call_operand.vmem [shape: bf16[2,16,36], index: 0, kind: input, shape index: {}]
  %s1 = inlined_call_operand.vmem [shape: bf16[32,144], index: 1, kind: input, shape index: {}]
  %s2 = inlined_call_operand.vmem [shape: f32[32,1], index: 2, kind: input, shape index: {}]
  %s3 = inlined_call_operand.vmem [shape: f32[1,22], index: 3, kind: input, shape index: {}]
  %s4 = inlined_call_operand.vmem [shape: bf16[2,32,36], index: 4, kind: output, shape index: {}]
  %s5 = sld [smem:[#allocation0]]
  $region49: #{unet_forward.8} parent=0
    _
  %s7 = ssub.s32 1, %s5
  %s8 = scalar_select 0, %s7, %s5
  loop: start=0, step=1, limit=4
  $region2: #{unet_forward.8} parent=0 // loop_pre_header
    _
  $region3: #{unet_forward.8} parent=0 // loop_header
    %s10 = sphi 0, %s14
    %p11 = scmp.ge.s32.totalorder %s10, 4
    %s20 = sphi 0, %s22
    %s23 = sphi 0, %s20
    %s24 = sphi 0, %s23
    %s40 = sphi 0, %s24
    %s44 = sphi 0, %s44
    %s46 = sphi 0, %s44
    %s47 = sphi 0, %s46
    %s61 = sphi 0, %s47
    %s65 = sphi 0, %s65
    %s67 = sphi 0, %s65
    %s68 = sphi 0, %s67
    %s82 = sphi 0, %s68
    %s86 = sphi 0, %s86
    %s88 = sphi 0, %s86
    %s89 = sphi 0, %s88
    %s103 = sphi 0, %s89
    %s109 = sphi 0, %s111
    %s112 = sphi 0, %s109
    %s113 = sphi 0, %s112
    %s129 = sphi 0, %s113
  $region4: #{unet_forward.8} parent=0 // loop_header_branch
    %13 = sbr.rel (%p11) target = $region8
  $region5: #{unet_forward.8} parent=0 // loop_body
    %s15 = ssub.s32 %s10, 1
    %s16 = ssub.s32 %s10, 2
    %s17 = sadd.s32 %s10, 1
    %s18 = ssub.s32 %s10, %s17
    %p19 = scmp.eq.s32.totalorder %s18, 0
    %s21 = sadd.s32 %s20, 1
    %s22 = scalar_select %p19, %s20, %s21
    %p25 = pneg %p19
    %p26 = scmp.eq.s32.totalorder %s10, 1
    %p27 = por %p25, %p26
    %p28 = scmp.ne.s32.totalorder %s20, %s23
    %p29 = scmp.eq.s32.totalorder %s10, 0
    %p30 = por %p28, %p29
    %p31 = scmp.ne.s32.totalorder %s20, %s23
    %p32 = scmp.eq.s32.totalorder %s15, 1
    %p33 = por %p31, %p32
    %p34 = scmp.ne.s32.totalorder %s23, %s24
    %p35 = scmp.eq.s32.totalorder %s15, 0
    %p36 = por %p34, %p35
    %p37 = scmp.ne.s32.totalorder %s23, %s24
    %p38 = scmp.eq.s32.totalorder %s16, 1
    %p39 = por %p37, %p38
    %p41 = scmp.ne.s32.totalorder %s24, %s40
    %p42 = scmp.eq.s32.totalorder %s16, 0
    %p43 = por %p41, %p42
    %s45 = sadd.s32 %s44, 1
    %p48 = scmp.eq.s32.totalorder %s10, 1
    %p49 = scmp.ne.s32.totalorder %s44, %s46
    %p50 = scmp.eq.s32.totalorder %s10, 0
    %p51 = por %p49, %p50
    %p52 = scmp.ne.s32.totalorder %s44, %s46
    %p53 = scmp.eq.s32.totalorder %s15, 1
    %p54 = por %p52, %p53
    %p55 = scmp.ne.s32.totalorder %s46, %s47
    %p56 = scmp.eq.s32.totalorder %s15, 0
    %p57 = por %p55, %p56
    %p58 = scmp.ne.s32.totalorder %s46, %s47
    %p59 = scmp.eq.s32.totalorder %s16, 1
    %p60 = por %p58, %p59
    %p62 = scmp.ne.s32.totalorder %s47, %s61
    %p63 = scmp.eq.s32.totalorder %s16, 0
    %p64 = por %p62, %p63
    %s66 = sadd.s32 %s65, 1
    %p69 = scmp.eq.s32.totalorder %s10, 1
    %p70 = scmp.ne.s32.totalorder %s65, %s67
    %p71 = scmp.eq.s32.totalorder %s10, 0
    %p72 = por %p70, %p71
    %p73 = scmp.ne.s32.totalorder %s65, %s67
    %p74 = scmp.eq.s32.totalorder %s15, 1
    %p75 = por %p73, %p74
    %p76 = scmp.ne.s32.totalorder %s67, %s68
    %p77 = scmp.eq.s32.totalorder %s15, 0
    %p78 = por %p76, %p77
    %p79 = scmp.ne.s32.totalorder %s67, %s68
    %p80 = scmp.eq.s32.totalorder %s16, 1
    %p81 = por %p79, %p80
    %p83 = scmp.ne.s32.totalorder %s68, %s82
    %p84 = scmp.eq.s32.totalorder %s16, 0
    %p85 = por %p83, %p84
    %s87 = sadd.s32 %s86, 1
    %p90 = scmp.eq.s32.totalorder %s10, 1
    %p91 = scmp.ne.s32.totalorder %s86, %s88
    %p92 = scmp.eq.s32.totalorder %s10, 0
    %p93 = por %p91, %p92
    %p94 = scmp.ne.s32.totalorder %s86, %s88
    %p95 = scmp.eq.s32.totalorder %s15, 1
    %p96 = por %p94, %p95
    %p97 = scmp.ne.s32.totalorder %s88, %s89
    %p98 = scmp.eq.s32.totalorder %s15, 0
    %p99 = por %p97, %p98
    %p100 = scmp.ne.s32.totalorder %s88, %s89
    %p101 = scmp.eq.s32.totalorder %s16, 1
    %p102 = por %p100, %p101
    %p104 = scmp.ne.s32.totalorder %s89, %s103
    %p105 = scmp.eq.s32.totalorder %s16, 0
    %p106 = por %p104, %p105
    %s107 = ssub.s32 %s10, %s17
    %p108 = scmp.eq.s32.totalorder %s107, 0
    %s110 = sadd.s32 %s109, 1
    %s111 = scalar_select %p108, %s109, %s110
    %p114 = pneg %p108
    %p115 = scmp.eq.s32.totalorder %s10, 1
    %p116 = por %p114, %p115
    %p117 = scmp.ne.s32.totalorder %s109, %s112
    %p118 = scmp.eq.s32.totalorder %s10, 0
    %p119 = por %p117, %p118
    %p120 = scmp.ne.s32.totalorder %s109, %s112
    %p121 = scmp.eq.s32.totalorder %s15, 1
    %p122 = por %p120, %p121
    %p123 = scmp.ne.s32.totalorder %s112, %s113
    %p124 = scmp.eq.s32.totalorder %s15, 0
    %p125 = por %p123, %p124
    %p126 = scmp.ne.s32.totalorder %s112, %s113
    %p127 = scmp.eq.s32.totalorder %s16, 1
    %p128 = por %p126, %p127
    %p130 = scmp.ne.s32.totalorder %s113, %s129
    %p131 = scmp.eq.s32.totalorder %s16, 0
    %p132 = por %p130, %p131
    %p133 = scmp.le.s32.totalorder 1, %s10
    %p134 = scmp.lt.s32.totalorder %s10, 3
    %p135 = pnand %p133, %p134
    %p136 = pneg %p135
    // Predicated region
    $region9: #{unet_forward.8} parent=5 // pred_check
      _
    $region10: #{unet_forward.8} parent=5 // pred_check_branch
      %138 = sbr.rel (%p135) target = $region12
    $region11: #{unet_forward.8} parent=5 // pred_region
      %s139 = ssub.s32 %s10, 1
      // Predicated region
      $region13: #{unet_forward.8} parent=11 // pred_check
        %p140 = pneg %p57
      $region14: #{unet_forward.8} parent=11 // pred_check_branch
        %142 = sbr.rel (%p140) target = $region16
      $region15: #{unet_forward.8} parent=11 // pred_region
        _
      $region16: #{unet_forward.8} parent=11 // pred_fallthru
        _
      // Predicated region
      $region17: #{unet_forward.8} parent=11 // pred_check
        %p143 = pneg %p78
      $region18: #{unet_forward.8} parent=11 // pred_check_branch
        %145 = sbr.rel (%p143) target = $region20
      $region19: #{unet_forward.8} parent=11 // pred_region
        _
      $region20: #{unet_forward.8} parent=11 // pred_fallthru
        _
      // Predicated region
      $region21: #{unet_forward.8} parent=11 // pred_check
        %p146 = pneg %p99
      $region22: #{unet_forward.8} parent=11 // pred_check_branch
        %148 = sbr.rel (%p146) target = $region24
      $region23: #{unet_forward.8} parent=11 // pred_region
        _
      $region24: #{unet_forward.8} parent=11 // pred_fallthru
        _
    $region12: #{unet_forward.8} parent=5 // pred_fallthru
      _
    %p149 = scmp.lt.s32.totalorder %s10, 2
    // Predicated region
    $region25: #{unet_forward.8} parent=5 // pred_check
      %p150 = pneg %p149
    $region26: #{unet_forward.8} parent=5 // pred_check_branch
      %152 = sbr.rel (%p150) target = $region28
    $region27: #{unet_forward.8} parent=5 // pred_region
      // Predicated region
      $region29: #{unet_forward.8} parent=27 // pred_check
        %p153 = pneg %p30
      $region30: #{unet_forward.8} parent=27 // pred_check_branch
        %155 = sbr.rel (%p153) target = $region32
      $region31: #{unet_forward.8} parent=27 // pred_region
        %p156 = scmp.lt.s32.totalorder %s10, 1
        %s157 = scalar_select %p156, %s10, 1
        %s158 = smul.addr %s157, 2
        %s159 = smul.addr %s158, 4
        %s160 = scalar_lea.vmem %s0, %s159
      $region32: #{unet_forward.8} parent=27 // pred_fallthru
        _
    $region28: #{unet_forward.8} parent=5 // pred_fallthru
      _
    %p161 = scmp.le.s32.totalorder 1, %s10
    %p162 = scmp.lt.s32.totalorder %s10, 3
    %p163 = pnand %p161, %p162
    %p164 = pneg %p163
    // Predicated region
    $region33: #{unet_forward.8} parent=5 // pred_check
      _
    $region34: #{unet_forward.8} parent=5 // pred_check_branch
      %166 = sbr.rel (%p163) target = $region36
    $region35: #{unet_forward.8} parent=5 // pred_region
      %s167 = ssub.s32 %s10, 1
      %p168 = scmp.lt.s32.totalorder %s15, 1
      %s169 = scalar_select %p168, %s15, 1
      %s170 = smul.addr %s169, 2
      %s171 = smul.addr %s170, 4
      %s172 = scalar_lea.vmem %s0, %s171
      %p173 = pneg %p36
      %p174 = pneg %p33
      %p175 = pneg %p57
      %p176 = pneg %p54
      %p177 = pneg %p78
      %p178 = pneg %p75
      %p179 = pneg %p99
      %p180 = pneg %p96
      %p181 = pneg %p125
      %p182 = pneg %p122
      %p183 = scmp.lt.s32.totalorder %s15, 1
      %s184 = scalar_select %p183, %s15, 1
      %s185 = smul.addr %s184, 4
      %s186 = smul.addr %s185, 4
      %s187 = scalar_lea.vmem %s4, %s186
      %p188 = scmp.lt.s32.totalorder %s15, 1
      %s189 = scalar_select %p188, %s15, 1
      %s190 = smul.addr %s189, 2
      %s191 = smul.addr %s190, 4
      %s192 = scalar_lea.vmem %s0, %s191
      %p193 = scmp.lt.s32.totalorder %s15, 1
      %s194 = scalar_select %p193, %s15, 1
      %s195 = smul.addr %s194, 4
      %s196 = smul.addr %s195, 4
      %s197 = scalar_lea.vmem %s4, %s196
      %v199 = vld [vmem:[%s192] sm:$0xf]
      %v200 = vld [vmem:[%s192 + $0x4] sm:$0xf]
      %v203 = vunpack.c.l.b16 %v199
      %v204 = vunpack.c.l.b16 %v200
      %v205 = vpack.c.b16 %v204, %v203
      %207 = vrot.lane.b32.xlu0 %v205, 127
      %v208 = vpop.permute.xlu0 %207
      %210 = vrot.lane.b32.xlu0 %v205, 126
      %v211 = vpop.permute.xlu0 %210
      %213 = vrot.lane.b32.xlu0 %v205, 122
      %v214 = vpop.permute.xlu0 %213
      %216 = vrot.lane.b32.xlu0 %v205, 121
      %v217 = vpop.permute.xlu0 %216
      %219 = vrot.lane.b32.xlu0 %v205, 120
      %v220 = vpop.permute.xlu0 %219
      %222 = vrot.lane.b32.xlu0 %v205, 116
      %v223 = vpop.permute.xlu0 %222
      %225 = vrot.lane.b32.xlu0 %v205, 115
      %v226 = vpop.permute.xlu0 %225
      %228 = vrot.lane.b32.xlu0 %v205, 114
      %v229 = vpop.permute.xlu0 %228
      %v231 = vld [vmem:[%s1] sm:$0xff]
      %v232 = vld [vmem:[%s1 + $0x8] sm:$0xff]
      %v233 = vld [vmem:[%s1 + $0x10] sm:$0xff]
      %v234 = vld [vmem:[%s1 + $0x18] sm:$0xff]
      %v235 = vld [vmem:[%s2] sm:$0xff]
      %v236 = vld [vmem:[%s2 + $0x8] sm:$0xff]
      %v237 = vld [vmem:[%s2 + $0x10] sm:$0xff]
      %v238 = vld [vmem:[%s2 + $0x18] sm:$0xff]
      %240 = vset.pattern.permute.xlu0 0
      %241 = vperm.xlu0 %240, %v235
      %v242 = vpop.permute.xlu0 %241
      %245 = vset.pattern.permute.xlu0 0
      %246 = vperm.xlu0 %245, %v236
      %v247 = vpop.permute.xlu0 %246
      %250 = vset.pattern.permute.xlu0 0
      %251 = vperm.xlu0 %250, %v237
      %v252 = vpop.permute.xlu0 %251
      %255 = vset.pattern.permute.xlu0 0
      %256 = vperm.xlu0 %255, %v238
      %v257 = vpop.permute.xlu0 %256
      %v263 = vunpack.c.l.b16 %v231
      %v264 = vunpack.c.h.b16 %v231
      %v265 = vunpack.c.l.b16 %v232
      %v266 = vunpack.c.h.b16 %v232
      %v267 = vunpack.c.l.b16 %v233
      %v268 = vunpack.c.h.b16 %v233
      %v269 = vunpack.c.l.b16 %v234
      %v270 = vunpack.c.h.b16 %v234
      %v271 = vpack.c.b16 %v265, %v263
      %v272 = vpack.c.b16 %v266, %v264
      %v273 = vpack.c.b16 %v269, %v267
      %v274 = vpack.c.b16 %v270, %v268
      %vm277 = vcmask 130048
      %v279 = vsel %vm277, %v272, 0
      %v282 = vsel %vm277, %v274, 0
      %284 = vmatprep.subr.bf16.mxu0 0
      %285 = vmatpush1.bf16.msra.mxu0 %v226
      %286 = vmatprep.subr.bf16.mxu0 0
      %287 = vmatpush1.bf16.msra.mxu0 %v223
      %288 = vmatprep.subr.bf16.mxu0 0
      %289 = vmatpush1.bf16.msra.mxu0 %v220
      %290 = vmatprep.subr.bf16.mxu0 0
      %291 = vmatpush1.bf16.msra.mxu0 %v217
      %292 = vmatprep.subr.bf16.mxu0 0
      %293 = vmatpush1.bf16.msra.mxu0 %v214
      %294 = vmatprep.subr.bf16.mxu0 0
      %295 = vmatpush1.bf16.msra.mxu0 %v211
      %296 = vmatprep.subr.bf16.mxu0 0
      %297 = vmatpush1.bf16.msra.mxu0 %v208
      %298 = vmatprep.subr.bf16.mxu0 0
      %299 = vmatpush1.bf16.msra.mxu0 %v205
      %300 = vmatprep.subr.bf16.mxu0 0
      %301 = vmatpush2.bf16.msra.mxu0 0
      %302 = vmatprep.subr.bf16.mxu0 0
      %303 = vmatpush2.bf16.msra.mxu0 0
      %304 = vmatprep.subr.bf16.mxu0 0
      %305 = vmatpush2.bf16.msra.mxu0 0
      %306 = vmatprep.subr.bf16.mxu0 0
      %307 = vmatpush2.bf16.msra.mxu0 0
      %308 = vmatprep.subr.bf16.mxu0 0
      %309 = vmatpush2.bf16.msra.mxu0 0
      %310 = vmatprep.subr.bf16.mxu0 0
      %311 = vmatpush2.bf16.msra.mxu0 0
      %312 = vmatprep.subr.bf16.mxu0 0
      %313 = vmatpush2.bf16.msra.mxu0 0
      %314 = vmatprep.subr.bf16.mxu0 0
      %315 = vmatpush2.bf16.msra.mxu0 %v229
      %316 = vmatprep.mubr.bf16.mxu0 %v279
      %317 = vmatmul.mubr.bf16.gmra.mxu0 %v271
      %v318 = vpop.f32.mrf.mxu0
      %v319 = vadd.f32 %v242, %v318
      %v320 = vpop.f32.mrf.mxu0
      %v321 = vpop.f32.mrf.mxu0
      %v322 = vadd.f32 %v247, %v321
      %v323 = vpop.f32.mrf.mxu0
      %324 = vmatprep.mubr.bf16.mxu0 %v282
      %325 = vmatmul.mubr.bf16.gmra.mxu0 %v273
      %v326 = vpop.f32.mrf.mxu0
      %v327 = vadd.f32 %v252, %v326
      %v328 = vpop.f32.mrf.mxu0
      %v329 = vpop.f32.mrf.mxu0
      %v330 = vadd.f32 %v257, %v329
      %v331 = vpop.f32.mrf.mxu0
      %332 = vdwg.mxu0
      %v333 = vld [vmem:[%s3] sm:$0x1]
      %v335 = vlaneseq
      %v336 = vshrl.u32 %v335, 7
      %v337 = vsub.s32 0, %v336
      %v338 = vrot.slane %v333, %v337
      %v340 = vmul.f32 %v319, %v338
      %v341 = vmul.f32 %v322, %v338
      %v342 = vmul.f32 %v327, %v338
      %v343 = vmul.f32 %v330, %v338
      %vm344 = vcmask 179200
      %v345 = vsel %vm344, %v340, 0.0
      %346 = vadd.xlane.f32.xlu0 %v345
      %v347 = vpop.xlane.xlu0 %346
      %v348 = vsel %vm344, %v341, 0.0
      %349 = vadd.xlane.f32.xlu0 %v348
      %v350 = vpop.xlane.xlu0 %349
      %v351 = vsel %vm344, %v342, 0.0
      %352 = vadd.xlane.f32.xlu0 %v351
      %v353 = vpop.xlane.xlu0 %352
      %v354 = vsel %vm344, %v343, 0.0
      %355 = vadd.xlane.f32.xlu0 %v354
      %v356 = vpop.xlane.xlu0 %355
      %v357 = vmul.f32 %v347, 0.0625
      %v358 = vmul.f32 %v350, 0.0625
      %v359 = vmul.f32 %v353, 0.0625
      %v360 = vmul.f32 %v356, 0.0625
      %v361 = vsub.f32 %v319, %v357
      %v362 = vsub.f32 %v322, %v358
      %v363 = vsub.f32 %v327, %v359
      %v364 = vsub.f32 %v330, %v360
      %v365 = vmul.f32 %v361, %v338
      %v366 = vmul.f32 %v362, %v338
      %v367 = vmul.f32 %v363, %v338
      %v368 = vmul.f32 %v364, %v338
      %v369 = vmul.f32 %v365, %v365
      %v370 = vmul.f32 %v366, %v366
      %v371 = vmul.f32 %v367, %v367
      %v372 = vmul.f32 %v368, %v368
      %v373 = vsel %vm344, %v369, 0.0
      %374 = vadd.xlane.f32.xlu0 %v373
      %v375 = vpop.xlane.xlu0 %374
      %v376 = vsel %vm344, %v370, 0.0
      %377 = vadd.xlane.f32.xlu0 %v376
      %v378 = vpop.xlane.xlu0 %377
      %v379 = vsel %vm344, %v371, 0.0
      %380 = vadd.xlane.f32.xlu0 %v379
      %v381 = vpop.xlane.xlu0 %380
      %v382 = vsel %vm344, %v372, 0.0
      %383 = vadd.xlane.f32.xlu0 %v382
      %v384 = vpop.xlane.xlu0 %383
      %v385 = vmul.f32 %v375, 0.0625
      %v386 = vmul.f32 %v378, 0.0625
      %v387 = vmul.f32 %v381, 0.0625
      %v388 = vmul.f32 %v384, 0.0625
      %v389 = vadd.f32 %v385, 1e-05
      %v390 = vadd.f32 %v386, 1e-05
      %v391 = vadd.f32 %v387, 1e-05
      %v392 = vadd.f32 %v388, 1e-05
      %v393 = vrsqrt.pop %v389
      %v394 = vrsqrt.pop %v390
      %v395 = vrsqrt.pop %v391
      %v396 = vrsqrt.pop %v392
      %v397 = vmul.f32 %v365, %v393
      %v398 = vmul.f32 %v366, %v394
      %v399 = vmul.f32 %v367, %v395
      %v400 = vmul.f32 %v368, %v396
      %vm401 = vcmp.ge.f32.partialorder %v397, 0.0
      %vm402 = vcmp.ge.f32.partialorder %v398, 0.0
      %vm403 = vcmp.ge.f32.partialorder %v399, 0.0
      %vm404 = vcmp.ge.f32.partialorder %v400, 0.0
      %v405 = vmul.f32 %v397, 0.2
      %v406 = vmul.f32 %v398, 0.2
      %v407 = vmul.f32 %v399, 0.2
      %v408 = vmul.f32 %v400, 0.2
      %v409 = vsel %vm401, %v397, %v405
      %v410 = vsel %vm402, %v398, %v406
      %v411 = vsel %vm403, %v399, %v407
      %v412 = vsel %vm404, %v400, %v408
      %vm413 = vcmask 52224
      %414 = vst.msk [vmem:[%s197] sm:$0xf] %vm413, 0
      %415 = vst.msk [vmem:[%s197 + $0x4] sm:$0xf] %vm413, 0
      %416 = vst.msk [vmem:[%s197 + $0x8] sm:$0xf] %vm413, 0
      %417 = vst.msk [vmem:[%s197 + $0xc] sm:$0xf] %vm413, 0
      %v418 = vpack.c.bf16 %v410, %v409
      %v419 = vpack.c.bf16 %v412, %v411
      %v422 = vunpack.c.l.b16 %v418
      %v423 = vunpack.c.h.b16 %v418
      %v424 = vunpack.c.l.b16 %v419
      %v425 = vunpack.c.h.b16 %v419
      %v426 = vpack.c.b16 %v422, %v422
      %v427 = vpack.c.b16 %v423, %v423
      %v428 = vpack.c.b16 %v424, %v424
      %v429 = vpack.c.b16 %v425, %v425
      %430 = vrot.lane.b32.xlu0 %v426, 7
      %v431 = vpop.permute.xlu0 %430
      %432 = vrot.lane.b32.xlu0 %v427, 7
      %v433 = vpop.permute.xlu0 %432
      %434 = vrot.lane.b32.xlu0 %v428, 7
      %v435 = vpop.permute.xlu0 %434
      %436 = vrot.lane.b32.xlu0 %v429, 7
      %v437 = vpop.permute.xlu0 %436
      %vm442 = vcmask 232504
      %443 = vst.msk [vmem:[%s197] sm:$0xf] %vm442, %v431
      %444 = vst.msk [vmem:[%s197 + $0x4] sm:$0xf] %vm442, %v433
      %445 = vst.msk [vmem:[%s197 + $0x8] sm:$0xf] %vm442, %v435
      %446 = vst.msk [vmem:[%s197 + $0xc] sm:$0xf] %vm442, %v437
      %vm447 = vcmask 290024
      %448 = vst.msk [vmem:[%s197] sm:$0xf] %vm447, 0
      %449 = vst.msk [vmem:[%s197 + $0x4] sm:$0xf] %vm447, 0
      %450 = vst.msk [vmem:[%s197 + $0x8] sm:$0xf] %vm447, 0
      %451 = vst.msk [vmem:[%s197 + $0xc] sm:$0xf] %vm447, 0
      %p452 = scmp.lt.s32.totalorder %s15, 1
      %s453 = scalar_select %p452, %s15, 1
      %s454 = smul.addr %s453, 4
      %s455 = smul.addr %s454, 4
      %s456 = scalar_lea.vmem %s4, %s455
      // Predicated region
      $region37: #{unet_forward.8} parent=35 // pred_check
        %p457 = pneg %p122
      $region38: #{unet_forward.8} parent=35 // pred_check_branch
        %459 = sbr.rel (%p457) target = $region40
      $region39: #{unet_forward.8} parent=35 // pred_region
        _
      $region40: #{unet_forward.8} parent=35 // pred_fallthru
        _
    $region36: #{unet_forward.8} parent=5 // pred_fallthru
      _
    %p460 = scmp.le.s32.totalorder 2, %s10
    // Predicated region
    $region41: #{unet_forward.8} parent=5 // pred_check
      %p461 = pneg %p460
    $region42: #{unet_forward.8} parent=5 // pred_check_branch
      %463 = sbr.rel (%p461) target = $region44
    $region43: #{unet_forward.8} parent=5 // pred_region
      %s464 = ssub.s32 %s10, 2
      // Predicated region
      $region45: #{unet_forward.8} parent=43 // pred_check
        %p465 = pneg %p128
      $region46: #{unet_forward.8} parent=43 // pred_check_branch
        %467 = sbr.rel (%p465) target = $region48
      $region47: #{unet_forward.8} parent=43 // pred_region
        %p468 = scmp.lt.s32.totalorder %s16, 1
        %s469 = scalar_select %p468, %s16, 1
        %s470 = smul.addr %s469, 4
        %s471 = smul.addr %s470, 4
        %s472 = scalar_lea.vmem %s4, %s471
      $region48: #{unet_forward.8} parent=43 // pred_fallthru
        _
    $region44: #{unet_forward.8} parent=5 // pred_fallthru
      _
  $region6: #{unet_forward.8} parent=0 // loop_footer
    %s14 = sadd.s32 1, %s10
  $region7: #{unet_forward.8} parent=0 // loop_footer_branch
    %9 = sbr.rel target = $region3
  $region8: #{unet_forward.8} parent=0 // loop_exit
    _

// kernel: unet_forward.9
$region0: #{unet_forward.9}
  #allocation0 [shape = 'u32[]', space=smem, size = 0x4, offset = 0x4, fixed_abs, tag = 'smem constant byte address 0x4 - core index']
  #allocation1 [shape = 'u32[144,128]{1,0:T(1,128)}', space=vmem, size = 0x12000, scoped, tag = 'internal scratch']
  %s0 = inlined_call_operand.vmem [shape: bf16[2,32,100], index: 0, kind: input, shape index: {}]
  %s1 = inlined_call_operand.vmem [shape: bf16[2,16,100], index: 1, kind: input, shape index: {}]
  %s2 = inlined_call_operand.vmem [shape: bf16[16,32], index: 2, kind: input, shape index: {}]
  %s3 = inlined_call_operand.vmem [shape: f32[16,1], index: 3, kind: input, shape index: {}]
  %s4 = inlined_call_operand.vmem [shape: f32[1,100], index: 4, kind: input, shape index: {}]
  %s5 = inlined_call_operand.vmem [shape: bf16[16,144], index: 5, kind: input, shape index: {}]
  %s6 = inlined_call_operand.vmem [shape: bf16[16,144], index: 6, kind: input, shape index: {}]
  %s7 = inlined_call_operand.vmem [shape: f32[16,1], index: 7, kind: input, shape index: {}]
  %s8 = inlined_call_operand.vmem [shape: f32[1,78], index: 8, kind: input, shape index: {}]
  %s9 = inlined_call_operand.vmem [shape: bf16[2,16,100], index: 9, kind: output, shape index: {}]
  %s10 = sld [smem:[#allocation0]]
  $region69: #{unet_forward.9} parent=0
    _
  %s12 = ssub.s32 1, %s10
  %s13 = scalar_select 0, %s12, %s10
  loop: start=0, step=1, limit=4
  $region2: #{unet_forward.9} parent=0 // loop_pre_header
    _
  $region3: #{unet_forward.9} parent=0 // loop_header
    %s15 = sphi 0, %s19
    %p16 = scmp.ge.s32.totalorder %s15, 4
    %s25 = sphi 0, %s27
    %s28 = sphi 0, %s25
    %s29 = sphi 0, %s28
    %s45 = sphi 0, %s29
    %s51 = sphi 0, %s53
    %s54 = sphi 0, %s51
    %s55 = sphi 0, %s54
    %s71 = sphi 0, %s55
    %s75 = sphi 0, %s75
    %s77 = sphi 0, %s75
    %s78 = sphi 0, %s77
    %s92 = sphi 0, %s78
    %s96 = sphi 0, %s96
    %s98 = sphi 0, %s96
    %s99 = sphi 0, %s98
    %s113 = sphi 0, %s99
    %s117 = sphi 0, %s117
    %s119 = sphi 0, %s117
    %s120 = sphi 0, %s119
    %s134 = sphi 0, %s120
    %s138 = sphi 0, %s138
    %s140 = sphi 0, %s138
    %s141 = sphi 0, %s140
    %s155 = sphi 0, %s141
    %s159 = sphi 0, %s159
    %s161 = sphi 0, %s159
    %s162 = sphi 0, %s161
    %s176 = sphi 0, %s162
    %s180 = sphi 0, %s180
    %s182 = sphi 0, %s180
    %s183 = sphi 0, %s182
    %s197 = sphi 0, %s183
    %s201 = sphi 0, %s201
    %s203 = sphi 0, %s201
    %s204 = sphi 0, %s203
    %s218 = sphi 0, %s204
    %s224 = sphi 0, %s226
    %s227 = sphi 0, %s224
    %s228 = sphi 0, %s227
    %s244 = sphi 0, %s228
  $region4: #{unet_forward.9} parent=0 // loop_header_branch
    %18 = sbr.rel (%p16) target = $region8
  $region5: #{unet_forward.9} parent=0 // loop_body
    %s20 = ssub.s32 %s15, 1
    %s21 = ssub.s32 %s15, 2
    %s22 = sadd.s32 %s15, 1
    %s23 = ssub.s32 %s15, %s22
    %p24 = scmp.eq.s32.totalorder %s23, 0
    %s26 = sadd.s32 %s25, 1
    %s27 = scalar_select %p24, %s25, %s26
    %p30 = pneg %p24
    %p31 = scmp.eq.s32.totalorder %s15, 1
    %p32 = por %p30, %p31
    %p33 = scmp.ne.s32.totalorder %s25, %s28
    %p34 = scmp.eq.s32.totalorder %s15, 0
    %p35 = por %p33, %p34
    %p36 = scmp.ne.s32.totalorder %s25, %s28
    %p37 = scmp.eq.s32.totalorder %s20, 1
    %p38 = por %p36, %p37
    %p39 = scmp.ne.s32.totalorder %s28, %s29
    %p40 = scmp.eq.s32.totalorder %s20, 0
    %p41 = por %p39, %p40
    %p42 = scmp.ne.s32.totalorder %s28, %s29
    %p43 = scmp.eq.s32.totalorder %s21, 1
    %p44 = por %p42, %p43
    %p46 = scmp.ne.s32.totalorder %s29, %s45
    %p47 = scmp.eq.s32.totalorder %s21, 0
    %p48 = por %p46, %p47
    %s49 = ssub.s32 %s15, %s22
    %p50 = scmp.eq.s32.totalorder %s49, 0
    %s52 = sadd.s32 %s51, 1
    %s53 = scalar_select %p50, %s51, %s52
    %p56 = pneg %p50
    %p57 = scmp.eq.s32.totalorder %s15, 1
    %p58 = por %p56, %p57
    %p59 = scmp.ne.s32.totalorder %s51, %s54
    %p60 = scmp.eq.s32.totalorder %s15, 0
    %p61 = por %p59, %p60
    %p62 = scmp.ne.s32.totalorder %s51, %s54
    %p63 = scmp.eq.s32.totalorder %s20, 1
    %p64 = por %p62, %p63
    %p65 = scmp.ne.s32.totalorder %s54, %s55
    %p66 = scmp.eq.s32.totalorder %s20, 0
    %p67 = por %p65, %p66
    %p68 = scmp.ne.s32.totalorder %s54, %s55
    %p69 = scmp.eq.s32.totalorder %s21, 1
    %p70 = por %p68, %p69
    %p72 = scmp.ne.s32.totalorder %s55, %s71
    %p73 = scmp.eq.s32.totalorder %s21, 0
    %p74 = por %p72, %p73
    %s76 = sadd.s32 %s75, 1
    %p79 = scmp.eq.s32.totalorder %s15, 1
    %p80 = scmp.ne.s32.totalorder %s75, %s77
    %p81 = scmp.eq.s32.totalorder %s15, 0
    %p82 = por %p80, %p81
    %p83 = scmp.ne.s32.totalorder %s75, %s77
    %p84 = scmp.eq.s32.totalorder %s20, 1
    %p85 = por %p83, %p84
    %p86 = scmp.ne.s32.totalorder %s77, %s78
    %p87 = scmp.eq.s32.totalorder %s20, 0
    %p88 = por %p86, %p87
    %p89 = scmp.ne.s32.totalorder %s77, %s78
    %p90 = scmp.eq.s32.totalorder %s21, 1
    %p91 = por %p89, %p90
    %p93 = scmp.ne.s32.totalorder %s78, %s92
    %p94 = scmp.eq.s32.totalorder %s21, 0
    %p95 = por %p93, %p94
    %s97 = sadd.s32 %s96, 1
    %p100 = scmp.eq.s32.totalorder %s15, 1
    %p101 = scmp.ne.s32.totalorder %s96, %s98
    %p102 = scmp.eq.s32.totalorder %s15, 0
    %p103 = por %p101, %p102
    %p104 = scmp.ne.s32.totalorder %s96, %s98
    %p105 = scmp.eq.s32.totalorder %s20, 1
    %p106 = por %p104, %p105
    %p107 = scmp.ne.s32.totalorder %s98, %s99
    %p108 = scmp.eq.s32.totalorder %s20, 0
    %p109 = por %p107, %p108
    %p110 = scmp.ne.s32.totalorder %s98, %s99
    %p111 = scmp.eq.s32.totalorder %s21, 1
    %p112 = por %p110, %p111
    %p114 = scmp.ne.s32.totalorder %s99, %s113
    %p115 = scmp.eq.s32.totalorder %s21, 0
    %p116 = por %p114, %p115
    %s118 = sadd.s32 %s117, 1
    %p121 = scmp.eq.s32.totalorder %s15, 1
    %p122 = scmp.ne.s32.totalorder %s117, %s119
    %p123 = scmp.eq.s32.totalorder %s15, 0
    %p124 = por %p122, %p123
    %p125 = scmp.ne.s32.totalorder %s117, %s119
    %p126 = scmp.eq.s32.totalorder %s20, 1
    %p127 = por %p125, %p126
    %p128 = scmp.ne.s32.totalorder %s119, %s120
    %p129 = scmp.eq.s32.totalorder %s20, 0
    %p130 = por %p128, %p129
    %p131 = scmp.ne.s32.totalorder %s119, %s120
    %p132 = scmp.eq.s32.totalorder %s21, 1
    %p133 = por %p131, %p132
    %p135 = scmp.ne.s32.totalorder %s120, %s134
    %p136 = scmp.eq.s32.totalorder %s21, 0
    %p137 = por %p135, %p136
    %s139 = sadd.s32 %s138, 1
    %p142 = scmp.eq.s32.totalorder %s15, 1
    %p143 = scmp.ne.s32.totalorder %s138, %s140
    %p144 = scmp.eq.s32.totalorder %s15, 0
    %p145 = por %p143, %p144
    %p146 = scmp.ne.s32.totalorder %s138, %s140
    %p147 = scmp.eq.s32.totalorder %s20, 1
    %p148 = por %p146, %p147
    %p149 = scmp.ne.s32.totalorder %s140, %s141
    %p150 = scmp.eq.s32.totalorder %s20, 0
    %p151 = por %p149, %p150
    %p152 = scmp.ne.s32.totalorder %s140, %s141
    %p153 = scmp.eq.s32.totalorder %s21, 1
    %p154 = por %p152, %p153
    %p156 = scmp.ne.s32.totalorder %s141, %s155
    %p157 = scmp.eq.s32.totalorder %s21, 0
    %p158 = por %p156, %p157
    %s160 = sadd.s32 %s159, 1
    %p163 = scmp.eq.s32.totalorder %s15, 1
    %p164 = scmp.ne.s32.totalorder %s159, %s161
    %p165 = scmp.eq.s32.totalorder %s15, 0
    %p166 = por %p164, %p165
    %p167 = scmp.ne.s32.totalorder %s159, %s161
    %p168 = scmp.eq.s32.totalorder %s20, 1
    %p169 = por %p167, %p168
    %p170 = scmp.ne.s32.totalorder %s161, %s162
    %p171 = scmp.eq.s32.totalorder %s20, 0
    %p172 = por %p170, %p171
    %p173 = scmp.ne.s32.totalorder %s161, %s162
    %p174 = scmp.eq.s32.totalorder %s21, 1
    %p175 = por %p173, %p174
    %p177 = scmp.ne.s32.totalorder %s162, %s176
    %p178 = scmp.eq.s32.totalorder %s21, 0
    %p179 = por %p177, %p178
    %s181 = sadd.s32 %s180, 1
    %p184 = scmp.eq.s32.totalorder %s15, 1
    %p185 = scmp.ne.s32.totalorder %s180, %s182
    %p186 = scmp.eq.s32.totalorder %s15, 0
    %p187 = por %p185, %p186
    %p188 = scmp.ne.s32.totalorder %s180, %s182
    %p189 = scmp.eq.s32.totalorder %s20, 1
    %p190 = por %p188, %p189
    %p191 = scmp.ne.s32.totalorder %s182, %s183
    %p192 = scmp.eq.s32.totalorder %s20, 0
    %p193 = por %p191, %p192
    %p194 = scmp.ne.s32.totalorder %s182, %s183
    %p195 = scmp.eq.s32.totalorder %s21, 1
    %p196 = por %p194, %p195
    %p198 = scmp.ne.s32.totalorder %s183, %s197
    %p199 = scmp.eq.s32.totalorder %s21, 0
    %p200 = por %p198, %p199
    %s202 = sadd.s32 %s201, 1
    %p205 = scmp.eq.s32.totalorder %s15, 1
    %p206 = scmp.ne.s32.totalorder %s201, %s203
    %p207 = scmp.eq.s32.totalorder %s15, 0
    %p208 = por %p206, %p207
    %p209 = scmp.ne.s32.totalorder %s201, %s203
    %p210 = scmp.eq.s32.totalorder %s20, 1
    %p211 = por %p209, %p210
    %p212 = scmp.ne.s32.totalorder %s203, %s204
    %p213 = scmp.eq.s32.totalorder %s20, 0
    %p214 = por %p212, %p213
    %p215 = scmp.ne.s32.totalorder %s203, %s204
    %p216 = scmp.eq.s32.totalorder %s21, 1
    %p217 = por %p215, %p216
    %p219 = scmp.ne.s32.totalorder %s204, %s218
    %p220 = scmp.eq.s32.totalorder %s21, 0
    %p221 = por %p219, %p220
    %s222 = ssub.s32 %s15, %s22
    %p223 = scmp.eq.s32.totalorder %s222, 0
    %s225 = sadd.s32 %s224, 1
    %s226 = scalar_select %p223, %s224, %s225
    %p229 = pneg %p223
    %p230 = scmp.eq.s32.totalorder %s15, 1
    %p231 = por %p229, %p230
    %p232 = scmp.ne.s32.totalorder %s224, %s227
    %p233 = scmp.eq.s32.totalorder %s15, 0
    %p234 = por %p232, %p233
    %p235 = scmp.ne.s32.totalorder %s224, %s227
    %p236 = scmp.eq.s32.totalorder %s20, 1
    %p237 = por %p235, %p236
    %p238 = scmp.ne.s32.totalorder %s227, %s228
    %p239 = scmp.eq.s32.totalorder %s20, 0
    %p240 = por %p238, %p239
    %p241 = scmp.ne.s32.totalorder %s227, %s228
    %p242 = scmp.eq.s32.totalorder %s21, 1
    %p243 = por %p241, %p242
    %p245 = scmp.ne.s32.totalorder %s228, %s244
    %p246 = scmp.eq.s32.totalorder %s21, 0
    %p247 = por %p245, %p246
    %p248 = scmp.le.s32.totalorder 1, %s15
    %p249 = scmp.lt.s32.totalorder %s15, 3
    %p250 = pnand %p248, %p249
    %p251 = pneg %p250
    // Predicated region
    $region9: #{unet_forward.9} parent=5 // pred_check
      _
    $region10: #{unet_forward.9} parent=5 // pred_check_branch
      %253 = sbr.rel (%p250) target = $region12
    $region11: #{unet_forward.9} parent=5 // pred_region
      %s254 = ssub.s32 %s15, 1
      // Predicated region
      $region13: #{unet_forward.9} parent=11 // pred_check
        %p255 = pneg %p88
      $region14: #{unet_forward.9} parent=11 // pred_check_branch
        %257 = sbr.rel (%p255) target = $region16
      $region15: #{unet_forward.9} parent=11 // pred_region
        _
      $region16: #{unet_forward.9} parent=11 // pred_fallthru
        _
      // Predicated region
      $region17: #{unet_forward.9} parent=11 // pred_check
        %p258 = pneg %p109
      $region18: #{unet_forward.9} parent=11 // pred_check_branch
        %260 = sbr.rel (%p258) target = $region20
      $region19: #{unet_forward.9} parent=11 // pred_region
        _
      $region20: #{unet_forward.9} parent=11 // pred_fallthru
        _
      // Predicated region
      $region21: #{unet_forward.9} parent=11 // pred_check
        %p261 = pneg %p130
      $region22: #{unet_forward.9} parent=11 // pred_check_branch
        %263 = sbr.rel (%p261) target = $region24
      $region23: #{unet_forward.9} parent=11 // pred_region
        _
      $region24: #{unet_forward.9} parent=11 // pred_fallthru
        _
      // Predicated region
      $region25: #{unet_forward.9} parent=11 // pred_check
        %p264 = pneg %p151
      $region26: #{unet_forward.9} parent=11 // pred_check_branch
        %266 = sbr.rel (%p264) target = $region28
      $region27: #{unet_forward.9} parent=11 // pred_region
        _
      $region28: #{unet_forward.9} parent=11 // pred_fallthru
        _
      // Predicated region
      $region29: #{unet_forward.9} parent=11 // pred_check
        %p267 = pneg %p172
      $region30: #{unet_forward.9} parent=11 // pred_check_branch
        %269 = sbr.rel (%p267) target = $region32
      $region31: #{unet_forward.9} parent=11 // pred_region
        _
      $region32: #{unet_forward.9} parent=11 // pred_fallthru
        _
      // Predicated region
      $region33: #{unet_forward.9} parent=11 // pred_check
        %p270 = pneg %p193
      $region34: #{unet_forward.9} parent=11 // pred_check_branch
        %272 = sbr.rel (%p270) target = $region36
      $region35: #{unet_forward.9} parent=11 // pred_region
        _
      $region36: #{unet_forward.9} parent=11 // pred_fallthru
        _
      // Predicated region
      $region37: #{unet_forward.9} parent=11 // pred_check
        %p273 = pneg %p214
      $region38: #{unet_forward.9} parent=11 // pred_check_branch
        %275 = sbr.rel (%p273) target = $region40
      $region39: #{unet_forward.9} parent=11 // pred_region
        _
      $region40: #{unet_forward.9} parent=11 // pred_fallthru
        _
    $region12: #{unet_forward.9} parent=5 // pred_fallthru
      _
    %p276 = scmp.lt.s32.totalorder %s15, 2
    // Predicated region
    $region41: #{unet_forward.9} parent=5 // pred_check
      %p277 = pneg %p276
    $region42: #{unet_forward.9} parent=5 // pred_check_branch
      %279 = sbr.rel (%p277) target = $region44
    $region43: #{unet_forward.9} parent=5 // pred_region
      // Predicated region
      $region45: #{unet_forward.9} parent=43 // pred_check
        %p280 = pneg %p35
      $region46: #{unet_forward.9} parent=43 // pred_check_branch
        %282 = sbr.rel (%p280) target = $region48
      $region47: #{unet_forward.9} parent=43 // pred_region
        %p283 = scmp.lt.s32.totalorder %s15, 1
        %s284 = scalar_select %p283, %s15, 1
        %s285 = smul.addr %s284, 4
        %s286 = smul.addr %s285, 4
        %s287 = scalar_lea.vmem %s0, %s286
      $region48: #{unet_forward.9} parent=43 // pred_fallthru
        _
      // Predicated region
      $region49: #{unet_forward.9} parent=43 // pred_check
        %p288 = pneg %p61
      $region50: #{unet_forward.9} parent=43 // pred_check_branch
        %290 = sbr.rel (%p288) target = $region52
      $region51: #{unet_forward.9} parent=43 // pred_region
        %p291 = scmp.lt.s32.totalorder %s15, 1
        %s292 = scalar_select %p291, %s15, 1
        %s293 = smul.addr %s292, 2
        %s294 = smul.addr %s293, 4
        %s295 = scalar_lea.vmem %s1, %s294
      $region52: #{unet_forward.9} parent=43 // pred_fallthru
        _
    $region44: #{unet_forward.9} parent=5 // pred_fallthru
      _
    %p296 = scmp.le.s32.totalorder 1, %s15
    %p297 = scmp.lt.s32.totalorder %s15, 3
    %p298 = pnand %p296, %p297
    %p299 = pneg %p298
    // Predicated region
    $region53: #{unet_forward.9} parent=5 // pred_check
      _
    $region54: #{unet_forward.9} parent=5 // pred_check_branch
      %301 = sbr.rel (%p298) target = $region56
    $region55: #{unet_forward.9} parent=5 // pred_region
      %s302 = ssub.s32 %s15, 1
      %p303 = scmp.lt.s32.totalorder %s20, 1
      %s304 = scalar_select %p303, %s20, 1
      %s305 = smul.addr %s304, 4
      %s306 = smul.addr %s305, 4
      %s307 = scalar_lea.vmem %s0, %s306
      %p308 = pneg %p41
      %p309 = pneg %p38
      %p310 = scmp.lt.s32.totalorder %s20, 1
      %s311 = scalar_select %p310, %s20, 1
      %s312 = smul.addr %s311, 2
      %s313 = smul.addr %s312, 4
      %s314 = scalar_lea.vmem %s1, %s313
      %p315 = pneg %p67
      %p316 = pneg %p64
      %p317 = pneg %p88
      %p318 = pneg %p85
      %p319 = pneg %p109
      %p320 = pneg %p106
      %p321 = pneg %p130
      %p322 = pneg %p127
      %p323 = pneg %p151
      %p324 = pneg %p148
      %p325 = pneg %p172
      %p326 = pneg %p169
      %p327 = pneg %p193
      %p328 = pneg %p190
      %p329 = pneg %p214
      %p330 = pneg %p211
      %p331 = pneg %p240
      %p332 = pneg %p237
      %p333 = scmp.lt.s32.totalorder %s20, 1
      %s334 = scalar_select %p333, %s20, 1
      %s335 = smul.addr %s334, 2
      %s336 = smul.addr %s335, 4
      %s337 = scalar_lea.vmem %s9, %s336
      %p338 = scmp.lt.s32.totalorder %s20, 1
      %s339 = scalar_select %p338, %s20, 1
      %s340 = smul.addr %s339, 4
      %s341 = smul.addr %s340, 4
      %s342 = scalar_lea.vmem %s0, %s341
      %p343 = scmp.lt.s32.totalorder %s20, 1
      %s344 = scalar_select %p343, %s20, 1
      %s345 = smul.addr %s344, 2
      %s346 = smul.addr %s345, 4
      %s347 = scalar_lea.vmem %s1, %s346
      %p348 = scmp.lt.s32.totalorder %s20, 1
      %s349 = scalar_select %p348, %s20, 1
      %s350 = smul.addr %s349, 2
      %s351 = smul.addr %s350, 4
      %s352 = scalar_lea.vmem %s9, %s351
      %v354 = vld [vmem:[%s2] sm:$0xf]
      %v355 = vld [vmem:[%s2 + $0x4] sm:$0xf]
      %v356 = vld [vmem:[%s342] sm:$0xf]
      %v357 = vld [vmem:[%s342 + $0x4] sm:$0xf]
      %v358 = vld [vmem:[%s342 + $0x8] sm:$0xf]
      %v359 = vld [vmem:[%s342 + $0xc] sm:$0xf]
      %v360 = vld [vmem:[%s3] sm:$0xff]
      %v361 = vld [vmem:[%s3 + $0x8] sm:$0xff]
      %v362 = vld [vmem:[%s4] sm:$0x1]
      %364 = vset.pattern.permute.xlu0 0
      %365 = vperm.xlu0 %364, %v360
      %v366 = vpop.permute.xlu0 %365
      %369 = vset.pattern.permute.xlu0 0
      %370 = vperm.xlu0 %369, %v361
      %v371 = vpop.permute.xlu0 %370
      %v374 = vlaneseq
      %v375 = vshrl.u32 %v374, 7
      %v376 = vsub.s32 0, %v375
      %v377 = vrot.slane %v362, %v376
      %v379 = vmul.f32 %v366, %v377
      %v380 = vmul.f32 %v371, %v377
      %v383 = vunpack.c.l.b16 %v354
      %v384 = vunpack.c.l.b16 %v355
      %v385 = vpack.c.b16 %v384, %v383
      %v390 = vunpack.c.l.b16 %v356
      %v391 = vunpack.c.l.b16 %v357
      %v392 = vunpack.c.l.b16 %v358
      %v393 = vunpack.c.l.b16 %v359
      %v394 = vpack.c.b16 %v391, %v390
      %v395 = vpack.c.b16 %v393, %v392
      %vm398 = vcmask 261120
      %v400 = vsel %vm398, %v385, 0
      %402 = vmatprep.subr.bf16.mxu0 0
      %403 = vmatpush1.bf16.msra.mxu0 0
      %404 = vmatprep.subr.bf16.mxu0 0
      %405 = vmatpush1.bf16.msra.mxu0 0
      %406 = vmatprep.subr.bf16.mxu0 0
      %407 = vmatpush1.bf16.msra.mxu0 0
      %408 = vmatprep.subr.bf16.mxu0 0
      %409 = vmatpush1.bf16.msra.mxu0 0
      %410 = vmatprep.subr.bf16.mxu0 0
      %411 = vmatpush1.bf16.msra.mxu0 0
      %412 = vmatprep.subr.bf16.mxu0 0
      %413 = vmatpush1.bf16.msra.mxu0 0
      %414 = vmatprep.subr.bf16.mxu0 0
      %415 = vmatpush1.bf16.msra.mxu0 %v395
      %416 = vmatprep.subr.bf16.mxu0 0
      %417 = vmatpush1.bf16.msra.mxu0 %v394
      %418 = vmatprep.subr.bf16.mxu0 0
      %419 = vmatpush2.bf16.msra.mxu0 0
      %420 = vmatprep.subr.bf16.mxu0 0
      %421 = vmatpush2.bf16.msra.mxu0 0
      %422 = vmatprep.subr.bf16.mxu0 0
      %423 = vmatpush2.bf16.msra.mxu0 0
      %424 = vmatprep.subr.bf16.mxu0 0
      %425 = vmatpush2.bf16.msra.mxu0 0
      %426 = vmatprep.subr.bf16.mxu0 0
      %427 = vmatpush2.bf16.msra.mxu0 0
      %428 = vmatprep.subr.bf16.mxu0 0
      %429 = vmatpush2.bf16.msra.mxu0 0
      %430 = vmatprep.subr.bf16.mxu0 0
      %431 = vmatpush2.bf16.msra.mxu0 0
      %432 = vmatprep.subr.bf16.mxu0 0
      %433 = vmatpush2.bf16.msra.mxu0 0
      %434 = vmatprep.mubr.bf16.mxu0 0
      %435 = vmatmul.mubr.bf16.gmra.mxu0 %v400
      %v436 = vpop.f32.mrf.mxu0
      %v437 = vadd.f32 %v379, %v436
      %v438 = vpop.f32.mrf.mxu0
      %v439 = vpop.f32.mrf.mxu0
      %v440 = vadd.f32 %v380, %v439
      %v441 = vpop.f32.mrf.mxu0
      %442 = vdwg.mxu0
      %v443 = vpack.c.bf16 %v440, %v437
      %445 = vrot.lane.b32.xlu0 %v443, 127
      %v446 = vpop.permute.xlu0 %445
      %448 = vrot.lane.b32.xlu0 %v443, 126
      %v449 = vpop.permute.xlu0 %448
      %451 = vrot.lane.b32.xlu0 %v443, 118
      %v452 = vpop.permute.xlu0 %451
      %454 = vrot.lane.b32.xlu0 %v443, 117
      %v455 = vpop.permute.xlu0 %454
      %457 = vrot.lane.b32.xlu0 %v443, 116
      %v458 = vpop.permute.xlu0 %457
      %460 = vrot.lane.b32.xlu0 %v443, 108
      %v461 = vpop.permute.xlu0 %460
      %463 = vrot.lane.b32.xlu0 %v443, 107
      %v464 = vpop.permute.xlu0 %463
      %466 = vrot.lane.b32.xlu0 %v443, 106
      %v467 = vpop.permute.xlu0 %466
      %v469 = vld [vmem:[%s347] sm:$0xf]
      %v470 = vld [vmem:[%s347 + $0x4] sm:$0xf]
      %v473 = vunpack.c.l.b16 %v469
      %v474 = vunpack.c.l.b16 %v470
      %v475 = vpack.c.b16 %v474, %v473
      %477 = vrot.lane.b32.xlu0 %v475, 127
      %v478 = vpop.permute.xlu0 %477
      %480 = vrot.lane.b32.xlu0 %v475, 126
      %v481 = vpop.permute.xlu0 %480
      %483 = vrot.lane.b32.xlu0 %v475, 118
      %v484 = vpop.permute.xlu0 %483
      %486 = vrot.lane.b32.xlu0 %v475, 117
      %v487 = vpop.permute.xlu0 %486
      %489 = vrot.lane.b32.xlu0 %v475, 116
      %v490 = vpop.permute.xlu0 %489
      %492 = vrot.lane.b32.xlu0 %v475, 108
      %v493 = vpop.permute.xlu0 %492
      %495 = vrot.lane.b32.xlu0 %v475, 107
      %v496 = vpop.permute.xlu0 %495
      %498 = vrot.lane.b32.xlu0 %v475, 106
      %v499 = vpop.permute.xlu0 %498
      %v501 = vld [vmem:[%s5] sm:$0xff]
      %v502 = vld [vmem:[%s5 + $0x8] sm:$0xff]
      %v503 = vld [vmem:[%s6] sm:$0xff]
      %v504 = vld [vmem:[%s6 + $0x8] sm:$0xff]
      %v507 = vunpack.c.l.b16 %v503
      %v508 = vunpack.c.h.b16 %v503
      %v509 = vunpack.c.l.b16 %v504
      %v510 = vunpack.c.h.b16 %v504
      %v511 = vpack.c.b16 %v509, %v507
      %v512 = vpack.c.b16 %v510, %v508
      %vm514 = vcmask 130048
      %v516 = vsel %vm514, %v512, 0
      %518 = vmatprep.subr.bf16.mxu0 0
      %519 = vmatpush1.bf16.msra.mxu0 %v496
      %520 = vmatprep.subr.bf16.mxu0 0
      %521 = vmatpush1.bf16.msra.mxu0 %v493
      %522 = vmatprep.subr.bf16.mxu0 0
      %523 = vmatpush1.bf16.msra.mxu0 %v490
      %524 = vmatprep.subr.bf16.mxu0 0
      %525 = vmatpush1.bf16.msra.mxu0 %v487
      %526 = vmatprep.subr.bf16.mxu0 0
      %527 = vmatpush1.bf16.msra.mxu0 %v484
      %528 = vmatprep.subr.bf16.mxu0 0
      %529 = vmatpush1.bf16.msra.mxu0 %v481
      %530 = vmatprep.subr.bf16.mxu0 0
      %531 = vmatpush1.bf16.msra.mxu0 %v478
      %532 = vmatprep.subr.bf16.mxu0 0
      %533 = vmatpush1.bf16.msra.mxu0 %v475
      %534 = vmatprep.subr.bf16.mxu0 0
      %535 = vmatpush2.bf16.msra.mxu0 0
      %536 = vmatprep.subr.bf16.mxu0 0
      %537 = vmatpush2.bf16.msra.mxu0 0
      %538 = vmatprep.subr.bf16.mxu0 0
      %539 = vmatpush2.bf16.msra.mxu0 0
      %540 = vmatprep.subr.bf16.mxu0 0
      %541 = vmatpush2.bf16.msra.mxu0 0
      %542 = vmatprep.subr.bf16.mxu0 0
      %543 = vmatpush2.bf16.msra.mxu0 0
      %544 = vmatprep.subr.bf16.mxu0 0
      %545 = vmatpush2.bf16.msra.mxu0 0
      %546 = vmatprep.subr.bf16.mxu0 0
      %547 = vmatpush2.bf16.msra.mxu0 0
      %548 = vmatprep.subr.bf16.mxu0 0
      %549 = vmatpush2.bf16.msra.mxu0 %v499
      %550 = vmatprep.mubr.bf16.mxu0 %v516
      %551 = vmatmul.mubr.bf16.gmra.mxu0 %v511
      %v552 = vpop.f32.mrf.mxu0
      %v553 = vadd.f32 0.0, %v552
      %v554 = vpop.f32.mrf.mxu0
      %v555 = vpop.f32.mrf.mxu0
      %v556 = vadd.f32 0.0, %v555
      %v557 = vpop.f32.mrf.mxu0
      %558 = vdwg.mxu0
      %v561 = vunpack.c.l.b16 %v501
      %v562 = vunpack.c.h.b16 %v501
      %v563 = vunpack.c.l.b16 %v502
      %v564 = vunpack.c.h.b16 %v502
      %v565 = vpack.c.b16 %v563, %v561
      %v566 = vpack.c.b16 %v564, %v562
      %v569 = vsel %vm514, %v566, 0
      %571 = vmatprep.subr.bf16.mxu0 0
      %572 = vmatpush1.bf16.msra.mxu0 %v464
      %573 = vmatprep.subr.bf16.mxu0 0
      %574 = vmatpush1.bf16.msra.mxu0 %v461
      %575 = vmatprep.subr.bf16.mxu0 0
      %576 = vmatpush1.bf16.msra.mxu0 %v458
      %577 = vmatprep.subr.bf16.mxu0 0
      %578 = vmatpush1.bf16.msra.mxu0 %v455
      %579 = vmatprep.subr.bf16.mxu0 0
      %580 = vmatpush1.bf16.msra.mxu0 %v452
      %581 = vmatprep.subr.bf16.mxu0 0
      %582 = vmatpush1.bf16.msra.mxu0 %v449
      %583 = vmatprep.subr.bf16.mxu0 0
      %584 = vmatpush1.bf16.msra.mxu0 %v446
      %585 = vmatprep.subr.bf16.mxu0 0
      %586 = vmatpush1.bf16.msra.mxu0 %v443
      %587 = vmatprep.subr.bf16.mxu0 0
      %588 = vmatpush2.bf16.msra.mxu0 0
      %589 = vmatprep.subr.bf16.mxu0 0
      %590 = vmatpush2.bf16.msra.mxu0 0
      %591 = vmatprep.subr.bf16.mxu0 0
      %592 = vmatpush2.bf16.msra.mxu0 0
      %593 = vmatprep.subr.bf16.mxu0 0
      %594 = vmatpush2.bf16.msra.mxu0 0
      %595 = vmatprep.subr.bf16.mxu0 0
      %596 = vmatpush2.bf16.msra.mxu0 0
      %597 = vmatprep.subr.bf16.mxu0 0
      %598 = vmatpush2.bf16.msra.mxu0 0
      %599 = vmatprep.subr.bf16.mxu0 0
      %600 = vmatpush2.bf16.msra.mxu0 0
      %601 = vmatprep.subr.bf16.mxu0 0
      %602 = vmatpush2.bf16.msra.mxu0 %v467
      %603 = vmatprep.mubr.bf16.mxu0 %v569
      %604 = vmatmul.mubr.bf16.gmra.mxu0 %v565
      %v605 = vpop.f32.mrf.mxu0
      %v606 = vadd.f32 %v553, %v605
      %v607 = vpop.f32.mrf.mxu0
      %v608 = vpop.f32.mrf.mxu0
      %v609 = vadd.f32 %v556, %v608
      %v610 = vpop.f32.mrf.mxu0
      %611 = vdwg.mxu0
      %v612 = vld [vmem:[%s7] sm:$0xff]
      %v613 = vld [vmem:[%s7 + $0x8] sm:$0xff]
      %615 = vset.pattern.permute.xlu0 0
      %616 = vperm.xlu0 %615, %v612
      %v617 = vpop.permute.xlu0 %616
      %620 = vset.pattern.permute.xlu0 0
      %621 = vperm.xlu0 %620, %v613
      %v622 = vpop.permute.xlu0 %621
      %v624 = vadd.f32 %v606, %v617
      %v625 = vadd.f32 %v609, %v622
      %v626 = vld [vmem:[%s8] sm:$0x1]
      %v628 = vlaneseq
      %v629 = vshrl.u32 %v628, 7
      %v630 = vsub.s32 0, %v629
      %v631 = vrot.slane %v626, %v630
      %v633 = vmul.f32 %v624, %v631
      %v634 = vmul.f32 %v625, %v631
      %vm635 = vcmask 637952
      %v636 = vsel %vm635, %v633, 0.0
      %637 = vadd.xlane.f32.xlu0 %v636
      %v638 = vpop.xlane.xlu0 %637
      %v639 = vsel %vm635, %v634, 0.0
      %640 = vadd.xlane.f32.xlu0 %v639
      %v641 = vpop.xlane.xlu0 %640
      %v642 = vmul.f32 %v638, 0.015625
      %v643 = vmul.f32 %v641, 0.015625
      %v644 = vsub.f32 %v624, %v642
      %v645 = vsub.f32 %v625, %v643
      %v646 = vmul.f32 %v644, %v631
      %v647 = vmul.f32 %v645, %v631
      %v648 = vmul.f32 %v646, %v646
      %v649 = vmul.f32 %v647, %v647
      %v650 = vsel %vm635, %v648, 0.0
      %651 = vadd.xlane.f32.xlu0 %v650
      %v652 = vpop.xlane.xlu0 %651
      %v653 = vsel %vm635, %v649, 0.0
      %654 = vadd.xlane.f32.xlu0 %v653
      %v655 = vpop.xlane.xlu0 %654
      %v656 = vmul.f32 %v652, 0.015625
      %v657 = vmul.f32 %v655, 0.015625
      %v658 = vadd.f32 %v656, 1e-05
      %v659 = vadd.f32 %v657, 1e-05
      %v660 = vrsqrt.pop %v658
      %v661 = vrsqrt.pop %v659
      %v662 = vmul.f32 %v646, %v660
      %v663 = vmul.f32 %v647, %v661
      %vm664 = vcmp.ge.f32.partialorder %v662, 0.0
      %vm665 = vcmp.ge.f32.partialorder %v663, 0.0
      %v666 = vmul.f32 %v662, 0.2
      %v667 = vmul.f32 %v663, 0.2
      %v668 = vsel %vm664, %v662, %v666
      %v669 = vsel %vm665, %v663, %v667
      %vm670 = vcmask 84992
      %671 = vst.msk [vmem:[%s352] sm:$0xf] %vm670, 0
      %672 = vst.msk [vmem:[%s352 + $0x4] sm:$0xf] %vm670, 0
      %v673 = vpack.c.bf16 %v669, %v668
      %v675 = vunpack.c.l.b16 %v673
      %v676 = vunpack.c.h.b16 %v673
      %v677 = vpack.c.b16 %v675, %v675
      %v678 = vpack.c.b16 %v676, %v676
      %679 = vrot.lane.b32.xlu0 %v677, 11
      %v680 = vpop.permute.xlu0 %679
      %681 = vrot.lane.b32.xlu0 %v678, 11
      %v682 = vpop.permute.xlu0 %681
      %vm685 = vcmask 724056
      %686 = vst.msk [vmem:[%s352] sm:$0xf] %vm685, %v680
      %687 = vst.msk [vmem:[%s352 + $0x4] sm:$0xf] %vm685, %v682
      %vm688 = vcmask 814792
      %689 = vst.msk [vmem:[%s352] sm:$0xf] %vm688, 0
      %690 = vst.msk [vmem:[%s352 + $0x4] sm:$0xf] %vm688, 0
      %p691 = scmp.lt.s32.totalorder %s20, 1
      %s692 = scalar_select %p691, %s20, 1
      %s693 = smul.addr %s692, 2
      %s694 = smul.addr %s693, 4
      %s695 = scalar_lea.vmem %s9, %s694
      // Predicated region
      $region57: #{unet_forward.9} parent=55 // pred_check
        %p696 = pneg %p237
      $region58: #{unet_forward.9} parent=55 // pred_check_branch
        %698 = sbr.rel (%p696) target = $region60
      $region59: #{unet_forward.9} parent=55 // pred_region
        _
      $region60: #{unet_forward.9} parent=55 // pred_fallthru
        _
    $region56: #{unet_forward.9} parent=5 // pred_fallthru
      _
    %p699 = scmp.le.s32.totalorder 2, %s15
    // Predicated region
    $region61: #{unet_forward.9} parent=5 // pred_check
      %p700 = pneg %p699
    $region62: #{unet_forward.9} parent=5 // pred_check_branch
      %702 = sbr.rel (%p700) target = $region64
    $region63: #{unet_forward.9} parent=5 // pred_region
      %s703 = ssub.s32 %s15, 2
      // Predicated region
      $region65: #{unet_forward.9} parent=63 // pred_check
        %p704 = pneg %p243
      $region66: #{unet_forward.9} parent=63 // pred_check_branch
        %706 = sbr.rel (%p704) target = $region68
      $region67: #{unet_forward.9} parent=63 // pred_region
        %p707 = scmp.lt.s32.totalorder %s21, 1
        %s708 = scalar_select %p707, %s21, 1
        %s709 = smul.addr %s708, 2
        %s710 = smul.addr %s709, 4
        %s711 = scalar_lea.vmem %s9, %s710
      $region68: #{unet_forward.9} parent=63 // pred_fallthru
        _
    $region64: #{unet_forward.9} parent=5 // pred_fallthru
      _
  $region6: #{unet_forward.9} parent=0 // loop_footer
    %s19 = sadd.s32 1, %s15
  $region7: #{unet_forward.9} parent=0 // loop_footer_branch
    %14 = sbr.rel target = $region3
  $region8: #{unet_forward.9} parent=0 // loop_exit
    _

// kernel: unet_forward.11
$region0: #{unet_forward.11}
  #allocation0 [shape = 'u32[]', space=smem, size = 0x4, offset = 0x4, fixed_abs, tag = 'smem constant byte address 0x4 - core index']
  #allocation1 [shape = 'u32[144,128]{1,0:T(1,128)}', space=vmem, size = 0x12000, scoped, tag = 'internal scratch']
  %s0 = inlined_call_operand.vmem [shape: bf16[2,8,324], index: 0, kind: input, shape index: {}]
  %s1 = inlined_call_operand.vmem [shape: bf16[2,8], index: 1, kind: input, shape index: {}]
  %s2 = inlined_call_operand.vmem [shape: f32[2,1], index: 2, kind: input, shape index: {}]
  %s3 = inlined_call_operand.vmem [shape: f32[2,2,324], index: 3, kind: output, shape index: {}]
  %s4 = sld [smem:[#allocation0]]
  $region45: #{unet_forward.11} parent=0
    _
  %s6 = ssub.s32 1, %s4
  %s7 = scalar_select 0, %s6, %s4
  loop: start=0, step=1, limit=4
  $region2: #{unet_forward.11} parent=0 // loop_pre_header
    _
  $region3: #{unet_forward.11} parent=0 // loop_header
    %s9 = sphi 0, %s13
    %p10 = scmp.ge.s32.totalorder %s9, 4
    %s19 = sphi 0, %s21
    %s22 = sphi 0, %s19
    %s23 = sphi 0, %s22
    %s39 = sphi 0, %s23
    %s43 = sphi 0, %s43
    %s45 = sphi 0, %s43
    %s46 = sphi 0, %s45
    %s60 = sphi 0, %s46
    %s64 = sphi 0, %s64
    %s66 = sphi 0, %s64
    %s67 = sphi 0, %s66
    %s81 = sphi 0, %s67
    %s87 = sphi 0, %s89
    %s90 = sphi 0, %s87
    %s91 = sphi 0, %s90
    %s107 = sphi 0, %s91
  $region4: #{unet_forward.11} parent=0 // loop_header_branch
    %12 = sbr.rel (%p10) target = $region8
  $region5: #{unet_forward.11} parent=0 // loop_body
    %s14 = ssub.s32 %s9, 1
    %s15 = ssub.s32 %s9, 2
    %s16 = sadd.s32 %s9, 1
    %s17 = ssub.s32 %s9, %s16
    %p18 = scmp.eq.s32.totalorder %s17, 0
    %s20 = sadd.s32 %s19, 1
    %s21 = scalar_select %p18, %s19, %s20
    %p24 = pneg %p18
    %p25 = scmp.eq.s32.totalorder %s9, 1
    %p26 = por %p24, %p25
    %p27 = scmp.ne.s32.totalorder %s19, %s22
    %p28 = scmp.eq.s32.totalorder %s9, 0
    %p29 = por %p27, %p28
    %p30 = scmp.ne.s32.totalorder %s19, %s22
    %p31 = scmp.eq.s32.totalorder %s14, 1
    %p32 = por %p30, %p31
    %p33 = scmp.ne.s32.totalorder %s22, %s23
    %p34 = scmp.eq.s32.totalorder %s14, 0
    %p35 = por %p33, %p34
    %p36 = scmp.ne.s32.totalorder %s22, %s23
    %p37 = scmp.eq.s32.totalorder %s15, 1
    %p38 = por %p36, %p37
    %p40 = scmp.ne.s32.totalorder %s23, %s39
    %p41 = scmp.eq.s32.totalorder %s15, 0
    %p42 = por %p40, %p41
    %s44 = sadd.s32 %s43, 1
    %p47 = scmp.eq.s32.totalorder %s9, 1
    %p48 = scmp.ne.s32.totalorder %s43, %s45
    %p49 = scmp.eq.s32.totalorder %s9, 0
    %p50 = por %p48, %p49
    %p51 = scmp.ne.s32.totalorder %s43, %s45
    %p52 = scmp.eq.s32.totalorder %s14, 1
    %p53 = por %p51, %p52
    %p54 = scmp.ne.s32.totalorder %s45, %s46
    %p55 = scmp.eq.s32.totalorder %s14, 0
    %p56 = por %p54, %p55
    %p57 = scmp.ne.s32.totalorder %s45, %s46
    %p58 = scmp.eq.s32.totalorder %s15, 1
    %p59 = por %p57, %p58
    %p61 = scmp.ne.s32.totalorder %s46, %s60
    %p62 = scmp.eq.s32.totalorder %s15, 0
    %p63 = por %p61, %p62
    %s65 = sadd.s32 %s64, 1
    %p68 = scmp.eq.s32.totalorder %s9, 1
    %p69 = scmp.ne.s32.totalorder %s64, %s66
    %p70 = scmp.eq.s32.totalorder %s9, 0
    %p71 = por %p69, %p70
    %p72 = scmp.ne.s32.totalorder %s64, %s66
    %p73 = scmp.eq.s32.totalorder %s14, 1
    %p74 = por %p72, %p73
    %p75 = scmp.ne.s32.totalorder %s66, %s67
    %p76 = scmp.eq.s32.totalorder %s14, 0
    %p77 = por %p75, %p76
    %p78 = scmp.ne.s32.totalorder %s66, %s67
    %p79 = scmp.eq.s32.totalorder %s15, 1
    %p80 = por %p78, %p79
    %p82 = scmp.ne.s32.totalorder %s67, %s81
    %p83 = scmp.eq.s32.totalorder %s15, 0
    %p84 = por %p82, %p83
    %s85 = ssub.s32 %s9, %s16
    %p86 = scmp.eq.s32.totalorder %s85, 0
    %s88 = sadd.s32 %s87, 1
    %s89 = scalar_select %p86, %s87, %s88
    %p92 = pneg %p86
    %p93 = scmp.eq.s32.totalorder %s9, 1
    %p94 = por %p92, %p93
    %p95 = scmp.ne.s32.totalorder %s87, %s90
    %p96 = scmp.eq.s32.totalorder %s9, 0
    %p97 = por %p95, %p96
    %p98 = scmp.ne.s32.totalorder %s87, %s90
    %p99 = scmp.eq.s32.totalorder %s14, 1
    %p100 = por %p98, %p99
    %p101 = scmp.ne.s32.totalorder %s90, %s91
    %p102 = scmp.eq.s32.totalorder %s14, 0
    %p103 = por %p101, %p102
    %p104 = scmp.ne.s32.totalorder %s90, %s91
    %p105 = scmp.eq.s32.totalorder %s15, 1
    %p106 = por %p104, %p105
    %p108 = scmp.ne.s32.totalorder %s91, %s107
    %p109 = scmp.eq.s32.totalorder %s15, 0
    %p110 = por %p108, %p109
    %p111 = scmp.le.s32.totalorder 1, %s9
    %p112 = scmp.lt.s32.totalorder %s9, 3
    %p113 = pnand %p111, %p112
    %p114 = pneg %p113
    // Predicated region
    $region9: #{unet_forward.11} parent=5 // pred_check
      _
    $region10: #{unet_forward.11} parent=5 // pred_check_branch
      %116 = sbr.rel (%p113) target = $region12
    $region11: #{unet_forward.11} parent=5 // pred_region
      %s117 = ssub.s32 %s9, 1
      // Predicated region
      $region13: #{unet_forward.11} parent=11 // pred_check
        %p118 = pneg %p56
      $region14: #{unet_forward.11} parent=11 // pred_check_branch
        %120 = sbr.rel (%p118) target = $region16
      $region15: #{unet_forward.11} parent=11 // pred_region
        _
      $region16: #{unet_forward.11} parent=11 // pred_fallthru
        _
      // Predicated region
      $region17: #{unet_forward.11} parent=11 // pred_check
        %p121 = pneg %p77
      $region18: #{unet_forward.11} parent=11 // pred_check_branch
        %123 = sbr.rel (%p121) target = $region20
      $region19: #{unet_forward.11} parent=11 // pred_region
        _
      $region20: #{unet_forward.11} parent=11 // pred_fallthru
        _
    $region12: #{unet_forward.11} parent=5 // pred_fallthru
      _
    %p124 = scmp.lt.s32.totalorder %s9, 2
    // Predicated region
    $region21: #{unet_forward.11} parent=5 // pred_check
      %p125 = pneg %p124
    $region22: #{unet_forward.11} parent=5 // pred_check_branch
      %127 = sbr.rel (%p125) target = $region24
    $region23: #{unet_forward.11} parent=5 // pred_region
      // Predicated region
      $region25: #{unet_forward.11} parent=23 // pred_check
        %p128 = pneg %p29
      $region26: #{unet_forward.11} parent=23 // pred_check_branch
        %130 = sbr.rel (%p128) target = $region28
      $region27: #{unet_forward.11} parent=23 // pred_region
        %p131 = scmp.lt.s32.totalorder %s9, 1
        %s132 = scalar_select %p131, %s9, 1
        %s133 = smul.addr %s132, 3
        %s134 = smul.addr %s133, 4
        %s135 = scalar_lea.vmem %s0, %s134
      $region28: #{unet_forward.11} parent=23 // pred_fallthru
        _
    $region24: #{unet_forward.11} parent=5 // pred_fallthru
      _
    %p136 = scmp.le.s32.totalorder 1, %s9
    %p137 = scmp.lt.s32.totalorder %s9, 3
    %p138 = pnand %p136, %p137
    %p139 = pneg %p138
    // Predicated region
    $region29: #{unet_forward.11} parent=5 // pred_check
      _
    $region30: #{unet_forward.11} parent=5 // pred_check_branch
      %141 = sbr.rel (%p138) target = $region32
    $region31: #{unet_forward.11} parent=5 // pred_region
      %s142 = ssub.s32 %s9, 1
      %p143 = scmp.lt.s32.totalorder %s14, 1
      %s144 = scalar_select %p143, %s14, 1
      %s145 = smul.addr %s144, 3
      %s146 = smul.addr %s145, 4
      %s147 = scalar_lea.vmem %s0, %s146
      %p148 = pneg %p35
      %p149 = pneg %p32
      %p150 = pneg %p56
      %p151 = pneg %p53
      %p152 = pneg %p77
      %p153 = pneg %p74
      %p154 = pneg %p103
      %p155 = pneg %p100
      %p156 = scmp.lt.s32.totalorder %s14, 1
      %s157 = scalar_select %p156, %s14, 1
      %s158 = smul.addr %s157, 3
      %s159 = smul.addr %s158, 2
      %s160 = scalar_lea.vmem %s3, %s159
      %p161 = scmp.lt.s32.totalorder %s14, 1
      %s162 = scalar_select %p161, %s14, 1
      %s163 = smul.addr %s162, 3
      %s164 = smul.addr %s163, 4
      %s165 = scalar_lea.vmem %s0, %s164
      %p166 = scmp.lt.s32.totalorder %s14, 1
      %s167 = scalar_select %p166, %s14, 1
      %s168 = smul.addr %s167, 3
      %s169 = smul.addr %s168, 2
      %s170 = scalar_lea.vmem %s3, %s169
      %v172 = vld [vmem:[%s1] sm:$0x1]
      %v173 = vld [vmem:[%s165] sm:$0xff]
      %v174 = vld [vmem:[%s165 + $0x8] sm:$0xf]
      %v175 = vld [vmem:[%s2] sm:$0x3]
      %177 = vset.pattern.permute.xlu0 0
      %178 = vperm.xlu0 %177, %v175
      %v179 = vpop.permute.xlu0 %178
      %v183 = vunpack.c.l.b16 %v173
      %v184 = vunpack.c.h.b16 %v173
      %v185 = vunpack.c.l.b16 %v174
      %v186 = vpack.c.b16 %v183, %v183
      %v187 = vpack.c.b16 %v184, %v184
      %v188 = vpack.c.b16 %v185, %v185
      %vm189 = vcmask 64512
      %v191 = vsel %vm189, %v172, 0
      %vm193 = vcmask 1043456
      %v195 = vsel %vm193, %v186, 0
      %v198 = vsel %vm193, %v187, 0
      %v201 = vsel %vm193, %v188, 0
      %203 = vmatprep.subr.bf16.mxu0 0
      %204 = vmatpush1.bf16.msra.mxu0 0
      %205 = vmatprep.subr.bf16.mxu0 0
      %206 = vmatpush1.bf16.msra.mxu0 0
      %207 = vmatprep.subr.bf16.mxu0 0
      %208 = vmatpush1.bf16.msra.mxu0 0
      %209 = vmatprep.subr.bf16.mxu0 0
      %210 = vmatpush1.bf16.msra.mxu0 0
      %211 = vmatprep.subr.bf16.mxu0 0
      %212 = vmatpush1.bf16.msra.mxu0 0
      %213 = vmatprep.subr.bf16.mxu0 0
      %214 = vmatpush1.bf16.msra.mxu0 0
      %215 = vmatprep.subr.bf16.mxu0 0
      %216 = vmatpush1.bf16.msra.mxu0 0
      %217 = vmatprep.subr.bf16.mxu0 %v198
      %218 = vmatpush1.bf16.msra.mxu0 %v195
      %219 = vmatprep.subr.bf16.mxu0 0
      %220 = vmatpush2.bf16.msra.mxu0 0
      %221 = vmatprep.subr.bf16.mxu0 0
      %222 = vmatpush2.bf16.msra.mxu0 0
      %223 = vmatprep.subr.bf16.mxu0 0
      %224 = vmatpush2.bf16.msra.mxu0 0
      %225 = vmatprep.subr.bf16.mxu0 0
      %226 = vmatpush2.bf16.msra.mxu0 0
      %227 = vmatprep.subr.bf16.mxu0 0
      %228 = vmatpush2.bf16.msra.mxu0 0
      %229 = vmatprep.subr.bf16.mxu0 0
      %230 = vmatpush2.bf16.msra.mxu0 0
      %231 = vmatprep.subr.bf16.mxu0 0
      %232 = vmatpush2.bf16.msra.mxu0 0
      %233 = vmatprep.subr.bf16.mxu0 0
      %234 = vmatpush2.bf16.msra.mxu0 0
      %235 = vmatprep.mubr.bf16.mxu0 0
      %236 = vmatmul.mubr.bf16.gmra.mxu0 %v191
      %v237 = vpop.f32.mrf.mxu0
      %v238 = vadd.f32 %v179, %v237
      %v239 = vpop.f32.mrf.mxu0
      %v240 = vadd.f32 %v179, %v239
      %v241 = vpop.f32.mrf.mxu0
      %v242 = vpop.f32.mrf.mxu0
      %243 = vdwg.mxu0
      %244 = vmatprep.subr.bf16.mxu0 0
      %245 = vmatpush1.bf16.msra.mxu0 0
      %246 = vmatprep.subr.bf16.mxu0 0
      %247 = vmatpush1.bf16.msra.mxu0 0
      %248 = vmatprep.subr.bf16.mxu0 0
      %249 = vmatpush1.bf16.msra.mxu0 0
      %250 = vmatprep.subr.bf16.mxu0 0
      %251 = vmatpush1.bf16.msra.mxu0 0
      %252 = vmatprep.subr.bf16.mxu0 0
      %253 = vmatpush1.bf16.msra.mxu0 0
      %254 = vmatprep.subr.bf16.mxu0 0
      %255 = vmatpush1.bf16.msra.mxu0 0
      %256 = vmatprep.subr.bf16.mxu0 0
      %257 = vmatpush1.bf16.msra.mxu0 0
      %258 = vmatprep.subr.bf16.mxu0 0
      %259 = vmatpush1.bf16.msra.mxu0 %v201
      %260 = vmatprep.subr.bf16.mxu0 0
      %261 = vmatpush2.bf16.msra.mxu0 0
      %262 = vmatprep.subr.bf16.mxu0 0
      %263 = vmatpush2.bf16.msra.mxu0 0
      %264 = vmatprep.subr.bf16.mxu0 0
      %265 = vmatpush2.bf16.msra.mxu0 0
      %266 = vmatprep.subr.bf16.mxu0 0
      %267 = vmatpush2.bf16.msra.mxu0 0
      %268 = vmatprep.subr.bf16.mxu0 0
      %269 = vmatpush2.bf16.msra.mxu0 0
      %270 = vmatprep.subr.bf16.mxu0 0
      %271 = vmatpush2.bf16.msra.mxu0 0
      %272 = vmatprep.subr.bf16.mxu0 0
      %273 = vmatpush2.bf16.msra.mxu0 0
      %274 = vmatprep.subr.bf16.mxu0 0
      %275 = vmatpush2.bf16.msra.mxu0 0
      %276 = vmatprep.mubr.bf16.mxu0 0
      %277 = vmatmul.mubr.bf16.gmra.mxu0 %v191
      %v278 = vpop.f32.mrf.mxu0
      %v279 = vadd.f32 %v179, %v278
      %v280 = vpop.f32.mrf.mxu0
      %v281 = vpop.f32.mrf.mxu0
      %v282 = vpop.f32.mrf.mxu0
      %283 = vdwg.mxu0
      %v287 = vcombine.low %v238, %v240
      %v289 = vunpack.c.l.s4 1983009808
      %v290 = vunpack.c.0.s8 %v289
      %v291 = vlaneseq
      %v292 = vshrl.u32 %v291, 7
      %v293 = vsub.s32 %v290, %v292
      %v294 = vrot.slane %v287, %v293
      %v296 = vunpack.c.l.s4 1983009808
      %v297 = vunpack.c.0.s8 %v296
      %v298 = vlaneseq
      %v299 = vshrl.u32 %v298, 7
      %v300 = vsub.s32 %v297, %v299
      %v301 = vrot.slane %v279, %v300
      %v302 = vcombine.low %v294, %v301
      %vm304 = vcmask 1041408
      %vm305 = vcmask 1043458
      %vm306 = vmor %vm305, %vm304
      %vm307 = vcmask 553988
      %vm308 = vmor %vm307, %vm306
      %309 = vst.msk [vmem:[%s170] sm:$0x3f] %vm308, %v302
      %p310 = scmp.lt.s32.totalorder %s14, 1
      %s311 = scalar_select %p310, %s14, 1
      %s312 = smul.addr %s311, 3
      %s313 = smul.addr %s312, 2
      %s314 = scalar_lea.vmem %s3, %s313
      // Predicated region
      $region33: #{unet_forward.11} parent=31 // pred_check
        %p315 = pneg %p100
      $region34: #{unet_forward.11} parent=31 // pred_check_branch
        %317 = sbr.rel (%p315) target = $region36
      $region35: #{unet_forward.11} parent=31 // pred_region
        _
      $region36: #{unet_forward.11} parent=31 // pred_fallthru
        _
    $region32: #{unet_forward.11} parent=5 // pred_fallthru
      _
    %p318 = scmp.le.s32.totalorder 2, %s9
    // Predicated region
    $region37: #{unet_forward.11} parent=5 // pred_check
      %p319 = pneg %p318
    $region38: #{unet_forward.11} parent=5 // pred_check_branch
      %321 = sbr.rel (%p319) target = $region40
    $region39: #{unet_forward.11} parent=5 // pred_region
      %s322 = ssub.s32 %s9, 2
      // Predicated region
      $region41: #{unet_forward.11} parent=39 // pred_check
        %p323 = pneg %p106
      $region42: #{unet_forward.11} parent=39 // pred_check_branch
        %325 = sbr.rel (%p323) target = $region44
      $region43: #{unet_forward.11} parent=39 // pred_region
        %p326 = scmp.lt.s32.totalorder %s15, 1
        %s327 = scalar_select %p326, %s15, 1
        %s328 = smul.addr %s327, 3
        %s329 = smul.addr %s328, 2
        %s330 = scalar_lea.vmem %s3, %s329
      $region44: #{unet_forward.11} parent=39 // pred_fallthru
        _
    $region40: #{unet_forward.11} parent=5 // pred_fallthru
      _
  $region6: #{unet_forward.11} parent=0 // loop_footer
    %s13 = sadd.s32 1, %s9
  $region7: #{unet_forward.11} parent=0 // loop_footer_branch
    %8 = sbr.rel target = $region3
  $region8: #{unet_forward.11} parent=0 // loop_exit
    _

// kernel: unet_forward.10
$region0: #{unet_forward.10}
  #allocation0 [shape = 'u32[]', space=smem, size = 0x4, offset = 0x4, fixed_abs, tag = 'smem constant byte address 0x4 - core index']
  #allocation1 [shape = 'u32[144,128]{1,0:T(1,128)}', space=vmem, size = 0x12000, scoped, tag = 'internal scratch']
  %s0 = inlined_call_operand.vmem [shape: bf16[2,16,324], index: 0, kind: input, shape index: {}]
  %s1 = inlined_call_operand.vmem [shape: bf16[2,8,324], index: 1, kind: input, shape index: {}]
  %s2 = inlined_call_operand.vmem [shape: bf16[8,16], index: 2, kind: input, shape index: {}]
  %s3 = inlined_call_operand.vmem [shape: f32[8,1], index: 3, kind: input, shape index: {}]
  %s4 = inlined_call_operand.vmem [shape: f32[1,324], index: 4, kind: input, shape index: {}]
  %s5 = inlined_call_operand.vmem [shape: bf16[8,72], index: 5, kind: input, shape index: {}]
  %s6 = inlined_call_operand.vmem [shape: bf16[8,72], index: 6, kind: input, shape index: {}]
  %s7 = inlined_call_operand.vmem [shape: f32[8,1], index: 7, kind: input, shape index: {}]
  %s8 = inlined_call_operand.vmem [shape: f32[1,286], index: 8, kind: input, shape index: {}]
  %s9 = inlined_call_operand.vmem [shape: bf16[2,8,324], index: 9, kind: output, shape index: {}]
  %s10 = sld [smem:[#allocation0]]
  $region69: #{unet_forward.10} parent=0
    _
  %s12 = ssub.s32 1, %s10
  %s13 = scalar_select 0, %s12, %s10
  loop: start=0, step=1, limit=4
  $region2: #{unet_forward.10} parent=0 // loop_pre_header
    _
  $region3: #{unet_forward.10} parent=0 // loop_header
    %s15 = sphi 0, %s19
    %p16 = scmp.ge.s32.totalorder %s15, 4
    %s25 = sphi 0, %s27
    %s28 = sphi 0, %s25
    %s29 = sphi 0, %s28
    %s45 = sphi 0, %s29
    %s51 = sphi 0, %s53
    %s54 = sphi 0, %s51
    %s55 = sphi 0, %s54
    %s71 = sphi 0, %s55
    %s75 = sphi 0, %s75
    %s77 = sphi 0, %s75
    %s78 = sphi 0, %s77
    %s92 = sphi 0, %s78
    %s96 = sphi 0, %s96
    %s98 = sphi 0, %s96
    %s99 = sphi 0, %s98
    %s113 = sphi 0, %s99
    %s117 = sphi 0, %s117
    %s119 = sphi 0, %s117
    %s120 = sphi 0, %s119
    %s134 = sphi 0, %s120
    %s138 = sphi 0, %s138
    %s140 = sphi 0, %s138
    %s141 = sphi 0, %s140
    %s155 = sphi 0, %s141
    %s159 = sphi 0, %s159
    %s161 = sphi 0, %s159
    %s162 = sphi 0, %s161
    %s176 = sphi 0, %s162
    %s180 = sphi 0, %s180
    %s182 = sphi 0, %s180
    %s183 = sphi 0, %s182
    %s197 = sphi 0, %s183
    %s201 = sphi 0, %s201
    %s203 = sphi 0, %s201
    %s204 = sphi 0, %s203
    %s218 = sphi 0, %s204
    %s224 = sphi 0, %s226
    %s227 = sphi 0, %s224
    %s228 = sphi 0, %s227
    %s244 = sphi 0, %s228
  $region4: #{unet_forward.10} parent=0 // loop_header_branch
    %18 = sbr.rel (%p16) target = $region8
  $region5: #{unet_forward.10} parent=0 // loop_body
    %s20 = ssub.s32 %s15, 1
    %s21 = ssub.s32 %s15, 2
    %s22 = sadd.s32 %s15, 1
    %s23 = ssub.s32 %s15, %s22
    %p24 = scmp.eq.s32.totalorder %s23, 0
    %s26 = sadd.s32 %s25, 1
    %s27 = scalar_select %p24, %s25, %s26
    %p30 = pneg %p24
    %p31 = scmp.eq.s32.totalorder %s15, 1
    %p32 = por %p30, %p31
    %p33 = scmp.ne.s32.totalorder %s25, %s28
    %p34 = scmp.eq.s32.totalorder %s15, 0
    %p35 = por %p33, %p34
    %p36 = scmp.ne.s32.totalorder %s25, %s28
    %p37 = scmp.eq.s32.totalorder %s20, 1
    %p38 = por %p36, %p37
    %p39 = scmp.ne.s32.totalorder %s28, %s29
    %p40 = scmp.eq.s32.totalorder %s20, 0
    %p41 = por %p39, %p40
    %p42 = scmp.ne.s32.totalorder %s28, %s29
    %p43 = scmp.eq.s32.totalorder %s21, 1
    %p44 = por %p42, %p43
    %p46 = scmp.ne.s32.totalorder %s29, %s45
    %p47 = scmp.eq.s32.totalorder %s21, 0
    %p48 = por %p46, %p47
    %s49 = ssub.s32 %s15, %s22
    %p50 = scmp.eq.s32.totalorder %s49, 0
    %s52 = sadd.s32 %s51, 1
    %s53 = scalar_select %p50, %s51, %s52
    %p56 = pneg %p50
    %p57 = scmp.eq.s32.totalorder %s15, 1
    %p58 = por %p56, %p57
    %p59 = scmp.ne.s32.totalorder %s51, %s54
    %p60 = scmp.eq.s32.totalorder %s15, 0
    %p61 = por %p59, %p60
    %p62 = scmp.ne.s32.totalorder %s51, %s54
    %p63 = scmp.eq.s32.totalorder %s20, 1
    %p64 = por %p62, %p63
    %p65 = scmp.ne.s32.totalorder %s54, %s55
    %p66 = scmp.eq.s32.totalorder %s20, 0
    %p67 = por %p65, %p66
    %p68 = scmp.ne.s32.totalorder %s54, %s55
    %p69 = scmp.eq.s32.totalorder %s21, 1
    %p70 = por %p68, %p69
    %p72 = scmp.ne.s32.totalorder %s55, %s71
    %p73 = scmp.eq.s32.totalorder %s21, 0
    %p74 = por %p72, %p73
    %s76 = sadd.s32 %s75, 1
    %p79 = scmp.eq.s32.totalorder %s15, 1
    %p80 = scmp.ne.s32.totalorder %s75, %s77
    %p81 = scmp.eq.s32.totalorder %s15, 0
    %p82 = por %p80, %p81
    %p83 = scmp.ne.s32.totalorder %s75, %s77
    %p84 = scmp.eq.s32.totalorder %s20, 1
    %p85 = por %p83, %p84
    %p86 = scmp.ne.s32.totalorder %s77, %s78
    %p87 = scmp.eq.s32.totalorder %s20, 0
    %p88 = por %p86, %p87
    %p89 = scmp.ne.s32.totalorder %s77, %s78
    %p90 = scmp.eq.s32.totalorder %s21, 1
    %p91 = por %p89, %p90
    %p93 = scmp.ne.s32.totalorder %s78, %s92
    %p94 = scmp.eq.s32.totalorder %s21, 0
    %p95 = por %p93, %p94
    %s97 = sadd.s32 %s96, 1
    %p100 = scmp.eq.s32.totalorder %s15, 1
    %p101 = scmp.ne.s32.totalorder %s96, %s98
    %p102 = scmp.eq.s32.totalorder %s15, 0
    %p103 = por %p101, %p102
    %p104 = scmp.ne.s32.totalorder %s96, %s98
    %p105 = scmp.eq.s32.totalorder %s20, 1
    %p106 = por %p104, %p105
    %p107 = scmp.ne.s32.totalorder %s98, %s99
    %p108 = scmp.eq.s32.totalorder %s20, 0
    %p109 = por %p107, %p108
    %p110 = scmp.ne.s32.totalorder %s98, %s99
    %p111 = scmp.eq.s32.totalorder %s21, 1
    %p112 = por %p110, %p111
    %p114 = scmp.ne.s32.totalorder %s99, %s113
    %p115 = scmp.eq.s32.totalorder %s21, 0
    %p116 = por %p114, %p115
    %s118 = sadd.s32 %s117, 1
    %p121 = scmp.eq.s32.totalorder %s15, 1
    %p122 = scmp.ne.s32.totalorder %s117, %s119
    %p123 = scmp.eq.s32.totalorder %s15, 0
    %p124 = por %p122, %p123
    %p125 = scmp.ne.s32.totalorder %s117, %s119
    %p126 = scmp.eq.s32.totalorder %s20, 1
    %p127 = por %p125, %p126
    %p128 = scmp.ne.s32.totalorder %s119, %s120
    %p129 = scmp.eq.s32.totalorder %s20, 0
    %p130 = por %p128, %p129
    %p131 = scmp.ne.s32.totalorder %s119, %s120
    %p132 = scmp.eq.s32.totalorder %s21, 1
    %p133 = por %p131, %p132
    %p135 = scmp.ne.s32.totalorder %s120, %s134
    %p136 = scmp.eq.s32.totalorder %s21, 0
    %p137 = por %p135, %p136
    %s139 = sadd.s32 %s138, 1
    %p142 = scmp.eq.s32.totalorder %s15, 1
    %p143 = scmp.ne.s32.totalorder %s138, %s140
    %p144 = scmp.eq.s32.totalorder %s15, 0
    %p145 = por %p143, %p144
    %p146 = scmp.ne.s32.totalorder %s138, %s140
    %p147 = scmp.eq.s32.totalorder %s20, 1
    %p148 = por %p146, %p147
    %p149 = scmp.ne.s32.totalorder %s140, %s141
    %p150 = scmp.eq.s32.totalorder %s20, 0
    %p151 = por %p149, %p150
    %p152 = scmp.ne.s32.totalorder %s140, %s141
    %p153 = scmp.eq.s32.totalorder %s21, 1
    %p154 = por %p152, %p153
    %p156 = scmp.ne.s32.totalorder %s141, %s155
    %p157 = scmp.eq.s32.totalorder %s21, 0
    %p158 = por %p156, %p157
    %s160 = sadd.s32 %s159, 1
    %p163 = scmp.eq.s32.totalorder %s15, 1
    %p164 = scmp.ne.s32.totalorder %s159, %s161
    %p165 = scmp.eq.s32.totalorder %s15, 0
    %p166 = por %p164, %p165
    %p167 = scmp.ne.s32.totalorder %s159, %s161
    %p168 = scmp.eq.s32.totalorder %s20, 1
    %p169 = por %p167, %p168
    %p170 = scmp.ne.s32.totalorder %s161, %s162
    %p171 = scmp.eq.s32.totalorder %s20, 0
    %p172 = por %p170, %p171
    %p173 = scmp.ne.s32.totalorder %s161, %s162
    %p174 = scmp.eq.s32.totalorder %s21, 1
    %p175 = por %p173, %p174
    %p177 = scmp.ne.s32.totalorder %s162, %s176
    %p178 = scmp.eq.s32.totalorder %s21, 0
    %p179 = por %p177, %p178
    %s181 = sadd.s32 %s180, 1
    %p184 = scmp.eq.s32.totalorder %s15, 1
    %p185 = scmp.ne.s32.totalorder %s180, %s182
    %p186 = scmp.eq.s32.totalorder %s15, 0
    %p187 = por %p185, %p186
    %p188 = scmp.ne.s32.totalorder %s180, %s182
    %p189 = scmp.eq.s32.totalorder %s20, 1
    %p190 = por %p188, %p189
    %p191 = scmp.ne.s32.totalorder %s182, %s183
    %p192 = scmp.eq.s32.totalorder %s20, 0
    %p193 = por %p191, %p192
    %p194 = scmp.ne.s32.totalorder %s182, %s183
    %p195 = scmp.eq.s32.totalorder %s21, 1
    %p196 = por %p194, %p195
    %p198 = scmp.ne.s32.totalorder %s183, %s197
    %p199 = scmp.eq.s32.totalorder %s21, 0
    %p200 = por %p198, %p199
    %s202 = sadd.s32 %s201, 1
    %p205 = scmp.eq.s32.totalorder %s15, 1
    %p206 = scmp.ne.s32.totalorder %s201, %s203
    %p207 = scmp.eq.s32.totalorder %s15, 0
    %p208 = por %p206, %p207
    %p209 = scmp.ne.s32.totalorder %s201, %s203
    %p210 = scmp.eq.s32.totalorder %s20, 1
    %p211 = por %p209, %p210
    %p212 = scmp.ne.s32.totalorder %s203, %s204
    %p213 = scmp.eq.s32.totalorder %s20, 0
    %p214 = por %p212, %p213
    %p215 = scmp.ne.s32.totalorder %s203, %s204
    %p216 = scmp.eq.s32.totalorder %s21, 1
    %p217 = por %p215, %p216
    %p219 = scmp.ne.s32.totalorder %s204, %s218
    %p220 = scmp.eq.s32.totalorder %s21, 0
    %p221 = por %p219, %p220
    %s222 = ssub.s32 %s15, %s22
    %p223 = scmp.eq.s32.totalorder %s222, 0
    %s225 = sadd.s32 %s224, 1
    %s226 = scalar_select %p223, %s224, %s225
    %p229 = pneg %p223
    %p230 = scmp.eq.s32.totalorder %s15, 1
    %p231 = por %p229, %p230
    %p232 = scmp.ne.s32.totalorder %s224, %s227
    %p233 = scmp.eq.s32.totalorder %s15, 0
    %p234 = por %p232, %p233
    %p235 = scmp.ne.s32.totalorder %s224, %s227
    %p236 = scmp.eq.s32.totalorder %s20, 1
    %p237 = por %p235, %p236
    %p238 = scmp.ne.s32.totalorder %s227, %s228
    %p239 = scmp.eq.s32.totalorder %s20, 0
    %p240 = por %p238, %p239
    %p241 = scmp.ne.s32.totalorder %s227, %s228
    %p242 = scmp.eq.s32.totalorder %s21, 1
    %p243 = por %p241, %p242
    %p245 = scmp.ne.s32.totalorder %s228, %s244
    %p246 = scmp.eq.s32.totalorder %s21, 0
    %p247 = por %p245, %p246
    %p248 = scmp.le.s32.totalorder 1, %s15
    %p249 = scmp.lt.s32.totalorder %s15, 3
    %p250 = pnand %p248, %p249
    %p251 = pneg %p250
    // Predicated region
    $region9: #{unet_forward.10} parent=5 // pred_check
      _
    $region10: #{unet_forward.10} parent=5 // pred_check_branch
      %253 = sbr.rel (%p250) target = $region12
    $region11: #{unet_forward.10} parent=5 // pred_region
      %s254 = ssub.s32 %s15, 1
      // Predicated region
      $region13: #{unet_forward.10} parent=11 // pred_check
        %p255 = pneg %p88
      $region14: #{unet_forward.10} parent=11 // pred_check_branch
        %257 = sbr.rel (%p255) target = $region16
      $region15: #{unet_forward.10} parent=11 // pred_region
        _
      $region16: #{unet_forward.10} parent=11 // pred_fallthru
        _
      // Predicated region
      $region17: #{unet_forward.10} parent=11 // pred_check
        %p258 = pneg %p109
      $region18: #{unet_forward.10} parent=11 // pred_check_branch
        %260 = sbr.rel (%p258) target = $region20
      $region19: #{unet_forward.10} parent=11 // pred_region
        _
      $region20: #{unet_forward.10} parent=11 // pred_fallthru
        _
      // Predicated region
      $region21: #{unet_forward.10} parent=11 // pred_check
        %p261 = pneg %p130
      $region22: #{unet_forward.10} parent=11 // pred_check_branch
        %263 = sbr.rel (%p261) target = $region24
      $region23: #{unet_forward.10} parent=11 // pred_region
        _
      $region24: #{unet_forward.10} parent=11 // pred_fallthru
        _
      // Predicated region
      $region25: #{unet_forward.10} parent=11 // pred_check
        %p264 = pneg %p151
      $region26: #{unet_forward.10} parent=11 // pred_check_branch
        %266 = sbr.rel (%p264) target = $region28
      $region27: #{unet_forward.10} parent=11 // pred_region
        _
      $region28: #{unet_forward.10} parent=11 // pred_fallthru
        _
      // Predicated region
      $region29: #{unet_forward.10} parent=11 // pred_check
        %p267 = pneg %p172
      $region30: #{unet_forward.10} parent=11 // pred_check_branch
        %269 = sbr.rel (%p267) target = $region32
      $region31: #{unet_forward.10} parent=11 // pred_region
        _
      $region32: #{unet_forward.10} parent=11 // pred_fallthru
        _
      // Predicated region
      $region33: #{unet_forward.10} parent=11 // pred_check
        %p270 = pneg %p193
      $region34: #{unet_forward.10} parent=11 // pred_check_branch
        %272 = sbr.rel (%p270) target = $region36
      $region35: #{unet_forward.10} parent=11 // pred_region
        _
      $region36: #{unet_forward.10} parent=11 // pred_fallthru
        _
      // Predicated region
      $region37: #{unet_forward.10} parent=11 // pred_check
        %p273 = pneg %p214
      $region38: #{unet_forward.10} parent=11 // pred_check_branch
        %275 = sbr.rel (%p273) target = $region40
      $region39: #{unet_forward.10} parent=11 // pred_region
        _
      $region40: #{unet_forward.10} parent=11 // pred_fallthru
        _
    $region12: #{unet_forward.10} parent=5 // pred_fallthru
      _
    %p276 = scmp.lt.s32.totalorder %s15, 2
    // Predicated region
    $region41: #{unet_forward.10} parent=5 // pred_check
      %p277 = pneg %p276
    $region42: #{unet_forward.10} parent=5 // pred_check_branch
      %279 = sbr.rel (%p277) target = $region44
    $region43: #{unet_forward.10} parent=5 // pred_region
      // Predicated region
      $region45: #{unet_forward.10} parent=43 // pred_check
        %p280 = pneg %p35
      $region46: #{unet_forward.10} parent=43 // pred_check_branch
        %282 = sbr.rel (%p280) target = $region48
      $region47: #{unet_forward.10} parent=43 // pred_region
        %p283 = scmp.lt.s32.totalorder %s15, 1
        %s284 = scalar_select %p283, %s15, 1
        %s285 = smul.addr %s284, 6
        %s286 = smul.addr %s285, 4
        %s287 = scalar_lea.vmem %s0, %s286
      $region48: #{unet_forward.10} parent=43 // pred_fallthru
        _
      // Predicated region
      $region49: #{unet_forward.10} parent=43 // pred_check
        %p288 = pneg %p61
      $region50: #{unet_forward.10} parent=43 // pred_check_branch
        %290 = sbr.rel (%p288) target = $region52
      $region51: #{unet_forward.10} parent=43 // pred_region
        %p291 = scmp.lt.s32.totalorder %s15, 1
        %s292 = scalar_select %p291, %s15, 1
        %s293 = smul.addr %s292, 3
        %s294 = smul.addr %s293, 4
        %s295 = scalar_lea.vmem %s1, %s294
      $region52: #{unet_forward.10} parent=43 // pred_fallthru
        _
    $region44: #{unet_forward.10} parent=5 // pred_fallthru
      _
    %p296 = scmp.le.s32.totalorder 1, %s15
    %p297 = scmp.lt.s32.totalorder %s15, 3
    %p298 = pnand %p296, %p297
    %p299 = pneg %p298
    // Predicated region
    $region53: #{unet_forward.10} parent=5 // pred_check
      _
    $region54: #{unet_forward.10} parent=5 // pred_check_branch
      %301 = sbr.rel (%p298) target = $region56
    $region55: #{unet_forward.10} parent=5 // pred_region
      %s302 = ssub.s32 %s15, 1
      %p303 = scmp.lt.s32.totalorder %s20, 1
      %s304 = scalar_select %p303, %s20, 1
      %s305 = smul.addr %s304, 6
      %s306 = smul.addr %s305, 4
      %s307 = scalar_lea.vmem %s0, %s306
      %p308 = pneg %p41
      %p309 = pneg %p38
      %p310 = scmp.lt.s32.totalorder %s20, 1
      %s311 = scalar_select %p310, %s20, 1
      %s312 = smul.addr %s311, 3
      %s313 = smul.addr %s312, 4
      %s314 = scalar_lea.vmem %s1, %s313
      %p315 = pneg %p67
      %p316 = pneg %p64
      %p317 = pneg %p88
      %p318 = pneg %p85
      %p319 = pneg %p109
      %p320 = pneg %p106
      %p321 = pneg %p130
      %p322 = pneg %p127
      %p323 = pneg %p151
      %p324 = pneg %p148
      %p325 = pneg %p172
      %p326 = pneg %p169
      %p327 = pneg %p193
      %p328 = pneg %p190
      %p329 = pneg %p214
      %p330 = pneg %p211
      %p331 = pneg %p240
      %p332 = pneg %p237
      %p333 = scmp.lt.s32.totalorder %s20, 1
      %s334 = scalar_select %p333, %s20, 1
      %s335 = smul.addr %s334, 3
      %s336 = smul.addr %s335, 4
      %s337 = scalar_lea.vmem %s9, %s336
      %p338 = scmp.lt.s32.totalorder %s20, 1
      %s339 = scalar_select %p338, %s20, 1
      %s340 = smul.addr %s339, 6
      %s341 = smul.addr %s340, 4
      %s342 = scalar_lea.vmem %s0, %s341
      %p343 = scmp.lt.s32.totalorder %s20, 1
      %s344 = scalar_select %p343, %s20, 1
      %s345 = smul.addr %s344, 3
      %s346 = smul.addr %s345, 4
      %s347 = scalar_lea.vmem %s1, %s346
      %p348 = scmp.lt.s32.totalorder %s20, 1
      %s349 = scalar_select %p348, %s20, 1
      %s350 = smul.addr %s349, 3
      %s351 = smul.addr %s350, 4
      %s352 = scalar_lea.vmem %s9, %s351
      %v354 = vld [vmem:[%s2] sm:$0xf]
      %v355 = vld [vmem:[%s342] sm:$0xff]
      %v356 = vld [vmem:[%s342 + $0x8] sm:$0xf]
      %v357 = vld [vmem:[%s342 + $0xc] sm:$0xff]
      %v358 = vld [vmem:[%s342 + $0x14] sm:$0xf]
      %v359 = vld [vmem:[%s3] sm:$0xff]
      %v360 = vld [vmem:[%s4] sm:$0x7]
      %362 = vset.pattern.permute.xlu0 0
      %363 = vperm.xlu0 %362, %v359
      %v364 = vpop.permute.xlu0 %363
      %v367 = vlaneseq
      %v368 = vshrl.u32 %v367, 7
      %v369 = vsub.s32 0, %v368
      %v370 = vrot.slane %v360, %v369
      %v371 = vlaneseq
      %v372 = vshrl.u32 %v371, 7
      %v373 = vsub.s32 1, %v372
      %v374 = vrot.slane %v360, %v373
      %v375 = vlaneseq
      %v376 = vshrl.u32 %v375, 7
      %v377 = vsub.s32 2, %v376
      %v378 = vrot.slane %v360, %v377
      %v382 = vmul.f32 %v364, %v370
      %v383 = vmul.f32 %v364, %v374
      %v384 = vmul.f32 %v364, %v378
      %v389 = vunpack.c.l.b16 %v355
      %v390 = vunpack.c.h.b16 %v355
      %v391 = vunpack.c.l.b16 %v356
      %v392 = vunpack.c.l.b16 %v357
      %v393 = vunpack.c.h.b16 %v357
      %v394 = vunpack.c.l.b16 %v358
      %v395 = vpack.c.b16 %v392, %v389
      %v396 = vpack.c.b16 %v393, %v390
      %v397 = vpack.c.b16 %v394, %v391
      %vm401 = vcmask 130048
      %v403 = vsel %vm401, %v354, 0
      %405 = vmatprep.subr.bf16.mxu0 0
      %406 = vmatpush1.bf16.msra.mxu0 0
      %407 = vmatprep.subr.bf16.mxu0 0
      %408 = vmatpush1.bf16.msra.mxu0 0
      %409 = vmatprep.subr.bf16.mxu0 0
      %410 = vmatpush1.bf16.msra.mxu0 0
      %411 = vmatprep.subr.bf16.mxu0 0
      %412 = vmatpush1.bf16.msra.mxu0 0
      %413 = vmatprep.subr.bf16.mxu0 0
      %414 = vmatpush1.bf16.msra.mxu0 0
      %415 = vmatprep.subr.bf16.mxu0 0
      %416 = vmatpush1.bf16.msra.mxu0 0
      %417 = vmatprep.subr.bf16.mxu0 0
      %418 = vmatpush1.bf16.msra.mxu0 0
      %419 = vmatprep.subr.bf16.mxu0 %v396
      %420 = vmatpush1.bf16.msra.mxu0 %v395
      %421 = vmatprep.subr.bf16.mxu0 0
      %422 = vmatpush2.bf16.msra.mxu0 0
      %423 = vmatprep.subr.bf16.mxu0 0
      %424 = vmatpush2.bf16.msra.mxu0 0
      %425 = vmatprep.subr.bf16.mxu0 0
      %426 = vmatpush2.bf16.msra.mxu0 0
      %427 = vmatprep.subr.bf16.mxu0 0
      %428 = vmatpush2.bf16.msra.mxu0 0
      %429 = vmatprep.subr.bf16.mxu0 0
      %430 = vmatpush2.bf16.msra.mxu0 0
      %431 = vmatprep.subr.bf16.mxu0 0
      %432 = vmatpush2.bf16.msra.mxu0 0
      %433 = vmatprep.subr.bf16.mxu0 0
      %434 = vmatpush2.bf16.msra.mxu0 0
      %435 = vmatprep.subr.bf16.mxu0 0
      %436 = vmatpush2.bf16.msra.mxu0 0
      %437 = vmatprep.mubr.bf16.mxu0 0
      %438 = vmatmul.mubr.bf16.gmra.mxu0 %v403
      %v439 = vpop.f32.mrf.mxu0
      %v440 = vadd.f32 %v382, %v439
      %v441 = vpop.f32.mrf.mxu0
      %v442 = vadd.f32 %v383, %v441
      %v443 = vpop.f32.mrf.mxu0
      %v444 = vpop.f32.mrf.mxu0
      %445 = vdwg.mxu0
      %446 = vmatprep.subr.bf16.mxu0 0
      %447 = vmatpush1.bf16.msra.mxu0 0
      %448 = vmatprep.subr.bf16.mxu0 0
      %449 = vmatpush1.bf16.msra.mxu0 0
      %450 = vmatprep.subr.bf16.mxu0 0
      %451 = vmatpush1.bf16.msra.mxu0 0
      %452 = vmatprep.subr.bf16.mxu0 0
      %453 = vmatpush1.bf16.msra.mxu0 0
      %454 = vmatprep.subr.bf16.mxu0 0
      %455 = vmatpush1.bf16.msra.mxu0 0
      %456 = vmatprep.subr.bf16.mxu0 0
      %457 = vmatpush1.bf16.msra.mxu0 0
      %458 = vmatprep.subr.bf16.mxu0 0
      %459 = vmatpush1.bf16.msra.mxu0 0
      %460 = vmatprep.subr.bf16.mxu0 0
      %461 = vmatpush1.bf16.msra.mxu0 %v397
      %462 = vmatprep.subr.bf16.mxu0 0
      %463 = vmatpush2.bf16.msra.mxu0 0
      %464 = vmatprep.subr.bf16.mxu0 0
      %465 = vmatpush2.bf16.msra.mxu0 0
      %466 = vmatprep.subr.bf16.mxu0 0
      %467 = vmatpush2.bf16.msra.mxu0 0
      %468 = vmatprep.subr.bf16.mxu0 0
      %469 = vmatpush2.bf16.msra.mxu0 0
      %470 = vmatprep.subr.bf16.mxu0 0
      %471 = vmatpush2.bf16.msra.mxu0 0
      %472 = vmatprep.subr.bf16.mxu0 0
      %473 = vmatpush2.bf16.msra.mxu0 0
      %474 = vmatprep.subr.bf16.mxu0 0
      %475 = vmatpush2.bf16.msra.mxu0 0
      %476 = vmatprep.subr.bf16.mxu0 0
      %477 = vmatpush2.bf16.msra.mxu0 0
      %478 = vmatprep.mubr.bf16.mxu0 0
      %479 = vmatmul.mubr.bf16.gmra.mxu0 %v403
      %v480 = vpop.f32.mrf.mxu0
      %v481 = vadd.f32 %v384, %v480
      %v482 = vpop.f32.mrf.mxu0
      %v483 = vpop.f32.mrf.mxu0
      %v484 = vpop.f32.mrf.mxu0
      %485 = vdwg.mxu0
      %v486 = vpack.c.bf16 %v440, %v440
      %v487 = vpack.c.bf16 %v442, %v442
      %v488 = vpack.c.bf16 %v481, %v481
      %v492 = vrot.slane %v486, 4
      %v493 = vrot.slane %v487, 4
      %v494 = vrot.slane %v488, 4
      %495 = vrot.lane.b32.xlu0 %v492, 127
      %v496 = vpop.permute.xlu0 %495
      %497 = vrot.lane.b32.xlu0 %v493, 127
      %v498 = vpop.permute.xlu0 %497
      %499 = vrot.lane.b32.xlu0 %v494, 127
      %v500 = vpop.permute.xlu0 %499
      %vm501 = vcmask 1039360
      %v502 = vsel %vm501, %v496, %v498
      %v503 = vsel %vm501, %v498, %v500
      %504 = vrot.lane.b32.xlu0 %v486, 126
      %v505 = vpop.permute.xlu0 %504
      %506 = vrot.lane.b32.xlu0 %v487, 126
      %v507 = vpop.permute.xlu0 %506
      %508 = vrot.lane.b32.xlu0 %v488, 126
      %v509 = vpop.permute.xlu0 %508
      %vm510 = vcmask 1031168
      %v511 = vsel %vm510, %v505, %v507
      %v512 = vsel %vm510, %v507, %v509
      %513 = vrot.lane.b32.xlu0 %v492, 110
      %v514 = vpop.permute.xlu0 %513
      %515 = vrot.lane.b32.xlu0 %v493, 110
      %v516 = vpop.permute.xlu0 %515
      %517 = vrot.lane.b32.xlu0 %v494, 110
      %v518 = vpop.permute.xlu0 %517
      %vm519 = vcmask 900096
      %v520 = vsel %vm519, %v514, %v516
      %v521 = vsel %vm519, %v516, %v518
      %522 = vrot.lane.b32.xlu0 %v486, 109
      %v523 = vpop.permute.xlu0 %522
      %524 = vrot.lane.b32.xlu0 %v487, 109
      %v525 = vpop.permute.xlu0 %524
      %526 = vrot.lane.b32.xlu0 %v488, 109
      %v527 = vpop.permute.xlu0 %526
      %vm528 = vcmask 891904
      %v529 = vsel %vm528, %v523, %v525
      %v530 = vsel %vm528, %v525, %v527
      %531 = vrot.lane.b32.xlu0 %v492, 108
      %v532 = vpop.permute.xlu0 %531
      %533 = vrot.lane.b32.xlu0 %v493, 108
      %v534 = vpop.permute.xlu0 %533
      %535 = vrot.lane.b32.xlu0 %v494, 108
      %v536 = vpop.permute.xlu0 %535
      %vm537 = vcmask 883712
      %v538 = vsel %vm537, %v532, %v534
      %v539 = vsel %vm537, %v534, %v536
      %540 = vrot.lane.b32.xlu0 %v486, 92
      %v541 = vpop.permute.xlu0 %540
      %542 = vrot.lane.b32.xlu0 %v487, 92
      %v543 = vpop.permute.xlu0 %542
      %544 = vrot.lane.b32.xlu0 %v488, 92
      %v545 = vpop.permute.xlu0 %544
      %vm546 = vcmask 752640
      %v547 = vsel %vm546, %v541, %v543
      %v548 = vsel %vm546, %v543, %v545
      %549 = vrot.lane.b32.xlu0 %v492, 91
      %v550 = vpop.permute.xlu0 %549
      %551 = vrot.lane.b32.xlu0 %v493, 91
      %v552 = vpop.permute.xlu0 %551
      %553 = vrot.lane.b32.xlu0 %v494, 91
      %v554 = vpop.permute.xlu0 %553
      %vm555 = vcmask 744448
      %v556 = vsel %vm555, %v550, %v552
      %v557 = vsel %vm555, %v552, %v554
      %558 = vrot.lane.b32.xlu0 %v486, 90
      %v559 = vpop.permute.xlu0 %558
      %560 = vrot.lane.b32.xlu0 %v487, 90
      %v561 = vpop.permute.xlu0 %560
      %562 = vrot.lane.b32.xlu0 %v488, 90
      %v563 = vpop.permute.xlu0 %562
      %vm564 = vcmask 736256
      %v565 = vsel %vm564, %v559, %v561
      %v566 = vsel %vm564, %v561, %v563
      %vm567 = vcmask 1043456
      %v570 = vsel %vm567, %v486, %v502
      %v574 = vsel %vm567, %v487, %v503
      %v578 = vsel %vm567, %v488, %v500
      %v582 = vsel %vm567, %v511, %v520
      %v586 = vsel %vm567, %v512, %v521
      %v590 = vsel %vm567, %v509, %v518
      %v594 = vsel %vm567, %v529, %v538
      %v598 = vsel %vm567, %v530, %v539
      %v602 = vsel %vm567, %v527, %v536
      %v606 = vsel %vm567, %v547, %v556
      %v610 = vsel %vm567, %v548, %v557
      %v614 = vsel %vm567, %v545, %v554
      %v616 = vld [vmem:[%s347] sm:$0xff]
      %v617 = vld [vmem:[%s347 + $0x8] sm:$0xf]
      %v620 = vunpack.c.l.b16 %v616
      %v621 = vunpack.c.h.b16 %v616
      %v622 = vunpack.c.l.b16 %v617
      %v623 = vpack.c.b16 %v620, %v620
      %v624 = vpack.c.b16 %v621, %v621
      %v625 = vpack.c.b16 %v622, %v622
      %626 = vrot.lane.b32.xlu0 %v623, 127
      %v627 = vpop.permute.xlu0 %626
      %628 = vrot.lane.b32.xlu0 %v624, 127
      %v629 = vpop.permute.xlu0 %628
      %630 = vrot.lane.b32.xlu0 %v625, 127
      %v631 = vpop.permute.xlu0 %630
      %v632 = vsel %vm501, %v627, %v629
      %v633 = vsel %vm501, %v629, %v631
      %634 = vrot.lane.b32.xlu0 %v623, 126
      %v635 = vpop.permute.xlu0 %634
      %636 = vrot.lane.b32.xlu0 %v624, 126
      %v637 = vpop.permute.xlu0 %636
      %638 = vrot.lane.b32.xlu0 %v625, 126
      %v639 = vpop.permute.xlu0 %638
      %v640 = vsel %vm510, %v635, %v637
      %v641 = vsel %vm510, %v637, %v639
      %642 = vrot.lane.b32.xlu0 %v623, 110
      %v643 = vpop.permute.xlu0 %642
      %644 = vrot.lane.b32.xlu0 %v624, 110
      %v645 = vpop.permute.xlu0 %644
      %646 = vrot.lane.b32.xlu0 %v625, 110
      %v647 = vpop.permute.xlu0 %646
      %v648 = vsel %vm519, %v643, %v645
      %v649 = vsel %vm519, %v645, %v647
      %650 = vrot.lane.b32.xlu0 %v623, 109
      %v651 = vpop.permute.xlu0 %650
      %652 = vrot.lane.b32.xlu0 %v624, 109
      %v653 = vpop.permute.xlu0 %652
      %654 = vrot.lane.b32.xlu0 %v625, 109
      %v655 = vpop.permute.xlu0 %654
      %v656 = vsel %vm528, %v651, %v653
      %v657 = vsel %vm528, %v653, %v655
      %658 = vrot.lane.b32.xlu0 %v623, 108
      %v659 = vpop.permute.xlu0 %658
      %660 = vrot.lane.b32.xlu0 %v624, 108
      %v661 = vpop.permute.xlu0 %660
      %662 = vrot.lane.b32.xlu0 %v625, 108
      %v663 = vpop.permute.xlu0 %662
      %v664 = vsel %vm537, %v659, %v661
      %v665 = vsel %vm537, %v661, %v663
      %666 = vrot.lane.b32.xlu0 %v623, 92
      %v667 = vpop.permute.xlu0 %666
      %668 = vrot.lane.b32.xlu0 %v624, 92
      %v669 = vpop.permute.xlu0 %668
      %670 = vrot.lane.b32.xlu0 %v625, 92
      %v671 = vpop.permute.xlu0 %670
      %v672 = vsel %vm546, %v667, %v669
      %v673 = vsel %vm546, %v669, %v671
      %674 = vrot.lane.b32.xlu0 %v623, 91
      %v675 = vpop.permute.xlu0 %674
      %676 = vrot.lane.b32.xlu0 %v624, 91
      %v677 = vpop.permute.xlu0 %676
      %678 = vrot.lane.b32.xlu0 %v625, 91
      %v679 = vpop.permute.xlu0 %678
      %v680 = vsel %vm555, %v675, %v677
      %v681 = vsel %vm555, %v677, %v679
      %682 = vrot.lane.b32.xlu0 %v623, 90
      %v683 = vpop.permute.xlu0 %682
      %684 = vrot.lane.b32.xlu0 %v624, 90
      %v685 = vpop.permute.xlu0 %684
      %686 = vrot.lane.b32.xlu0 %v625, 90
      %v687 = vpop.permute.xlu0 %686
      %v688 = vsel %vm564, %v683, %v685
      %v689 = vsel %vm564, %v685, %v687
      %v692 = vsel %vm567, %v623, %v632
      %v696 = vsel %vm567, %v624, %v633
      %v700 = vsel %vm567, %v625, %v631
      %v704 = vsel %vm567, %v640, %v648
      %v708 = vsel %vm567, %v641, %v649
      %v712 = vsel %vm567, %v639, %v647
      %v716 = vsel %vm567, %v656, %v664
      %v720 = vsel %vm567, %v657, %v665
      %v724 = vsel %vm567, %v655, %v663
      %v728 = vsel %vm567, %v672, %v680
      %v732 = vsel %vm567, %v673, %v681
      %v736 = vsel %vm567, %v671, %v679
      %v738 = vld [vmem:[%s5] sm:$0xf]
      %v739 = vld [vmem:[%s6] sm:$0xf]
      %vm740 = vcmask 588800
      %v742 = vsel %vm740, %v739, 0
      %v745 = vsel %vm567, %v688, 0
      %v748 = vsel %vm567, %v689, 0
      %v751 = vsel %vm567, %v687, 0
      %753 = vmatprep.subr.bf16.mxu0 0
      %754 = vmatpush1.bf16.msra.mxu0 0
      %755 = vmatprep.subr.bf16.mxu0 0
      %756 = vmatpush1.bf16.msra.mxu0 0
      %757 = vmatprep.subr.bf16.mxu0 0
      %758 = vmatpush1.bf16.msra.mxu0 0
      %759 = vmatprep.subr.bf16.mxu0 %v748
      %760 = vmatpush1.bf16.msra.mxu0 %v745
      %761 = vmatprep.subr.bf16.mxu0 %v732
      %762 = vmatpush1.bf16.msra.mxu0 %v728
      %763 = vmatprep.subr.bf16.mxu0 %v720
      %764 = vmatpush1.bf16.msra.mxu0 %v716
      %765 = vmatprep.subr.bf16.mxu0 %v708
      %766 = vmatpush1.bf16.msra.mxu0 %v704
      %767 = vmatprep.subr.bf16.mxu0 %v696
      %768 = vmatpush1.bf16.msra.mxu0 %v692
      %769 = vmatprep.subr.bf16.mxu0 0
      %770 = vmatpush2.bf16.msra.mxu0 0
      %771 = vmatprep.subr.bf16.mxu0 0
      %772 = vmatpush2.bf16.msra.mxu0 0
      %773 = vmatprep.subr.bf16.mxu0 0
      %774 = vmatpush2.bf16.msra.mxu0 0
      %775 = vmatprep.subr.bf16.mxu0 0
      %776 = vmatpush2.bf16.msra.mxu0 0
      %777 = vmatprep.subr.bf16.mxu0 0
      %778 = vmatpush2.bf16.msra.mxu0 0
      %779 = vmatprep.subr.bf16.mxu0 0
      %780 = vmatpush2.bf16.msra.mxu0 0
      %781 = vmatprep.subr.bf16.mxu0 0
      %782 = vmatpush2.bf16.msra.mxu0 0
      %783 = vmatprep.subr.bf16.mxu0 0
      %784 = vmatpush2.bf16.msra.mxu0 0
      %785 = vmatprep.mubr.bf16.mxu0 0
      %786 = vmatmul.mubr.bf16.gmra.mxu0 %v742
      %v787 = vpop.f32.mrf.mxu0
      %v788 = vadd.f32 0.0, %v787
      %v789 = vpop.f32.mrf.mxu0
      %v790 = vadd.f32 0.0, %v789
      %v791 = vpop.f32.mrf.mxu0
      %v792 = vpop.f32.mrf.mxu0
      %793 = vdwg.mxu0
      %794 = vmatprep.subr.bf16.mxu0 0
      %795 = vmatpush1.bf16.msra.mxu0 0
      %796 = vmatprep.subr.bf16.mxu0 0
      %797 = vmatpush1.bf16.msra.mxu0 0
      %798 = vmatprep.subr.bf16.mxu0 0
      %799 = vmatpush1.bf16.msra.mxu0 0
      %800 = vmatprep.subr.bf16.mxu0 0
      %801 = vmatpush1.bf16.msra.mxu0 %v751
      %802 = vmatprep.subr.bf16.mxu0 0
      %803 = vmatpush1.bf16.msra.mxu0 %v736
      %804 = vmatprep.subr.bf16.mxu0 0
      %805 = vmatpush1.bf16.msra.mxu0 %v724
      %806 = vmatprep.subr.bf16.mxu0 0
      %807 = vmatpush1.bf16.msra.mxu0 %v712
      %808 = vmatprep.subr.bf16.mxu0 0
      %809 = vmatpush1.bf16.msra.mxu0 %v700
      %810 = vmatprep.subr.bf16.mxu0 0
      %811 = vmatpush2.bf16.msra.mxu0 0
      %812 = vmatprep.subr.bf16.mxu0 0
      %813 = vmatpush2.bf16.msra.mxu0 0
      %814 = vmatprep.subr.bf16.mxu0 0
      %815 = vmatpush2.bf16.msra.mxu0 0
      %816 = vmatprep.subr.bf16.mxu0 0
      %817 = vmatpush2.bf16.msra.mxu0 0
      %818 = vmatprep.subr.bf16.mxu0 0
      %819 = vmatpush2.bf16.msra.mxu0 0
      %820 = vmatprep.subr.bf16.mxu0 0
      %821 = vmatpush2.bf16.msra.mxu0 0
      %822 = vmatprep.subr.bf16.mxu0 0
      %823 = vmatpush2.bf16.msra.mxu0 0
      %824 = vmatprep.subr.bf16.mxu0 0
      %825 = vmatpush2.bf16.msra.mxu0 0
      %826 = vmatprep.mubr.bf16.mxu0 0
      %827 = vmatmul.mubr.bf16.gmra.mxu0 %v742
      %v828 = vpop.f32.mrf.mxu0
      %v829 = vadd.f32 0.0, %v828
      %v830 = vpop.f32.mrf.mxu0
      %v831 = vpop.f32.mrf.mxu0
      %v832 = vpop.f32.mrf.mxu0
      %833 = vdwg.mxu0
      %v835 = vsel %vm740, %v738, 0
      %v838 = vsel %vm567, %v565, 0
      %v841 = vsel %vm567, %v566, 0
      %v844 = vsel %vm567, %v563, 0
      %846 = vmatprep.subr.bf16.mxu0 0
      %847 = vmatpush1.bf16.msra.mxu0 0
      %848 = vmatprep.subr.bf16.mxu0 0
      %849 = vmatpush1.bf16.msra.mxu0 0
      %850 = vmatprep.subr.bf16.mxu0 0
      %851 = vmatpush1.bf16.msra.mxu0 0
      %852 = vmatprep.subr.bf16.mxu0 %v841
      %853 = vmatpush1.bf16.msra.mxu0 %v838
      %854 = vmatprep.subr.bf16.mxu0 %v610
      %855 = vmatpush1.bf16.msra.mxu0 %v606
      %856 = vmatprep.subr.bf16.mxu0 %v598
      %857 = vmatpush1.bf16.msra.mxu0 %v594
      %858 = vmatprep.subr.bf16.mxu0 %v586
      %859 = vmatpush1.bf16.msra.mxu0 %v582
      %860 = vmatprep.subr.bf16.mxu0 %v574
      %861 = vmatpush1.bf16.msra.mxu0 %v570
      %862 = vmatprep.subr.bf16.mxu0 0
      %863 = vmatpush2.bf16.msra.mxu0 0
      %864 = vmatprep.subr.bf16.mxu0 0
      %865 = vmatpush2.bf16.msra.mxu0 0
      %866 = vmatprep.subr.bf16.mxu0 0
      %867 = vmatpush2.bf16.msra.mxu0 0
      %868 = vmatprep.subr.bf16.mxu0 0
      %869 = vmatpush2.bf16.msra.mxu0 0
      %870 = vmatprep.subr.bf16.mxu0 0
      %871 = vmatpush2.bf16.msra.mxu0 0
      %872 = vmatprep.subr.bf16.mxu0 0
      %873 = vmatpush2.bf16.msra.mxu0 0
      %874 = vmatprep.subr.bf16.mxu0 0
      %875 = vmatpush2.bf16.msra.mxu0 0
      %876 = vmatprep.subr.bf16.mxu0 0
      %877 = vmatpush2.bf16.msra.mxu0 0
      %878 = vmatprep.mubr.bf16.mxu0 0
      %879 = vmatmul.mubr.bf16.gmra.mxu0 %v835
      %v880 = vpop.f32.mrf.mxu0
      %v881 = vadd.f32 %v788, %v880
      %v882 = vpop.f32.mrf.mxu0
      %v883 = vadd.f32 %v790, %v882
      %v884 = vpop.f32.mrf.mxu0
      %v885 = vpop.f32.mrf.mxu0
      %886 = vdwg.mxu0
      %887 = vmatprep.subr.bf16.mxu0 0
      %888 = vmatpush1.bf16.msra.mxu0 0
      %889 = vmatprep.subr.bf16.mxu0 0
      %890 = vmatpush1.bf16.msra.mxu0 0
      %891 = vmatprep.subr.bf16.mxu0 0
      %892 = vmatpush1.bf16.msra.mxu0 0
      %893 = vmatprep.subr.bf16.mxu0 0
      %894 = vmatpush1.bf16.msra.mxu0 %v844
      %895 = vmatprep.subr.bf16.mxu0 0
      %896 = vmatpush1.bf16.msra.mxu0 %v614
      %897 = vmatprep.subr.bf16.mxu0 0
      %898 = vmatpush1.bf16.msra.mxu0 %v602
      %899 = vmatprep.subr.bf16.mxu0 0
      %900 = vmatpush1.bf16.msra.mxu0 %v590
      %901 = vmatprep.subr.bf16.mxu0 0
      %902 = vmatpush1.bf16.msra.mxu0 %v578
      %903 = vmatprep.subr.bf16.mxu0 0
      %904 = vmatpush2.bf16.msra.mxu0 0
      %905 = vmatprep.subr.bf16.mxu0 0
      %906 = vmatpush2.bf16.msra.mxu0 0
      %907 = vmatprep.subr.bf16.mxu0 0
      %908 = vmatpush2.bf16.msra.mxu0 0
      %909 = vmatprep.subr.bf16.mxu0 0
      %910 = vmatpush2.bf16.msra.mxu0 0
      %911 = vmatprep.subr.bf16.mxu0 0
      %912 = vmatpush2.bf16.msra.mxu0 0
      %913 = vmatprep.subr.bf16.mxu0 0
      %914 = vmatpush2.bf16.msra.mxu0 0
      %915 = vmatprep.subr.bf16.mxu0 0
      %916 = vmatpush2.bf16.msra.mxu0 0
      %917 = vmatprep.subr.bf16.mxu0 0
      %918 = vmatpush2.bf16.msra.mxu0 0
      %919 = vmatprep.mubr.bf16.mxu0 0
      %920 = vmatmul.mubr.bf16.gmra.mxu0 %v835
      %v921 = vpop.f32.mrf.mxu0
      %v922 = vadd.f32 %v829, %v921
      %v923 = vpop.f32.mrf.mxu0
      %v924 = vpop.f32.mrf.mxu0
      %v925 = vpop.f32.mrf.mxu0
      %926 = vdwg.mxu0
      %v927 = vld [vmem:[%s7] sm:$0xff]
      %929 = vset.pattern.permute.xlu0 0
      %930 = vperm.xlu0 %929, %v927
      %v931 = vpop.permute.xlu0 %930
      %v933 = vadd.f32 %v881, %v931
      %v934 = vadd.f32 %v883, %v931
      %v935 = vadd.f32 %v922, %v931
      %v936 = vld [vmem:[%s8] sm:$0x7]
      %v938 = vlaneseq
      %v939 = vshrl.u32 %v938, 7
      %v940 = vsub.s32 0, %v939
      %v941 = vrot.slane %v936, %v940
      %v942 = vlaneseq
      %v943 = vshrl.u32 %v942, 7
      %v944 = vsub.s32 1, %v943
      %v945 = vrot.slane %v936, %v944
      %v946 = vlaneseq
      %v947 = vshrl.u32 %v946, 7
      %v948 = vsub.s32 2, %v947
      %v949 = vrot.slane %v936, %v948
      %v953 = vmul.f32 %v933, %v941
      %v954 = vmul.f32 %v934, %v945
      %v955 = vmul.f32 %v935, %v949
      %v956 = vadd.f32 %v953, %v954
      %vm957 = vcmask 244736
      %v958 = vsel %vm957, %v955, 0.0
      %v959 = vadd.f32 %v956, %v958
      %960 = vadd.xlane.f32.xlu0 %v959
      %v961 = vpop.xlane.xlu0 %960
      %v962 = vmul.f32 %v961, 0.00390625
      %v963 = vsub.f32 %v933, %v962
      %v964 = vsub.f32 %v934, %v962
      %v965 = vsub.f32 %v935, %v962
      %v966 = vmul.f32 %v963, %v941
      %v967 = vmul.f32 %v964, %v945
      %v968 = vmul.f32 %v965, %v949
      %v969 = vmul.f32 %v966, %v966
      %v970 = vmul.f32 %v967, %v967
      %v971 = vmul.f32 %v968, %v968
      %v972 = vadd.f32 %v969, %v970
      %v973 = vsel %vm957, %v971, 0.0
      %v974 = vadd.f32 %v972, %v973
      %975 = vadd.xlane.f32.xlu0 %v974
      %v976 = vpop.xlane.xlu0 %975
      %v977 = vmul.f32 %v976, 0.00390625
      %v978 = vadd.f32 %v977, 1e-05
      %v979 = vrsqrt.pop %v978
      %v980 = vmul.f32 %v966, %v979
      %v981 = vmul.f32 %v967, %v979
      %v982 = vmul.f32 %v968, %v979
      %vm983 = vcmp.ge.f32.partialorder %v980, 0.0
      %vm984 = vcmp.ge.f32.partialorder %v981, 0.0
      %vm985 = vcmp.ge.f32.partialorder %v982, 0.0
      %v986 = vmul.f32 %v980, 0.2
      %v987 = vmul.f32 %v981, 0.2
      %v988 = vmul.f32 %v982, 0.2
      %v989 = vsel %vm983, %v980, %v986
      %v990 = vsel %vm984, %v981, %v987
      %v991 = vsel %vm985, %v982, %v988
      %vm992 = vcmask 150528
      %993 = vst.msk [vmem:[%s352] sm:$0xf] %vm992, 0
      %v994 = vpack.c.bf16 %v989, %v989
      %v995 = vpack.c.bf16 %v990, %v990
      %v996 = vpack.c.bf16 %v991, %v991
      %v1000 = vunpack.c.l.b16 %v994
      %v1001 = vunpack.c.l.b16 %v995
      %v1002 = vunpack.c.l.b16 %v996
      %v1003 = vpack.c.b16 %v1001, %v1000
      %v1004 = vpack.c.b16 %v1002, %v1002
      %1005 = vrot.lane.b32.xlu0 %v1003, 19
      %v1006 = vpop.permute.xlu0 %1005
      %1007 = vrot.lane.b32.xlu0 %v1004, 19
      %v1008 = vpop.permute.xlu0 %1007
      %v1009 = vrot.slane %v1006, 4
      %vm1010 = vcmask 154624
      %v1011 = vsel %vm1010, %v1009, %v1006
      %v1012 = vsel %vm1010, %v1009, %v1008
      %vm1015 = vcmask 1043608
      %vm1016 = vcmask 1047556
      %vm1017 = vmor %vm1016, %vm1015
      %1018 = vst.msk [vmem:[%s352] sm:$0xff] %vm1017, %v1011
      %vm1019 = vcmask 396288
      %1020 = vst.msk [vmem:[%s352 + $0x8] sm:$0xf] %vm1019, %v1012
      %vm1021 = vcmask 552328
      %1022 = vst.msk [vmem:[%s352 + $0x8] sm:$0xf] %vm1021, 0
      %p1023 = scmp.lt.s32.totalorder %s20, 1
      %s1024 = scalar_select %p1023, %s20, 1
      %s1025 = smul.addr %s1024, 3
      %s1026 = smul.addr %s1025, 4
      %s1027 = scalar_lea.vmem %s9, %s1026
      // Predicated region
      $region57: #{unet_forward.10} parent=55 // pred_check
        %p1028 = pneg %p237
      $region58: #{unet_forward.10} parent=55 // pred_check_branch
        %1030 = sbr.rel (%p1028) target = $region60
      $region59: #{unet_forward.10} parent=55 // pred_region
        _
      $region60: #{unet_forward.10} parent=55 // pred_fallthru
        _
    $region56: #{unet_forward.10} parent=5 // pred_fallthru
      _
    %p1031 = scmp.le.s32.totalorder 2, %s15
    // Predicated region
    $region61: #{unet_forward.10} parent=5 // pred_check
      %p1032 = pneg %p1031
    $region62: #{unet_forward.10} parent=5 // pred_check_branch
      %1034 = sbr.rel (%p1032) target = $region64
    $region63: #{unet_forward.10} parent=5 // pred_region
      %s1035 = ssub.s32 %s15, 2
      // Predicated region
      $region65: #{unet_forward.10} parent=63 // pred_check
        %p1036 = pneg %p243
      $region66: #{unet_forward.10} parent=63 // pred_check_branch
        %1038 = sbr.rel (%p1036) target = $region68
      $region67: #{unet_forward.10} parent=63 // pred_region
        %p1039 = scmp.lt.s32.totalorder %s21, 1
        %s1040 = scalar_select %p1039, %s21, 1
        %s1041 = smul.addr %s1040, 3
        %s1042 = smul.addr %s1041, 4
        %s1043 = scalar_lea.vmem %s9, %s1042
      $region68: #{unet_forward.10} parent=63 // pred_fallthru
        _
    $region64: #{unet_forward.10} parent=5 // pred_fallthru
      _
  $region6: #{unet_forward.10} parent=0 // loop_footer
    %s19 = sadd.s32 1, %s15
  $region7: #{unet_forward.10} parent=0 // loop_footer_branch
    %14 = sbr.rel target = $region3
  $region8: #{unet_forward.10} parent=0 // loop_exit
    _

</llo_original>
